<compile_context>
chip_gen: v7x
topology: tpu7x:2x2x1
jax: 0.10.0
libtpu: 0.0.40
codegen_flags: <defaults>
</compile_context>

<pallas_src>
import functools

import jax
import jax.numpy as jnp
import numpy as np
from jax import lax
from jax.experimental import pallas as pl
from jax.experimental.pallas import tpu as pltpu


def _round_up(x, m):
    return (x + m - 1) // m * m


_GATE_PERM = (0, 1, 3, 2)   # PyTorch [i, f, g, o] -> kernel [i, f, o, g]


def _sigmoid_via_tanh(v):
    # sigmoid(x) = 0.5 * tanh(0.5 * x) + 0.5 : single EUP op + cheap VPU ops.
    return 0.5 * jnp.tanh(0.5 * v) + 0.5


# ----------------------------------------------------------------------------
# Pallas kernel: one grid step == TT LSTM time steps (both stacked layers).
# ----------------------------------------------------------------------------
def _mann_lstm_kernel(x_ref, w1ih_ref, w1hh_ref, b1_ref, w2ih_ref, w2hh_ref,
                      b2_ref, out_ref, xw1_s, h1s, c1s, h2s, c2s):
    B = h1s.shape[0]              # padded batch (multiple of 8 sublanes)
    H1 = h1s.shape[-1]            # 128
    G2 = h2s.shape[-1]            # 32 (per-gate lane slab for layer 2)
    TT = x_ref.shape[0] // B      # timesteps per grid block (rows are time-major)

    # Zero-init recurrent state on the first time block only.
    @pl.when(pl.program_id(0) == 0)
    def _():
        h1s[...] = jnp.zeros_like(h1s)
        c1s[...] = jnp.zeros_like(c1s)
        h2s[...] = jnp.zeros_like(h2s)
        c2s[...] = jnp.zeros_like(c2s)

    # Hoisted non-recurrent work: layer-1 input projection (+ bias) for all TT
    # timesteps in one big bf16 MXU matmul (M = TT*B rows).  Row t*B + b == x_t[b].
    xw1_s[...] = (jnp.dot(x_ref[...], w1ih_ref[...],
                          preferred_element_type=jnp.float32)
                  + jnp.broadcast_to(b1_ref[...], (TT * B, 4 * H1)))

    # Recurrent weights stay resident in VMEM in f32 (no compounding bf16 rounding
    # through the h/c recurrence).  Bias broadcast hoisted out of the unrolled loop.
    w1hh = w1hh_ref[...]          # (H1, 4*H1)
    w2ih = w2ih_ref[...]          # (H1, 4*G2)
    w2hh = w2hh_ref[...]          # (G2, 4*G2)
    b2b = jnp.broadcast_to(b2_ref[...], (B, 4 * G2))

    def step(tt, carry):
        h1, c1, h2, c2 = carry                    # f32 state
        base = pl.multiple_of(tt * B, B)

        # ----- layer 1: only the recurrent h1 @ W_hh (K=128) is on the chain -----
        g1 = xw1_s[pl.ds(base, B), :] + jnp.dot(
            h1, w1hh, preferred_element_type=jnp.float32)
        s1 = _sigmoid_via_tanh(g1[:, :3 * H1])    # gates [i, f, o] in one slab
        gg1 = jnp.tanh(g1[:, 3 * H1:])            # gate g
        c1 = s1[:, H1:2 * H1] * c1 + s1[:, :H1] * gg1
        h1 = s1[:, 2 * H1:3 * H1] * jnp.tanh(c1)

        # ----- layer 2: all four gates packed into a single 128-lane slab -----
        g2 = (jnp.dot(h1, w2ih, preferred_element_type=jnp.float32)
              + jnp.dot(h2, w2hh, preferred_element_type=jnp.float32)
              + b2b)
        s2 = _sigmoid_via_tanh(g2[:, :3 * G2])    # [i, f, o]
        gg2 = jnp.tanh(g2[:, 3 * G2:])            # g
        c2 = s2[:, G2:2 * G2] * c2 + s2[:, :G2] * gg2
        h2 = s2[:, 2 * G2:3 * G2] * jnp.tanh(c2)

        # Write this step's h2 rows into the resident output block; the whole
        # block is DMA'd to HBM once per grid step by the pipeline.
        out_ref[pl.ds(base, B), :] = h2
        return (h1, c1, h2, c2)

    carry = (h1s[...], c1s[...], h2s[...], c2s[...])
    h1, c1, h2, c2 = lax.fori_loop(0, TT, step, carry, unroll=True)

    # Persist state for the next time block.
    h1s[...] = h1
    c1s[...] = c1
    h2s[...] = h2
    c2s[...] = c2


# ----------------------------------------------------------------------------
# Parameter packing: reorder gates to [i, f, o, g], pad/pack for the kernel.
# ----------------------------------------------------------------------------
def _pack_params(params, num_classes):
    w1i, w1h, b1, w2i, w2h, b2 = params        # f32, (D, 4H) layouts, order [i,f,g,o]
    D_in = w1i.shape[0]
    H1 = w1h.shape[0]
    H2 = num_classes
    assert H1 % 128 == 0, "hidden1 must be a multiple of 128 (model uses 128)"
    G2 = 32                                     # per-gate lane slab (4*G2 = 128)
    assert H2 <= G2, "num_classes must be <= 32 for the packed layer-2 layout"
    D_pad = _round_up(D_in, 128)

    def reorder(w, h):
        return jnp.concatenate([w[:, s * h:(s + 1) * h] for s in _GATE_PERM], axis=-1)

    # Layer 1: x-projection weight in bf16 (hoisted, off the recurrent chain);
    # recurrent weight and bias in f32.
    w1ih = jnp.zeros((D_pad, 4 * H1), jnp.float32).at[:D_in, :].set(reorder(w1i, H1))
    w1hh = reorder(w1h, H1)
    b1p = reorder(b1, H1)

    # Layer 2: pack the 4*H2 real gate columns into one 128-lane slab, gate t at
    # lane offset t*G2.  Padded columns/bias stay exactly zero so the padded lanes
    # of h2/c2 remain zero through the recurrence.
    w2ih = jnp.zeros((H1, 4 * G2), jnp.float32)
    w2hh = jnp.zeros((G2, 4 * G2), jnp.float32)
    b2p = jnp.zeros((1, 4 * G2), jnp.float32)
    for t, s in enumerate(_GATE_PERM):
        w2ih = w2ih.at[:, t * G2:t * G2 + H2].set(w2i[:, s * H2:(s + 1) * H2])
        w2hh = w2hh.at[:H2, t * G2:t * G2 + H2].set(w2h[:, s * H2:(s + 1) * H2])
        b2p = b2p.at[:, t * G2:t * G2 + H2].set(b2[:, s * H2:(s + 1) * H2])

    return (w1ih.astype(jnp.bfloat16), w1hh, b1p, w2ih, w2hh, b2p, D_pad, G2)


def mann_lstm_pallas(x, packed, num_classes, time_block=16):
    """Runs both stacked LSTMs over the sequence. Returns (T, B, num_classes) f32."""
    w1ih, w1hh, b1, w2ih, w2hh, b2, D_pad, G2 = packed
    T, B, D_in = x.shape
    H1 = w1hh.shape[0]
    B_pad = _round_up(B, 8)
    TT = max(1, min(time_block, T))
    T_pad = _round_up(T, TT)

    # Pad time / batch / feature dims; cast inputs to bf16 (hoisted matmul only).
    xp = jnp.zeros((T_pad, B_pad, D_pad), jnp.bfloat16)
    xp = xp.at[:T, :B, :D_in].set(x.astype(jnp.bfloat16))
    xp2d = xp.reshape(T_pad * B_pad, D_pad)       # time-major rows: row = t*B_pad + b

    # TODO(synk): for very long T, only the last num_classes timesteps of h2 are
    # consumed; the writeback of earlier steps could be skipped with a pinned
    # output block + pl.when on the last grid block.  Negligible at MANN's T.
    # TODO(synk): on v7x a core-parallel leading grid axis over independent
    # episodes would use the 2nd TensorCore; a single episode has nothing to split.
    out2d = pl.pallas_call(
        _mann_lstm_kernel,
        out_shape=jax.ShapeDtypeStruct((T_pad * B_pad, G2), jnp.float32),
        grid_spec=pltpu.PrefetchScalarGridSpec(
            num_scalar_prefetch=0,
            grid=(T_pad // TT,),
            in_specs=[
                pl.BlockSpec((TT * B_pad, D_pad), lambda tb: (tb, 0)),  # x rows
                pl.BlockSpec(w1ih.shape, lambda tb: (0, 0)),            # W1_ih (bf16)
                pl.BlockSpec(w1hh.shape, lambda tb: (0, 0)),            # W1_hh (f32)
                pl.BlockSpec(b1.shape, lambda tb: (0, 0)),              # b1
                pl.BlockSpec(w2ih.shape, lambda tb: (0, 0)),            # W2_ih (packed)
                pl.BlockSpec(w2hh.shape, lambda tb: (0, 0)),            # W2_hh (packed)
                pl.BlockSpec(b2.shape, lambda tb: (0, 0)),              # b2 (packed)
            ],
            out_specs=pl.BlockSpec((TT * B_pad, G2), lambda tb: (tb, 0)),
            scratch_shapes=[
                pltpu.VMEM((TT * B_pad, 4 * H1), jnp.float32),  # hoisted x@W_ih + b1
                pltpu.VMEM((B_pad, H1), jnp.float32),           # h1
                pltpu.VMEM((B_pad, H1), jnp.float32),           # c1
                pltpu.VMEM((B_pad, G2), jnp.float32),           # h2
                pltpu.VMEM((B_pad, G2), jnp.float32),           # c2
            ],
        ),
        compiler_params=pltpu.CompilerParams(
            dimension_semantics=("arbitrary",),          # sequential recurrence
            vmem_limit_bytes=32 * 1024 * 1024),
    )(xp2d, w1ih, w1hh, b1, w2ih, w2hh, b2)

    out = out2d.reshape(T_pad, B_pad, G2)
    return out[:T, :B, :num_classes]


def mann_forward(x, params, num_classes, time_block=16):
    """Full MANN.forward: LSTM stack + last-N-step logits reshaping (glue in JAX)."""
    packed = _pack_params(params, num_classes)
    all_h2 = mann_lstm_pallas(x, packed, num_classes, time_block)   # (T, B, N)
    last = all_h2[-num_classes:]                                    # (N, B, N)
    return jnp.transpose(last, (1, 0, 2)).reshape(-1, num_classes)


# ----------------------------------------------------------------------------
# Deterministic parameter construction (mimics nn.LSTM parameter shapes).
# ----------------------------------------------------------------------------
def init_mann_params(key, num_classes, embed_size, hidden1=128):
    D_in = embed_size + num_classes
    H1, H2 = hidden1, num_classes
    ks = jax.random.split(key, 8)
    s1 = 1.0 / np.sqrt(H1)
    s2 = 1.0 / np.sqrt(H2)
    # PyTorch stores weight_ih as (4H, D); we keep the transposed (D, 4H) layout
    # so the kernel computes x @ W directly. Gate order [i, f, g, o] is preserved.
    w1i = jax.random.uniform(ks[0], (D_in, 4 * H1), jnp.float32, -s1, s1)
    w1h = jax.random.uniform(ks[1], (H1, 4 * H1), jnp.float32, -s1, s1)
    b1 = (jax.random.uniform(ks[2], (1, 4 * H1), jnp.float32, -s1, s1)
          + jax.random.uniform(ks[3], (1, 4 * H1), jnp.float32, -s1, s1))  # b_ih + b_hh
    w2i = jax.random.uniform(ks[4], (H1, 4 * H2), jnp.float32, -s2, s2)
    w2h = jax.random.uniform(ks[5], (H2, 4 * H2), jnp.float32, -s2, s2)
    b2 = (jax.random.uniform(ks[6], (1, 4 * H2), jnp.float32, -s2, s2)
          + jax.random.uniform(ks[7], (1, 4 * H2), jnp.float32, -s2, s2))
    return (w1i, w1h, b1, w2i, w2h, b2)


# ----------------------------------------------------------------------------
# Pure-JAX f32 reference (same math as torch.nn.LSTM) for validation.
# ----------------------------------------------------------------------------
def _lstm_ref(x_seq, w_i, w_h, b, hidden):
    def step(carry, x_t):
        h, c = carry
        g = x_t @ w_i + h @ w_h + b
        i = jax.nn.sigmoid(g[:, 0 * hidden:1 * hidden])
        f = jax.nn.sigmoid(g[:, 1 * hidden:2 * hidden])
        gg = jnp.tanh(g[:, 2 * hidden:3 * hidden])
        o = jax.nn.sigmoid(g[:, 3 * hidden:4 * hidden])
        c = f * c + i * gg
        h = o * jnp.tanh(c)
        return (h, c), h

    B = x_seq.shape[1]
    h0 = jnp.zeros((B, hidden), jnp.float32)
    c0 = jnp.zeros((B, hidden), jnp.float32)
    _, hs = jax.lax.scan(step, (h0, c0), x_seq)
    return hs


def mann_forward_ref(x, params, num_classes):
    w1i, w1h, b1, w2i, w2h, b2 = params
    h1 = _lstm_ref(x, w1i, w1h, b1, w1h.shape[0])
    h2 = _lstm_ref(h1, w2i, w2h, b2, num_classes)
    last = h2[-num_classes:]
    return jnp.transpose(last, (1, 0, 2)).reshape(-1, num_classes)


if __name__ == "__main__":
    num_classes = 4
    sample_per_class = 2
    embed_size = 32                      # small embed size for the example
    B = 2
    T = num_classes * sample_per_class   # seq length (>= num_classes)
    D_in = embed_size + num_classes

    key = jax.random.PRNGKey(0)
    k_x, k_p = jax.random.split(key)
    x = jax.random.normal(k_x, (T, B, D_in), jnp.float32)
    params = init_mann_params(k_p, num_classes, embed_size)

    fwd = jax.jit(functools.partial(mann_forward, num_classes=num_classes,
                                    time_block=16))
    out = jax.block_until_ready(fwd(x, params))

    ref = jax.block_until_ready(mann_forward_ref(x, params, num_classes))
    assert out.shape == (B * num_classes, num_classes), out.shape
    # Only x / W_ih are bf16 (f32 accumulation, f32 recurrent weights & state).
    np.testing.assert_allclose(np.asarray(out), np.asarray(ref),
                               rtol=2e-2, atol=2e-2)

    print("KERNEL_OK")
</pallas_src>

<mosaic_0001>
module attributes {stable_mosaic.version = 11 : i64} {
  func.func @_mann_lstm_kernel(%arg0: i32, %arg1: memref<64x128xbf16, #tpu.memory_space<vmem>>, %arg2: memref<128x512xbf16, #tpu.memory_space<vmem>>, %arg3: memref<128x512xf32, #tpu.memory_space<vmem>>, %arg4: memref<1x512xf32, #tpu.memory_space<vmem>>, %arg5: memref<128x128xf32, #tpu.memory_space<vmem>>, %arg6: memref<32x128xf32, #tpu.memory_space<vmem>>, %arg7: memref<1x128xf32, #tpu.memory_space<vmem>>, %arg8: memref<64x32xf32, #tpu.memory_space<vmem>>, %arg9: memref<64x512xf32, #tpu.memory_space<vmem>>, %arg10: memref<8x128xf32, #tpu.memory_space<vmem>>, %arg11: memref<8x128xf32, #tpu.memory_space<vmem>>, %arg12: memref<8x32xf32, #tpu.memory_space<vmem>>, %arg13: memref<8x32xf32, #tpu.memory_space<vmem>>) attributes {dimension_semantics = [#tpu.dimension_semantics<arbitrary>], iteration_bounds = array<i64: 1>, scalar_prefetch = 0 : i64, scratch_operands = 5 : i64, tpu.core_type = #tpu.core_type<tc>, window_params = [{transform_indices = @transform_0, window_bounds = array<i64: 64, 128>}, {pipeline_mode = #tpu.pipeline_mode<synchronous>, transform_indices = @transform_1, window_bounds = array<i64: 128, 512>}, {pipeline_mode = #tpu.pipeline_mode<synchronous>, transform_indices = @transform_2, window_bounds = array<i64: 128, 512>}, {pipeline_mode = #tpu.pipeline_mode<synchronous>, transform_indices = @transform_3, window_bounds = array<i64: 1, 512>}, {pipeline_mode = #tpu.pipeline_mode<synchronous>, transform_indices = @transform_4, window_bounds = array<i64: 128, 128>}, {pipeline_mode = #tpu.pipeline_mode<synchronous>, transform_indices = @transform_5, window_bounds = array<i64: 32, 128>}, {pipeline_mode = #tpu.pipeline_mode<synchronous>, transform_indices = @transform_6, window_bounds = array<i64: 1, 128>}, {transform_indices = @transform_7, window_bounds = array<i64: 64, 32>}]} {
    %c0_i32 = arith.constant 0 : i32
    %0 = arith.cmpi eq, %arg0, %c0_i32 : i32
    %1 = arith.extui %0 : i1 to i32
    %c0_i32_0 = arith.constant 0 : i32
    %2 = arith.cmpi ne, %1, %c0_i32_0 : i32
    scf.if %2 {
      %cst_129 = arith.constant 0.000000e+00 : f32
      %409 = vector.broadcast %cst_129 : f32 to vector<8x128xf32>
      %c0_130 = arith.constant 0 : index
      %c0_131 = arith.constant 0 : index
      %410 = vector.load %arg10[%c0_130, %c0_131] : memref<8x128xf32, #tpu.memory_space<vmem>>, vector<8x128xf32>
      tpu.vector_store %arg10[%c0_130, %c0_131], %409 {strides = array<i32>} : memref<8x128xf32, #tpu.memory_space<vmem>>, vector<8x128xf32>,
      %cst_132 = arith.constant 0.000000e+00 : f32
      %411 = vector.broadcast %cst_132 : f32 to vector<8x128xf32>
      %c0_133 = arith.constant 0 : index
      %c0_134 = arith.constant 0 : index
      %412 = vector.load %arg11[%c0_133, %c0_134] : memref<8x128xf32, #tpu.memory_space<vmem>>, vector<8x128xf32>
      tpu.vector_store %arg11[%c0_133, %c0_134], %411 {strides = array<i32>} : memref<8x128xf32, #tpu.memory_space<vmem>>, vector<8x128xf32>,
      %cst_135 = arith.constant 0.000000e+00 : f32
      %413 = vector.broadcast %cst_135 : f32 to vector<8x32xf32>
      %c0_136 = arith.constant 0 : index
      %c0_137 = arith.constant 0 : index
      %414 = vector.load %arg12[%c0_136, %c0_137] : memref<8x32xf32, #tpu.memory_space<vmem>>, vector<8x32xf32>
      tpu.vector_store %arg12[%c0_136, %c0_137], %413 {strides = array<i32>} : memref<8x32xf32, #tpu.memory_space<vmem>>, vector<8x32xf32>,
      %cst_138 = arith.constant 0.000000e+00 : f32
      %415 = vector.broadcast %cst_138 : f32 to vector<8x32xf32>
      %c0_139 = arith.constant 0 : index
      %c0_140 = arith.constant 0 : index
      %416 = vector.load %arg13[%c0_139, %c0_140] : memref<8x32xf32, #tpu.memory_space<vmem>>, vector<8x32xf32>
      tpu.vector_store %arg13[%c0_139, %c0_140], %415 {strides = array<i32>} : memref<8x32xf32, #tpu.memory_space<vmem>>, vector<8x32xf32>,
    } else {
    }
    %c0 = arith.constant 0 : index
    %c0_1 = arith.constant 0 : index
    %3 = vector.load %arg1[%c0, %c0_1] : memref<64x128xbf16, #tpu.memory_space<vmem>>, vector<64x128xbf16>
    %c0_2 = arith.constant 0 : index
    %c0_3 = arith.constant 0 : index
    %4 = vector.load %arg2[%c0_2, %c0_3] : memref<128x512xbf16, #tpu.memory_space<vmem>>, vector<128x512xbf16>
    %cst = arith.constant dense<0.000000e+00> : vector<64x512xf32>
    %5 = tpu.matmul %3, %4, %cst {dimension_numbers = #tpu.dot_dimension_numbers<[1], [0], [0], [1], [0, 0, 1, 1], [], []>} : vector<64x128xbf16>, vector<128x512xbf16>, vector<64x512xf32> -> vector<64x512xf32>
    %c0_4 = arith.constant 0 : index
    %c0_5 = arith.constant 0 : index
    %6 = vector.load %arg4[%c0_4, %c0_5] : memref<1x512xf32, #tpu.memory_space<vmem>>, vector<1x512xf32>
    %7 = vector.shape_cast %6 : vector<1x512xf32> to vector<1x512xf32>
    %8 = vector.broadcast %7 : vector<1x512xf32> to vector<64x512xf32>
    %9 = arith.addf %5, %8 : vector<64x512xf32>
    %c0_6 = arith.constant 0 : index
    %c0_7 = arith.constant 0 : index
    %10 = vector.load %arg9[%c0_6, %c0_7] : memref<64x512xf32, #tpu.memory_space<vmem>>, vector<64x512xf32>
    tpu.vector_store %arg9[%c0_6, %c0_7], %9 {strides = array<i32>} : memref<64x512xf32, #tpu.memory_space<vmem>>, vector<64x512xf32>,
    %c0_8 = arith.constant 0 : index
    %c0_9 = arith.constant 0 : index
    %11 = vector.load %arg3[%c0_8, %c0_9] : memref<128x512xf32, #tpu.memory_space<vmem>>, vector<128x512xf32>
    %c0_10 = arith.constant 0 : index
    %c0_11 = arith.constant 0 : index
    %12 = vector.load %arg5[%c0_10, %c0_11] : memref<128x128xf32, #tpu.memory_space<vmem>>, vector<128x128xf32>
    %c0_12 = arith.constant 0 : index
    %c0_13 = arith.constant 0 : index
    %13 = vector.load %arg6[%c0_12, %c0_13] : memref<32x128xf32, #tpu.memory_space<vmem>>, vector<32x128xf32>
    %c0_14 = arith.constant 0 : index
    %c0_15 = arith.constant 0 : index
    %14 = vector.load %arg7[%c0_14, %c0_15] : memref<1x128xf32, #tpu.memory_space<vmem>>, vector<1x128xf32>
    %15 = vector.shape_cast %14 : vector<1x128xf32> to vector<1x128xf32>
    %16 = vector.broadcast %15 : vector<1x128xf32> to vector<8x128xf32>
    %c0_16 = arith.constant 0 : index
    %c0_17 = arith.constant 0 : index
    %17 = vector.load %arg10[%c0_16, %c0_17] : memref<8x128xf32, #tpu.memory_space<vmem>>, vector<8x128xf32>
    %c0_18 = arith.constant 0 : index
    %c0_19 = arith.constant 0 : index
    %18 = vector.load %arg11[%c0_18, %c0_19] : memref<8x128xf32, #tpu.memory_space<vmem>>, vector<8x128xf32>
    %c0_20 = arith.constant 0 : index
    %c0_21 = arith.constant 0 : index
    %19 = vector.load %arg12[%c0_20, %c0_21] : memref<8x32xf32, #tpu.memory_space<vmem>>, vector<8x32xf32>
    %c0_22 = arith.constant 0 : index
    %c0_23 = arith.constant 0 : index
    %20 = vector.load %arg13[%c0_22, %c0_23] : memref<8x32xf32, #tpu.memory_space<vmem>>, vector<8x32xf32>
    %c0_i32_24 = arith.constant 0 : i32
    %c8_i32 = arith.constant 8 : i32
    %21 = arith.muli %c0_i32_24, %c8_i32 : i32
    %22 = tpu.assume_multiple %21, 8 : i32
    %23 = arith.index_cast %22 : i32 to index
    %c0_25 = arith.constant 0 : index
    %24 = vector.load %arg9[%23, %c0_25] : memref<64x512xf32, #tpu.memory_space<vmem>>, vector<8x512xf32>
    %cst_26 = arith.constant dense<0.000000e+00> : vector<8x512xf32>
    %25 = tpu.matmul %17, %11, %cst_26 {dimension_numbers = #tpu.dot_dimension_numbers<[1], [0], [0], [1], [0, 0, 1, 1], [], []>} : vector<8x128xf32>, vector<128x512xf32>, vector<8x512xf32> -> vector<8x512xf32>
    %26 = arith.addf %24, %25 : vector<8x512xf32>
    %27 = vector.extract_strided_slice %26 {offsets = [0, 0], sizes = [8, 384], strides = [1, 1]} : vector<8x512xf32> to vector<8x384xf32>
    %cst_27 = arith.constant 5.000000e-01 : f32
    %28 = vector.broadcast %cst_27 : f32 to vector<8x384xf32>
    %29 = arith.mulf %28, %27 : vector<8x384xf32>
    %30 = math.tanh %29 : vector<8x384xf32>
    %cst_28 = arith.constant 5.000000e-01 : f32
    %31 = vector.broadcast %cst_28 : f32 to vector<8x384xf32>
    %32 = arith.mulf %31, %30 : vector<8x384xf32>
    %cst_29 = arith.constant 5.000000e-01 : f32
    %33 = vector.broadcast %cst_29 : f32 to vector<8x384xf32>
    %34 = arith.addf %32, %33 : vector<8x384xf32>
    %35 = vector.extract_strided_slice %26 {offsets = [0, 384], sizes = [8, 128], strides = [1, 1]} : vector<8x512xf32> to vector<8x128xf32>
    %36 = math.tanh %35 : vector<8x128xf32>
    %37 = vector.extract_strided_slice %34 {offsets = [0, 128], sizes = [8, 128], strides = [1, 1]} : vector<8x384xf32> to vector<8x128xf32>
    %38 = arith.mulf %37, %18 : vector<8x128xf32>
    %39 = vector.extract_strided_slice %34 {offsets = [0, 0], sizes = [8, 128], strides = [1, 1]} : vector<8x384xf32> to vector<8x128xf32>
    %40 = arith.mulf %39, %36 : vector<8x128xf32>
    %41 = arith.addf %38, %40 : vector<8x128xf32>
    %42 = vector.extract_strided_slice %34 {offsets = [0, 256], sizes = [8, 128], strides = [1, 1]} : vector<8x384xf32> to vector<8x128xf32>
    %43 = math.tanh %41 : vector<8x128xf32>
    %44 = arith.mulf %42, %43 : vector<8x128xf32>
    %cst_30 = arith.constant dense<0.000000e+00> : vector<8x128xf32>
    %45 = tpu.matmul %44, %12, %cst_30 {dimension_numbers = #tpu.dot_dimension_numbers<[1], [0], [0], [1], [0, 0, 1, 1], [], []>} : vector<8x128xf32>, vector<128x128xf32>, vector<8x128xf32> -> vector<8x128xf32>
    %cst_31 = arith.constant dense<0.000000e+00> : vector<8x128xf32>
    %46 = tpu.matmul %19, %13, %cst_31 {dimension_numbers = #tpu.dot_dimension_numbers<[1], [0], [0], [1], [0, 0, 1, 1], [], []>} : vector<8x32xf32>, vector<32x128xf32>, vector<8x128xf32> -> vector<8x128xf32>
    %47 = arith.addf %45, %46 : vector<8x128xf32>
    %48 = arith.addf %47, %16 : vector<8x128xf32>
    %49 = vector.extract_strided_slice %48 {offsets = [0, 0], sizes = [8, 96], strides = [1, 1]} : vector<8x128xf32> to vector<8x96xf32>
    %cst_32 = arith.constant 5.000000e-01 : f32
    %50 = vector.broadcast %cst_32 : f32 to vector<8x96xf32>
    %51 = arith.mulf %50, %49 : vector<8x96xf32>
    %52 = math.tanh %51 : vector<8x96xf32>
    %cst_33 = arith.constant 5.000000e-01 : f32
    %53 = vector.broadcast %cst_33 : f32 to vector<8x96xf32>
    %54 = arith.mulf %53, %52 : vector<8x96xf32>
    %cst_34 = arith.constant 5.000000e-01 : f32
    %55 = vector.broadcast %cst_34 : f32 to vector<8x96xf32>
    %56 = arith.addf %54, %55 : vector<8x96xf32>
    %57 = vector.extract_strided_slice %48 {offsets = [0, 96], sizes = [8, 32], strides = [1, 1]} : vector<8x128xf32> to vector<8x32xf32>
    %58 = math.tanh %57 : vector<8x32xf32>
    %59 = vector.extract_strided_slice %56 {offsets = [0, 32], sizes = [8, 32], strides = [1, 1]} : vector<8x96xf32> to vector<8x32xf32>
    %60 = arith.mulf %59, %20 : vector<8x32xf32>
    %61 = vector.extract_strided_slice %56 {offsets = [0, 0], sizes = [8, 32], strides = [1, 1]} : vector<8x96xf32> to vector<8x32xf32>
    %62 = arith.mulf %61, %58 : vector<8x32xf32>
    %63 = arith.addf %60, %62 : vector<8x32xf32>
    %64 = vector.extract_strided_slice %56 {offsets = [0, 64], sizes = [8, 32], strides = [1, 1]} : vector<8x96xf32> to vector<8x32xf32>
    %65 = math.tanh %63 : vector<8x32xf32>
    %66 = arith.mulf %64, %65 : vector<8x32xf32>
    %67 = arith.index_cast %22 : i32 to index
    %c0_35 = arith.constant 0 : index
    %68 = vector.load %arg8[%67, %c0_35] : memref<64x32xf32, #tpu.memory_space<vmem>>, vector<8x32xf32>
    tpu.vector_store %arg8[%67, %c0_35], %66 {strides = array<i32>} : memref<64x32xf32, #tpu.memory_space<vmem>>, vector<8x32xf32>,
    %c1_i32 = arith.constant 1 : i32
    %c8_i32_36 = arith.constant 8 : i32
    %69 = arith.muli %c1_i32, %c8_i32_36 : i32
    %70 = tpu.assume_multiple %69, 8 : i32
    %71 = arith.index_cast %70 : i32 to index
    %c0_37 = arith.constant 0 : index
    %72 = vector.load %arg9[%71, %c0_37] : memref<64x512xf32, #tpu.memory_space<vmem>>, vector<8x512xf32>
    %cst_38 = arith.constant dense<0.000000e+00> : vector<8x512xf32>
    %73 = tpu.matmul %44, %11, %cst_38 {dimension_numbers = #tpu.dot_dimension_numbers<[1], [0], [0], [1], [0, 0, 1, 1], [], []>} : vector<8x128xf32>, vector<128x512xf32>, vector<8x512xf32> -> vector<8x512xf32>
    %74 = arith.addf %72, %73 : vector<8x512xf32>
    %75 = vector.extract_strided_slice %74 {offsets = [0, 0], sizes = [8, 384], strides = [1, 1]} : vector<8x512xf32> to vector<8x384xf32>
    %cst_39 = arith.constant 5.000000e-01 : f32
    %76 = vector.broadcast %cst_39 : f32 to vector<8x384xf32>
    %77 = arith.mulf %76, %75 : vector<8x384xf32>
    %78 = math.tanh %77 : vector<8x384xf32>
    %cst_40 = arith.constant 5.000000e-01 : f32
    %79 = vector.broadcast %cst_40 : f32 to vector<8x384xf32>
    %80 = arith.mulf %79, %78 : vector<8x384xf32>
    %cst_41 = arith.constant 5.000000e-01 : f32
    %81 = vector.broadcast %cst_41 : f32 to vector<8x384xf32>
    %82 = arith.addf %80, %81 : vector<8x384xf32>
    %83 = vector.extract_strided_slice %74 {offsets = [0, 384], sizes = [8, 128], strides = [1, 1]} : vector<8x512xf32> to vector<8x128xf32>
    %84 = math.tanh %83 : vector<8x128xf32>
    %85 = vector.extract_strided_slice %82 {offsets = [0, 128], sizes = [8, 128], strides = [1, 1]} : vector<8x384xf32> to vector<8x128xf32>
    %86 = arith.mulf %85, %41 : vector<8x128xf32>
    %87 = vector.extract_strided_slice %82 {offsets = [0, 0], sizes = [8, 128], strides = [1, 1]} : vector<8x384xf32> to vector<8x128xf32>
    %88 = arith.mulf %87, %84 : vector<8x128xf32>
    %89 = arith.addf %86, %88 : vector<8x128xf32>
    %90 = vector.extract_strided_slice %82 {offsets = [0, 256], sizes = [8, 128], strides = [1, 1]} : vector<8x384xf32> to vector<8x128xf32>
    %91 = math.tanh %89 : vector<8x128xf32>
    %92 = arith.mulf %90, %91 : vector<8x128xf32>
    %cst_42 = arith.constant dense<0.000000e+00> : vector<8x128xf32>
    %93 = tpu.matmul %92, %12, %cst_42 {dimension_numbers = #tpu.dot_dimension_numbers<[1], [0], [0], [1], [0, 0, 1, 1], [], []>} : vector<8x128xf32>, vector<128x128xf32>, vector<8x128xf32> -> vector<8x128xf32>
    %cst_43 = arith.constant dense<0.000000e+00> : vector<8x128xf32>
    %94 = tpu.matmul %66, %13, %cst_43 {dimension_numbers = #tpu.dot_dimension_numbers<[1], [0], [0], [1], [0, 0, 1, 1], [], []>} : vector<8x32xf32>, vector<32x128xf32>, vector<8x128xf32> -> vector<8x128xf32>
    %95 = arith.addf %93, %94 : vector<8x128xf32>
    %96 = arith.addf %95, %16 : vector<8x128xf32>
    %97 = vector.extract_strided_slice %96 {offsets = [0, 0], sizes = [8, 96], strides = [1, 1]} : vector<8x128xf32> to vector<8x96xf32>
    %cst_44 = arith.constant 5.000000e-01 : f32
    %98 = vector.broadcast %cst_44 : f32 to vector<8x96xf32>
    %99 = arith.mulf %98, %97 : vector<8x96xf32>
    %100 = math.tanh %99 : vector<8x96xf32>
    %cst_45 = arith.constant 5.000000e-01 : f32
    %101 = vector.broadcast %cst_45 : f32 to vector<8x96xf32>
    %102 = arith.mulf %101, %100 : vector<8x96xf32>
    %cst_46 = arith.constant 5.000000e-01 : f32
    %103 = vector.broadcast %cst_46 : f32 to vector<8x96xf32>
    %104 = arith.addf %102, %103 : vector<8x96xf32>
    %105 = vector.extract_strided_slice %96 {offsets = [0, 96], sizes = [8, 32], strides = [1, 1]} : vector<8x128xf32> to vector<8x32xf32>
    %106 = math.tanh %105 : vector<8x32xf32>
    %107 = vector.extract_strided_slice %104 {offsets = [0, 32], sizes = [8, 32], strides = [1, 1]} : vector<8x96xf32> to vector<8x32xf32>
    %108 = arith.mulf %107, %63 : vector<8x32xf32>
    %109 = vector.extract_strided_slice %104 {offsets = [0, 0], sizes = [8, 32], strides = [1, 1]} : vector<8x96xf32> to vector<8x32xf32>
    %110 = arith.mulf %109, %106 : vector<8x32xf32>
    %111 = arith.addf %108, %110 : vector<8x32xf32>
    %112 = vector.extract_strided_slice %104 {offsets = [0, 64], sizes = [8, 32], strides = [1, 1]} : vector<8x96xf32> to vector<8x32xf32>
    %113 = math.tanh %111 : vector<8x32xf32>
    %114 = arith.mulf %112, %113 : vector<8x32xf32>
    %115 = arith.index_cast %70 : i32 to index
    %c0_47 = arith.constant 0 : index
    %116 = vector.load %arg8[%115, %c0_47] : memref<64x32xf32, #tpu.memory_space<vmem>>, vector<8x32xf32>
    tpu.vector_store %arg8[%115, %c0_47], %114 {strides = array<i32>} : memref<64x32xf32, #tpu.memory_space<vmem>>, vector<8x32xf32>,
    %c2_i32 = arith.constant 2 : i32
    %c8_i32_48 = arith.constant 8 : i32
    %117 = arith.muli %c2_i32, %c8_i32_48 : i32
    %118 = tpu.assume_multiple %117, 8 : i32
    %119 = arith.index_cast %118 : i32 to index
    %c0_49 = arith.constant 0 : index
    %120 = vector.load %arg9[%119, %c0_49] : memref<64x512xf32, #tpu.memory_space<vmem>>, vector<8x512xf32>
    %cst_50 = arith.constant dense<0.000000e+00> : vector<8x512xf32>
    %121 = tpu.matmul %92, %11, %cst_50 {dimension_numbers = #tpu.dot_dimension_numbers<[1], [0], [0], [1], [0, 0, 1, 1], [], []>} : vector<8x128xf32>, vector<128x512xf32>, vector<8x512xf32> -> vector<8x512xf32>
    %122 = arith.addf %120, %121 : vector<8x512xf32>
    %123 = vector.extract_strided_slice %122 {offsets = [0, 0], sizes = [8, 384], strides = [1, 1]} : vector<8x512xf32> to vector<8x384xf32>
    %cst_51 = arith.constant 5.000000e-01 : f32
    %124 = vector.broadcast %cst_51 : f32 to vector<8x384xf32>
    %125 = arith.mulf %124, %123 : vector<8x384xf32>
    %126 = math.tanh %125 : vector<8x384xf32>
    %cst_52 = arith.constant 5.000000e-01 : f32
    %127 = vector.broadcast %cst_52 : f32 to vector<8x384xf32>
    %128 = arith.mulf %127, %126 : vector<8x384xf32>
    %cst_53 = arith.constant 5.000000e-01 : f32
    %129 = vector.broadcast %cst_53 : f32 to vector<8x384xf32>
    %130 = arith.addf %128, %129 : vector<8x384xf32>
    %131 = vector.extract_strided_slice %122 {offsets = [0, 384], sizes = [8, 128], strides = [1, 1]} : vector<8x512xf32> to vector<8x128xf32>
    %132 = math.tanh %131 : vector<8x128xf32>
    %133 = vector.extract_strided_slice %130 {offsets = [0, 128], sizes = [8, 128], strides = [1, 1]} : vector<8x384xf32> to vector<8x128xf32>
    %134 = arith.mulf %133, %89 : vector<8x128xf32>
    %135 = vector.extract_strided_slice %130 {offsets = [0, 0], sizes = [8, 128], strides = [1, 1]} : vector<8x384xf32> to vector<8x128xf32>
    %136 = arith.mulf %135, %132 : vector<8x128xf32>
    %137 = arith.addf %134, %136 : vector<8x128xf32>
    %138 = vector.extract_strided_slice %130 {offsets = [0, 256], sizes = [8, 128], strides = [1, 1]} : vector<8x384xf32> to vector<8x128xf32>
    %139 = math.tanh %137 : vector<8x128xf32>
    %140 = arith.mulf %138, %139 : vector<8x128xf32>
    %cst_54 = arith.constant dense<0.000000e+00> : vector<8x128xf32>
    %141 = tpu.matmul %140, %12, %cst_54 {dimension_numbers = #tpu.dot_dimension_numbers<[1], [0], [0], [1], [0, 0, 1, 1], [], []>} : vector<8x128xf32>, vector<128x128xf32>, vector<8x128xf32> -> vector<8x128xf32>
    %cst_55 = arith.constant dense<0.000000e+00> : vector<8x128xf32>
    %142 = tpu.matmul %114, %13, %cst_55 {dimension_numbers = #tpu.dot_dimension_numbers<[1], [0], [0], [1], [0, 0, 1, 1], [], []>} : vector<8x32xf32>, vector<32x128xf32>, vector<8x128xf32> -> vector<8x128xf32>
    %143 = arith.addf %141, %142 : vector<8x128xf32>
    %144 = arith.addf %143, %16 : vector<8x128xf32>
    %145 = vector.extract_strided_slice %144 {offsets = [0, 0], sizes = [8, 96], strides = [1, 1]} : vector<8x128xf32> to vector<8x96xf32>
    %cst_56 = arith.constant 5.000000e-01 : f32
    %146 = vector.broadcast %cst_56 : f32 to vector<8x96xf32>
    %147 = arith.mulf %146, %145 : vector<8x96xf32>
    %148 = math.tanh %147 : vector<8x96xf32>
    %cst_57 = arith.constant 5.000000e-01 : f32
    %149 = vector.broadcast %cst_57 : f32 to vector<8x96xf32>
    %150 = arith.mulf %149, %148 : vector<8x96xf32>
    %cst_58 = arith.constant 5.000000e-01 : f32
    %151 = vector.broadcast %cst_58 : f32 to vector<8x96xf32>
    %152 = arith.addf %150, %151 : vector<8x96xf32>
    %153 = vector.extract_strided_slice %144 {offsets = [0, 96], sizes = [8, 32], strides = [1, 1]} : vector<8x128xf32> to vector<8x32xf32>
    %154 = math.tanh %153 : vector<8x32xf32>
    %155 = vector.extract_strided_slice %152 {offsets = [0, 32], sizes = [8, 32], strides = [1, 1]} : vector<8x96xf32> to vector<8x32xf32>
    %156 = arith.mulf %155, %111 : vector<8x32xf32>
    %157 = vector.extract_strided_slice %152 {offsets = [0, 0], sizes = [8, 32], strides = [1, 1]} : vector<8x96xf32> to vector<8x32xf32>
    %158 = arith.mulf %157, %154 : vector<8x32xf32>
    %159 = arith.addf %156, %158 : vector<8x32xf32>
    %160 = vector.extract_strided_slice %152 {offsets = [0, 64], sizes = [8, 32], strides = [1, 1]} : vector<8x96xf32> to vector<8x32xf32>
    %161 = math.tanh %159 : vector<8x32xf32>
    %162 = arith.mulf %160, %161 : vector<8x32xf32>
    %163 = arith.index_cast %118 : i32 to index
    %c0_59 = arith.constant 0 : index
    %164 = vector.load %arg8[%163, %c0_59] : memref<64x32xf32, #tpu.memory_space<vmem>>, vector<8x32xf32>
    tpu.vector_store %arg8[%163, %c0_59], %162 {strides = array<i32>} : memref<64x32xf32, #tpu.memory_space<vmem>>, vector<8x32xf32>,
    %c3_i32 = arith.constant 3 : i32
    %c8_i32_60 = arith.constant 8 : i32
    %165 = arith.muli %c3_i32, %c8_i32_60 : i32
    %166 = tpu.assume_multiple %165, 8 : i32
    %167 = arith.index_cast %166 : i32 to index
    %c0_61 = arith.constant 0 : index
    %168 = vector.load %arg9[%167, %c0_61] : memref<64x512xf32, #tpu.memory_space<vmem>>, vector<8x512xf32>
    %cst_62 = arith.constant dense<0.000000e+00> : vector<8x512xf32>
    %169 = tpu.matmul %140, %11, %cst_62 {dimension_numbers = #tpu.dot_dimension_numbers<[1], [0], [0], [1], [0, 0, 1, 1], [], []>} : vector<8x128xf32>, vector<128x512xf32>, vector<8x512xf32> -> vector<8x512xf32>
    %170 = arith.addf %168, %169 : vector<8x512xf32>
    %171 = vector.extract_strided_slice %170 {offsets = [0, 0], sizes = [8, 384], strides = [1, 1]} : vector<8x512xf32> to vector<8x384xf32>
    %cst_63 = arith.constant 5.000000e-01 : f32
    %172 = vector.broadcast %cst_63 : f32 to vector<8x384xf32>
    %173 = arith.mulf %172, %171 : vector<8x384xf32>
    %174 = math.tanh %173 : vector<8x384xf32>
    %cst_64 = arith.constant 5.000000e-01 : f32
    %175 = vector.broadcast %cst_64 : f32 to vector<8x384xf32>
    %176 = arith.mulf %175, %174 : vector<8x384xf32>
    %cst_65 = arith.constant 5.000000e-01 : f32
    %177 = vector.broadcast %cst_65 : f32 to vector<8x384xf32>
    %178 = arith.addf %176, %177 : vector<8x384xf32>
    %179 = vector.extract_strided_slice %170 {offsets = [0, 384], sizes = [8, 128], strides = [1, 1]} : vector<8x512xf32> to vector<8x128xf32>
    %180 = math.tanh %179 : vector<8x128xf32>
    %181 = vector.extract_strided_slice %178 {offsets = [0, 128], sizes = [8, 128], strides = [1, 1]} : vector<8x384xf32> to vector<8x128xf32>
    %182 = arith.mulf %181, %137 : vector<8x128xf32>
    %183 = vector.extract_strided_slice %178 {offsets = [0, 0], sizes = [8, 128], strides = [1, 1]} : vector<8x384xf32> to vector<8x128xf32>
    %184 = arith.mulf %183, %180 : vector<8x128xf32>
    %185 = arith.addf %182, %184 : vector<8x128xf32>
    %186 = vector.extract_strided_slice %178 {offsets = [0, 256], sizes = [8, 128], strides = [1, 1]} : vector<8x384xf32> to vector<8x128xf32>
    %187 = math.tanh %185 : vector<8x128xf32>
    %188 = arith.mulf %186, %187 : vector<8x128xf32>
    %cst_66 = arith.constant dense<0.000000e+00> : vector<8x128xf32>
    %189 = tpu.matmul %188, %12, %cst_66 {dimension_numbers = #tpu.dot_dimension_numbers<[1], [0], [0], [1], [0, 0, 1, 1], [], []>} : vector<8x128xf32>, vector<128x128xf32>, vector<8x128xf32> -> vector<8x128xf32>
    %cst_67 = arith.constant dense<0.000000e+00> : vector<8x128xf32>
    %190 = tpu.matmul %162, %13, %cst_67 {dimension_numbers = #tpu.dot_dimension_numbers<[1], [0], [0], [1], [0, 0, 1, 1], [], []>} : vector<8x32xf32>, vector<32x128xf32>, vector<8x128xf32> -> vector<8x128xf32>
    %191 = arith.addf %189, %190 : vector<8x128xf32>
    %192 = arith.addf %191, %16 : vector<8x128xf32>
    %193 = vector.extract_strided_slice %192 {offsets = [0, 0], sizes = [8, 96], strides = [1, 1]} : vector<8x128xf32> to vector<8x96xf32>
    %cst_68 = arith.constant 5.000000e-01 : f32
    %194 = vector.broadcast %cst_68 : f32 to vector<8x96xf32>
    %195 = arith.mulf %194, %193 : vector<8x96xf32>
    %196 = math.tanh %195 : vector<8x96xf32>
    %cst_69 = arith.constant 5.000000e-01 : f32
    %197 = vector.broadcast %cst_69 : f32 to vector<8x96xf32>
    %198 = arith.mulf %197, %196 : vector<8x96xf32>
    %cst_70 = arith.constant 5.000000e-01 : f32
    %199 = vector.broadcast %cst_70 : f32 to vector<8x96xf32>
    %200 = arith.addf %198, %199 : vector<8x96xf32>
    %201 = vector.extract_strided_slice %192 {offsets = [0, 96], sizes = [8, 32], strides = [1, 1]} : vector<8x128xf32> to vector<8x32xf32>
    %202 = math.tanh %201 : vector<8x32xf32>
    %203 = vector.extract_strided_slice %200 {offsets = [0, 32], sizes = [8, 32], strides = [1, 1]} : vector<8x96xf32> to vector<8x32xf32>
    %204 = arith.mulf %203, %159 : vector<8x32xf32>
    %205 = vector.extract_strided_slice %200 {offsets = [0, 0], sizes = [8, 32], strides = [1, 1]} : vector<8x96xf32> to vector<8x32xf32>
    %206 = arith.mulf %205, %202 : vector<8x32xf32>
    %207 = arith.addf %204, %206 : vector<8x32xf32>
    %208 = vector.extract_strided_slice %200 {offsets = [0, 64], sizes = [8, 32], strides = [1, 1]} : vector<8x96xf32> to vector<8x32xf32>
    %209 = math.tanh %207 : vector<8x32xf32>
    %210 = arith.mulf %208, %209 : vector<8x32xf32>
    %211 = arith.index_cast %166 : i32 to index
    %c0_71 = arith.constant 0 : index
    %212 = vector.load %arg8[%211, %c0_71] : memref<64x32xf32, #tpu.memory_space<vmem>>, vector<8x32xf32>
    tpu.vector_store %arg8[%211, %c0_71], %210 {strides = array<i32>} : memref<64x32xf32, #tpu.memory_space<vmem>>, vector<8x32xf32>,
    %c4_i32 = arith.constant 4 : i32
    %c8_i32_72 = arith.constant 8 : i32
    %213 = arith.muli %c4_i32, %c8_i32_72 : i32
    %214 = tpu.assume_multiple %213, 8 : i32
    %215 = arith.index_cast %214 : i32 to index
    %c0_73 = arith.constant 0 : index
    %216 = vector.load %arg9[%215, %c0_73] : memref<64x512xf32, #tpu.memory_space<vmem>>, vector<8x512xf32>
    %cst_74 = arith.constant dense<0.000000e+00> : vector<8x512xf32>
    %217 = tpu.matmul %188, %11, %cst_74 {dimension_numbers = #tpu.dot_dimension_numbers<[1], [0], [0], [1], [0, 0, 1, 1], [], []>} : vector<8x128xf32>, vector<128x512xf32>, vector<8x512xf32> -> vector<8x512xf32>
    %218 = arith.addf %216, %217 : vector<8x512xf32>
    %219 = vector.extract_strided_slice %218 {offsets = [0, 0], sizes = [8, 384], strides = [1, 1]} : vector<8x512xf32> to vector<8x384xf32>
    %cst_75 = arith.constant 5.000000e-01 : f32
    %220 = vector.broadcast %cst_75 : f32 to vector<8x384xf32>
    %221 = arith.mulf %220, %219 : vector<8x384xf32>
    %222 = math.tanh %221 : vector<8x384xf32>
    %cst_76 = arith.constant 5.000000e-01 : f32
    %223 = vector.broadcast %cst_76 : f32 to vector<8x384xf32>
    %224 = arith.mulf %223, %222 : vector<8x384xf32>
    %cst_77 = arith.constant 5.000000e-01 : f32
    %225 = vector.broadcast %cst_77 : f32 to vector<8x384xf32>
    %226 = arith.addf %224, %225 : vector<8x384xf32>
    %227 = vector.extract_strided_slice %218 {offsets = [0, 384], sizes = [8, 128], strides = [1, 1]} : vector<8x512xf32> to vector<8x128xf32>
    %228 = math.tanh %227 : vector<8x128xf32>
    %229 = vector.extract_strided_slice %226 {offsets = [0, 128], sizes = [8, 128], strides = [1, 1]} : vector<8x384xf32> to vector<8x128xf32>
    %230 = arith.mulf %229, %185 : vector<8x128xf32>
    %231 = vector.extract_strided_slice %226 {offsets = [0, 0], sizes = [8, 128], strides = [1, 1]} : vector<8x384xf32> to vector<8x128xf32>
    %232 = arith.mulf %231, %228 : vector<8x128xf32>
    %233 = arith.addf %230, %232 : vector<8x128xf32>
    %234 = vector.extract_strided_slice %226 {offsets = [0, 256], sizes = [8, 128], strides = [1, 1]} : vector<8x384xf32> to vector<8x128xf32>
    %235 = math.tanh %233 : vector<8x128xf32>
    %236 = arith.mulf %234, %235 : vector<8x128xf32>
    %cst_78 = arith.constant dense<0.000000e+00> : vector<8x128xf32>
    %237 = tpu.matmul %236, %12, %cst_78 {dimension_numbers = #tpu.dot_dimension_numbers<[1], [0], [0], [1], [0, 0, 1, 1], [], []>} : vector<8x128xf32>, vector<128x128xf32>, vector<8x128xf32> -> vector<8x128xf32>
    %cst_79 = arith.constant dense<0.000000e+00> : vector<8x128xf32>
    %238 = tpu.matmul %210, %13, %cst_79 {dimension_numbers = #tpu.dot_dimension_numbers<[1], [0], [0], [1], [0, 0, 1, 1], [], []>} : vector<8x32xf32>, vector<32x128xf32>, vector<8x128xf32> -> vector<8x128xf32>
    %239 = arith.addf %237, %238 : vector<8x128xf32>
    %240 = arith.addf %239, %16 : vector<8x128xf32>
    %241 = vector.extract_strided_slice %240 {offsets = [0, 0], sizes = [8, 96], strides = [1, 1]} : vector<8x128xf32> to vector<8x96xf32>
    %cst_80 = arith.constant 5.000000e-01 : f32
    %242 = vector.broadcast %cst_80 : f32 to vector<8x96xf32>
    %243 = arith.mulf %242, %241 : vector<8x96xf32>
    %244 = math.tanh %243 : vector<8x96xf32>
    %cst_81 = arith.constant 5.000000e-01 : f32
    %245 = vector.broadcast %cst_81 : f32 to vector<8x96xf32>
    %246 = arith.mulf %245, %244 : vector<8x96xf32>
    %cst_82 = arith.constant 5.000000e-01 : f32
    %247 = vector.broadcast %cst_82 : f32 to vector<8x96xf32>
    %248 = arith.addf %246, %247 : vector<8x96xf32>
    %249 = vector.extract_strided_slice %240 {offsets = [0, 96], sizes = [8, 32], strides = [1, 1]} : vector<8x128xf32> to vector<8x32xf32>
    %250 = math.tanh %249 : vector<8x32xf32>
    %251 = vector.extract_strided_slice %248 {offsets = [0, 32], sizes = [8, 32], strides = [1, 1]} : vector<8x96xf32> to vector<8x32xf32>
    %252 = arith.mulf %251, %207 : vector<8x32xf32>
    %253 = vector.extract_strided_slice %248 {offsets = [0, 0], sizes = [8, 32], strides = [1, 1]} : vector<8x96xf32> to vector<8x32xf32>
    %254 = arith.mulf %253, %250 : vector<8x32xf32>
    %255 = arith.addf %252, %254 : vector<8x32xf32>
    %256 = vector.extract_strided_slice %248 {offsets = [0, 64], sizes = [8, 32], strides = [1, 1]} : vector<8x96xf32> to vector<8x32xf32>
    %257 = math.tanh %255 : vector<8x32xf32>
    %258 = arith.mulf %256, %257 : vector<8x32xf32>
    %259 = arith.index_cast %214 : i32 to index
    %c0_83 = arith.constant 0 : index
    %260 = vector.load %arg8[%259, %c0_83] : memref<64x32xf32, #tpu.memory_space<vmem>>, vector<8x32xf32>
    tpu.vector_store %arg8[%259, %c0_83], %258 {strides = array<i32>} : memref<64x32xf32, #tpu.memory_space<vmem>>, vector<8x32xf32>,
    %c5_i32 = arith.constant 5 : i32
    %c8_i32_84 = arith.constant 8 : i32
    %261 = arith.muli %c5_i32, %c8_i32_84 : i32
    %262 = tpu.assume_multiple %261, 8 : i32
    %263 = arith.index_cast %262 : i32 to index
    %c0_85 = arith.constant 0 : index
    %264 = vector.load %arg9[%263, %c0_85] : memref<64x512xf32, #tpu.memory_space<vmem>>, vector<8x512xf32>
    %cst_86 = arith.constant dense<0.000000e+00> : vector<8x512xf32>
    %265 = tpu.matmul %236, %11, %cst_86 {dimension_numbers = #tpu.dot_dimension_numbers<[1], [0], [0], [1], [0, 0, 1, 1], [], []>} : vector<8x128xf32>, vector<128x512xf32>, vector<8x512xf32> -> vector<8x512xf32>
    %266 = arith.addf %264, %265 : vector<8x512xf32>
    %267 = vector.extract_strided_slice %266 {offsets = [0, 0], sizes = [8, 384], strides = [1, 1]} : vector<8x512xf32> to vector<8x384xf32>
    %cst_87 = arith.constant 5.000000e-01 : f32
    %268 = vector.broadcast %cst_87 : f32 to vector<8x384xf32>
    %269 = arith.mulf %268, %267 : vector<8x384xf32>
    %270 = math.tanh %269 : vector<8x384xf32>
    %cst_88 = arith.constant 5.000000e-01 : f32
    %271 = vector.broadcast %cst_88 : f32 to vector<8x384xf32>
    %272 = arith.mulf %271, %270 : vector<8x384xf32>
    %cst_89 = arith.constant 5.000000e-01 : f32
    %273 = vector.broadcast %cst_89 : f32 to vector<8x384xf32>
    %274 = arith.addf %272, %273 : vector<8x384xf32>
    %275 = vector.extract_strided_slice %266 {offsets = [0, 384], sizes = [8, 128], strides = [1, 1]} : vector<8x512xf32> to vector<8x128xf32>
    %276 = math.tanh %275 : vector<8x128xf32>
    %277 = vector.extract_strided_slice %274 {offsets = [0, 128], sizes = [8, 128], strides = [1, 1]} : vector<8x384xf32> to vector<8x128xf32>
    %278 = arith.mulf %277, %233 : vector<8x128xf32>
    %279 = vector.extract_strided_slice %274 {offsets = [0, 0], sizes = [8, 128], strides = [1, 1]} : vector<8x384xf32> to vector<8x128xf32>
    %280 = arith.mulf %279, %276 : vector<8x128xf32>
    %281 = arith.addf %278, %280 : vector<8x128xf32>
    %282 = vector.extract_strided_slice %274 {offsets = [0, 256], sizes = [8, 128], strides = [1, 1]} : vector<8x384xf32> to vector<8x128xf32>
    %283 = math.tanh %281 : vector<8x128xf32>
    %284 = arith.mulf %282, %283 : vector<8x128xf32>
    %cst_90 = arith.constant dense<0.000000e+00> : vector<8x128xf32>
    %285 = tpu.matmul %284, %12, %cst_90 {dimension_numbers = #tpu.dot_dimension_numbers<[1], [0], [0], [1], [0, 0, 1, 1], [], []>} : vector<8x128xf32>, vector<128x128xf32>, vector<8x128xf32> -> vector<8x128xf32>
    %cst_91 = arith.constant dense<0.000000e+00> : vector<8x128xf32>
    %286 = tpu.matmul %258, %13, %cst_91 {dimension_numbers = #tpu.dot_dimension_numbers<[1], [0], [0], [1], [0, 0, 1, 1], [], []>} : vector<8x32xf32>, vector<32x128xf32>, vector<8x128xf32> -> vector<8x128xf32>
    %287 = arith.addf %285, %286 : vector<8x128xf32>
    %288 = arith.addf %287, %16 : vector<8x128xf32>
    %289 = vector.extract_strided_slice %288 {offsets = [0, 0], sizes = [8, 96], strides = [1, 1]} : vector<8x128xf32> to vector<8x96xf32>
    %cst_92 = arith.constant 5.000000e-01 : f32
    %290 = vector.broadcast %cst_92 : f32 to vector<8x96xf32>
    %291 = arith.mulf %290, %289 : vector<8x96xf32>
    %292 = math.tanh %291 : vector<8x96xf32>
    %cst_93 = arith.constant 5.000000e-01 : f32
    %293 = vector.broadcast %cst_93 : f32 to vector<8x96xf32>
    %294 = arith.mulf %293, %292 : vector<8x96xf32>
    %cst_94 = arith.constant 5.000000e-01 : f32
    %295 = vector.broadcast %cst_94 : f32 to vector<8x96xf32>
    %296 = arith.addf %294, %295 : vector<8x96xf32>
    %297 = vector.extract_strided_slice %288 {offsets = [0, 96], sizes = [8, 32], strides = [1, 1]} : vector<8x128xf32> to vector<8x32xf32>
    %298 = math.tanh %297 : vector<8x32xf32>
    %299 = vector.extract_strided_slice %296 {offsets = [0, 32], sizes = [8, 32], strides = [1, 1]} : vector<8x96xf32> to vector<8x32xf32>
    %300 = arith.mulf %299, %255 : vector<8x32xf32>
    %301 = vector.extract_strided_slice %296 {offsets = [0, 0], sizes = [8, 32], strides = [1, 1]} : vector<8x96xf32> to vector<8x32xf32>
    %302 = arith.mulf %301, %298 : vector<8x32xf32>
    %303 = arith.addf %300, %302 : vector<8x32xf32>
    %304 = vector.extract_strided_slice %296 {offsets = [0, 64], sizes = [8, 32], strides = [1, 1]} : vector<8x96xf32> to vector<8x32xf32>
    %305 = math.tanh %303 : vector<8x32xf32>
    %306 = arith.mulf %304, %305 : vector<8x32xf32>
    %307 = arith.index_cast %262 : i32 to index
    %c0_95 = arith.constant 0 : index
    %308 = vector.load %arg8[%307, %c0_95] : memref<64x32xf32, #tpu.memory_space<vmem>>, vector<8x32xf32>
    tpu.vector_store %arg8[%307, %c0_95], %306 {strides = array<i32>} : memref<64x32xf32, #tpu.memory_space<vmem>>, vector<8x32xf32>,
    %c6_i32 = arith.constant 6 : i32
    %c8_i32_96 = arith.constant 8 : i32
    %309 = arith.muli %c6_i32, %c8_i32_96 : i32
    %310 = tpu.assume_multiple %309, 8 : i32
    %311 = arith.index_cast %310 : i32 to index
    %c0_97 = arith.constant 0 : index
    %312 = vector.load %arg9[%311, %c0_97] : memref<64x512xf32, #tpu.memory_space<vmem>>, vector<8x512xf32>
    %cst_98 = arith.constant dense<0.000000e+00> : vector<8x512xf32>
    %313 = tpu.matmul %284, %11, %cst_98 {dimension_numbers = #tpu.dot_dimension_numbers<[1], [0], [0], [1], [0, 0, 1, 1], [], []>} : vector<8x128xf32>, vector<128x512xf32>, vector<8x512xf32> -> vector<8x512xf32>
    %314 = arith.addf %312, %313 : vector<8x512xf32>
    %315 = vector.extract_strided_slice %314 {offsets = [0, 0], sizes = [8, 384], strides = [1, 1]} : vector<8x512xf32> to vector<8x384xf32>
    %cst_99 = arith.constant 5.000000e-01 : f32
    %316 = vector.broadcast %cst_99 : f32 to vector<8x384xf32>
    %317 = arith.mulf %316, %315 : vector<8x384xf32>
    %318 = math.tanh %317 : vector<8x384xf32>
    %cst_100 = arith.constant 5.000000e-01 : f32
    %319 = vector.broadcast %cst_100 : f32 to vector<8x384xf32>
    %320 = arith.mulf %319, %318 : vector<8x384xf32>
    %cst_101 = arith.constant 5.000000e-01 : f32
    %321 = vector.broadcast %cst_101 : f32 to vector<8x384xf32>
    %322 = arith.addf %320, %321 : vector<8x384xf32>
    %323 = vector.extract_strided_slice %314 {offsets = [0, 384], sizes = [8, 128], strides = [1, 1]} : vector<8x512xf32> to vector<8x128xf32>
    %324 = math.tanh %323 : vector<8x128xf32>
    %325 = vector.extract_strided_slice %322 {offsets = [0, 128], sizes = [8, 128], strides = [1, 1]} : vector<8x384xf32> to vector<8x128xf32>
    %326 = arith.mulf %325, %281 : vector<8x128xf32>
    %327 = vector.extract_strided_slice %322 {offsets = [0, 0], sizes = [8, 128], strides = [1, 1]} : vector<8x384xf32> to vector<8x128xf32>
    %328 = arith.mulf %327, %324 : vector<8x128xf32>
    %329 = arith.addf %326, %328 : vector<8x128xf32>
    %330 = vector.extract_strided_slice %322 {offsets = [0, 256], sizes = [8, 128], strides = [1, 1]} : vector<8x384xf32> to vector<8x128xf32>
    %331 = math.tanh %329 : vector<8x128xf32>
    %332 = arith.mulf %330, %331 : vector<8x128xf32>
    %cst_102 = arith.constant dense<0.000000e+00> : vector<8x128xf32>
    %333 = tpu.matmul %332, %12, %cst_102 {dimension_numbers = #tpu.dot_dimension_numbers<[1], [0], [0], [1], [0, 0, 1, 1], [], []>} : vector<8x128xf32>, vector<128x128xf32>, vector<8x128xf32> -> vector<8x128xf32>
    %cst_103 = arith.constant dense<0.000000e+00> : vector<8x128xf32>
    %334 = tpu.matmul %306, %13, %cst_103 {dimension_numbers = #tpu.dot_dimension_numbers<[1], [0], [0], [1], [0, 0, 1, 1], [], []>} : vector<8x32xf32>, vector<32x128xf32>, vector<8x128xf32> -> vector<8x128xf32>
    %335 = arith.addf %333, %334 : vector<8x128xf32>
    %336 = arith.addf %335, %16 : vector<8x128xf32>
    %337 = vector.extract_strided_slice %336 {offsets = [0, 0], sizes = [8, 96], strides = [1, 1]} : vector<8x128xf32> to vector<8x96xf32>
    %cst_104 = arith.constant 5.000000e-01 : f32
    %338 = vector.broadcast %cst_104 : f32 to vector<8x96xf32>
    %339 = arith.mulf %338, %337 : vector<8x96xf32>
    %340 = math.tanh %339 : vector<8x96xf32>
    %cst_105 = arith.constant 5.000000e-01 : f32
    %341 = vector.broadcast %cst_105 : f32 to vector<8x96xf32>
    %342 = arith.mulf %341, %340 : vector<8x96xf32>
    %cst_106 = arith.constant 5.000000e-01 : f32
    %343 = vector.broadcast %cst_106 : f32 to vector<8x96xf32>
    %344 = arith.addf %342, %343 : vector<8x96xf32>
    %345 = vector.extract_strided_slice %336 {offsets = [0, 96], sizes = [8, 32], strides = [1, 1]} : vector<8x128xf32> to vector<8x32xf32>
    %346 = math.tanh %345 : vector<8x32xf32>
    %347 = vector.extract_strided_slice %344 {offsets = [0, 32], sizes = [8, 32], strides = [1, 1]} : vector<8x96xf32> to vector<8x32xf32>
    %348 = arith.mulf %347, %303 : vector<8x32xf32>
    %349 = vector.extract_strided_slice %344 {offsets = [0, 0], sizes = [8, 32], strides = [1, 1]} : vector<8x96xf32> to vector<8x32xf32>
    %350 = arith.mulf %349, %346 : vector<8x32xf32>
    %351 = arith.addf %348, %350 : vector<8x32xf32>
    %352 = vector.extract_strided_slice %344 {offsets = [0, 64], sizes = [8, 32], strides = [1, 1]} : vector<8x96xf32> to vector<8x32xf32>
    %353 = math.tanh %351 : vector<8x32xf32>
    %354 = arith.mulf %352, %353 : vector<8x32xf32>
    %355 = arith.index_cast %310 : i32 to index
    %c0_107 = arith.constant 0 : index
    %356 = vector.load %arg8[%355, %c0_107] : memref<64x32xf32, #tpu.memory_space<vmem>>, vector<8x32xf32>
    tpu.vector_store %arg8[%355, %c0_107], %354 {strides = array<i32>} : memref<64x32xf32, #tpu.memory_space<vmem>>, vector<8x32xf32>,
    %c7_i32 = arith.constant 7 : i32
    %c8_i32_108 = arith.constant 8 : i32
    %357 = arith.muli %c7_i32, %c8_i32_108 : i32
    %358 = tpu.assume_multiple %357, 8 : i32
    %359 = arith.index_cast %358 : i32 to index
    %c0_109 = arith.constant 0 : index
    %360 = vector.load %arg9[%359, %c0_109] : memref<64x512xf32, #tpu.memory_space<vmem>>, vector<8x512xf32>
    %cst_110 = arith.constant dense<0.000000e+00> : vector<8x512xf32>
    %361 = tpu.matmul %332, %11, %cst_110 {dimension_numbers = #tpu.dot_dimension_numbers<[1], [0], [0], [1], [0, 0, 1, 1], [], []>} : vector<8x128xf32>, vector<128x512xf32>, vector<8x512xf32> -> vector<8x512xf32>
    %362 = arith.addf %360, %361 : vector<8x512xf32>
    %363 = vector.extract_strided_slice %362 {offsets = [0, 0], sizes = [8, 384], strides = [1, 1]} : vector<8x512xf32> to vector<8x384xf32>
    %cst_111 = arith.constant 5.000000e-01 : f32
    %364 = vector.broadcast %cst_111 : f32 to vector<8x384xf32>
    %365 = arith.mulf %364, %363 : vector<8x384xf32>
    %366 = math.tanh %365 : vector<8x384xf32>
    %cst_112 = arith.constant 5.000000e-01 : f32
    %367 = vector.broadcast %cst_112 : f32 to vector<8x384xf32>
    %368 = arith.mulf %367, %366 : vector<8x384xf32>
    %cst_113 = arith.constant 5.000000e-01 : f32
    %369 = vector.broadcast %cst_113 : f32 to vector<8x384xf32>
    %370 = arith.addf %368, %369 : vector<8x384xf32>
    %371 = vector.extract_strided_slice %362 {offsets = [0, 384], sizes = [8, 128], strides = [1, 1]} : vector<8x512xf32> to vector<8x128xf32>
    %372 = math.tanh %371 : vector<8x128xf32>
    %373 = vector.extract_strided_slice %370 {offsets = [0, 128], sizes = [8, 128], strides = [1, 1]} : vector<8x384xf32> to vector<8x128xf32>
    %374 = arith.mulf %373, %329 : vector<8x128xf32>
    %375 = vector.extract_strided_slice %370 {offsets = [0, 0], sizes = [8, 128], strides = [1, 1]} : vector<8x384xf32> to vector<8x128xf32>
    %376 = arith.mulf %375, %372 : vector<8x128xf32>
    %377 = arith.addf %374, %376 : vector<8x128xf32>
    %378 = vector.extract_strided_slice %370 {offsets = [0, 256], sizes = [8, 128], strides = [1, 1]} : vector<8x384xf32> to vector<8x128xf32>
    %379 = math.tanh %377 : vector<8x128xf32>
    %380 = arith.mulf %378, %379 : vector<8x128xf32>
    %cst_114 = arith.constant dense<0.000000e+00> : vector<8x128xf32>
    %381 = tpu.matmul %380, %12, %cst_114 {dimension_numbers = #tpu.dot_dimension_numbers<[1], [0], [0], [1], [0, 0, 1, 1], [], []>} : vector<8x128xf32>, vector<128x128xf32>, vector<8x128xf32> -> vector<8x128xf32>
    %cst_115 = arith.constant dense<0.000000e+00> : vector<8x128xf32>
    %382 = tpu.matmul %354, %13, %cst_115 {dimension_numbers = #tpu.dot_dimension_numbers<[1], [0], [0], [1], [0, 0, 1, 1], [], []>} : vector<8x32xf32>, vector<32x128xf32>, vector<8x128xf32> -> vector<8x128xf32>
    %383 = arith.addf %381, %382 : vector<8x128xf32>
    %384 = arith.addf %383, %16 : vector<8x128xf32>
    %385 = vector.extract_strided_slice %384 {offsets = [0, 0], sizes = [8, 96], strides = [1, 1]} : vector<8x128xf32> to vector<8x96xf32>
    %cst_116 = arith.constant 5.000000e-01 : f32
    %386 = vector.broadcast %cst_116 : f32 to vector<8x96xf32>
    %387 = arith.mulf %386, %385 : vector<8x96xf32>
    %388 = math.tanh %387 : vector<8x96xf32>
    %cst_117 = arith.constant 5.000000e-01 : f32
    %389 = vector.broadcast %cst_117 : f32 to vector<8x96xf32>
    %390 = arith.mulf %389, %388 : vector<8x96xf32>
    %cst_118 = arith.constant 5.000000e-01 : f32
    %391 = vector.broadcast %cst_118 : f32 to vector<8x96xf32>
    %392 = arith.addf %390, %391 : vector<8x96xf32>
    %393 = vector.extract_strided_slice %384 {offsets = [0, 96], sizes = [8, 32], strides = [1, 1]} : vector<8x128xf32> to vector<8x32xf32>
    %394 = math.tanh %393 : vector<8x32xf32>
    %395 = vector.extract_strided_slice %392 {offsets = [0, 32], sizes = [8, 32], strides = [1, 1]} : vector<8x96xf32> to vector<8x32xf32>
    %396 = arith.mulf %395, %351 : vector<8x32xf32>
    %397 = vector.extract_strided_slice %392 {offsets = [0, 0], sizes = [8, 32], strides = [1, 1]} : vector<8x96xf32> to vector<8x32xf32>
    %398 = arith.mulf %397, %394 : vector<8x32xf32>
    %399 = arith.addf %396, %398 : vector<8x32xf32>
    %400 = vector.extract_strided_slice %392 {offsets = [0, 64], sizes = [8, 32], strides = [1, 1]} : vector<8x96xf32> to vector<8x32xf32>
    %401 = math.tanh %399 : vector<8x32xf32>
    %402 = arith.mulf %400, %401 : vector<8x32xf32>
    %403 = arith.index_cast %358 : i32 to index
    %c0_119 = arith.constant 0 : index
    %404 = vector.load %arg8[%403, %c0_119] : memref<64x32xf32, #tpu.memory_space<vmem>>, vector<8x32xf32>
    tpu.vector_store %arg8[%403, %c0_119], %402 {strides = array<i32>} : memref<64x32xf32, #tpu.memory_space<vmem>>, vector<8x32xf32>,
    %c8_i32_120 = arith.constant 8 : i32
    %c0_121 = arith.constant 0 : index
    %c0_122 = arith.constant 0 : index
    %405 = vector.load %arg10[%c0_121, %c0_122] : memref<8x128xf32, #tpu.memory_space<vmem>>, vector<8x128xf32>
    tpu.vector_store %arg10[%c0_121, %c0_122], %380 {strides = array<i32>} : memref<8x128xf32, #tpu.memory_space<vmem>>, vector<8x128xf32>,
    %c0_123 = arith.constant 0 : index
    %c0_124 = arith.constant 0 : index
    %406 = vector.load %arg11[%c0_123, %c0_124] : memref<8x128xf32, #tpu.memory_space<vmem>>, vector<8x128xf32>
    tpu.vector_store %arg11[%c0_123, %c0_124], %377 {strides = array<i32>} : memref<8x128xf32, #tpu.memory_space<vmem>>, vector<8x128xf32>,
    %c0_125 = arith.constant 0 : index
    %c0_126 = arith.constant 0 : index
    %407 = vector.load %arg12[%c0_125, %c0_126] : memref<8x32xf32, #tpu.memory_space<vmem>>, vector<8x32xf32>
    tpu.vector_store %arg12[%c0_125, %c0_126], %402 {strides = array<i32>} : memref<8x32xf32, #tpu.memory_space<vmem>>, vector<8x32xf32>,
    %c0_127 = arith.constant 0 : index
    %c0_128 = arith.constant 0 : index
    %408 = vector.load %arg13[%c0_127, %c0_128] : memref<8x32xf32, #tpu.memory_space<vmem>>, vector<8x32xf32>
    tpu.vector_store %arg13[%c0_127, %c0_128], %399 {strides = array<i32>} : memref<8x32xf32, #tpu.memory_space<vmem>>, vector<8x32xf32>,
    return
  }
  func.func @transform_0(%arg0: i32) -> (i32, i32) {
    %c0_i32 = arith.constant 0 : i32
    %c0_i32_0 = arith.constant 0 : i32
    return %arg0, %c0_i32 : i32, i32
  }
  func.func @transform_1(%arg0: i32) -> (i32, i32) {
    %c0_i32 = arith.constant 0 : i32
    %c0_i32_0 = arith.constant 0 : i32
    %c0_i32_1 = arith.constant 0 : i32
    return %c0_i32, %c0_i32_0 : i32, i32
  }
  func.func @transform_2(%arg0: i32) -> (i32, i32) {
    %c0_i32 = arith.constant 0 : i32
    %c0_i32_0 = arith.constant 0 : i32
    %c0_i32_1 = arith.constant 0 : i32
    return %c0_i32, %c0_i32_0 : i32, i32
  }
  func.func @transform_3(%arg0: i32) -> (i32, i32) {
    %c0_i32 = arith.constant 0 : i32
    %c0_i32_0 = arith.constant 0 : i32
    %c0_i32_1 = arith.constant 0 : i32
    return %c0_i32, %c0_i32_0 : i32, i32
  }
  func.func @transform_4(%arg0: i32) -> (i32, i32) {
    %c0_i32 = arith.constant 0 : i32
    %c0_i32_0 = arith.constant 0 : i32
    %c0_i32_1 = arith.constant 0 : i32
    return %c0_i32, %c0_i32_0 : i32, i32
  }
  func.func @transform_5(%arg0: i32) -> (i32, i32) {
    %c0_i32 = arith.constant 0 : i32
    %c0_i32_0 = arith.constant 0 : i32
    %c0_i32_1 = arith.constant 0 : i32
    return %c0_i32, %c0_i32_0 : i32, i32
  }
  func.func @transform_6(%arg0: i32) -> (i32, i32) {
    %c0_i32 = arith.constant 0 : i32
    %c0_i32_0 = arith.constant 0 : i32
    %c0_i32_1 = arith.constant 0 : i32
    return %c0_i32, %c0_i32_0 : i32, i32
  }
  func.func @transform_7(%arg0: i32) -> (i32, i32) {
    %c0_i32 = arith.constant 0 : i32
    %c0_i32_0 = arith.constant 0 : i32
    return %arg0, %c0_i32 : i32, i32
  }
}

</mosaic_0001>

<llo_original>
// kernel: mann_forward.1
$region0: #{mann_forward.1}
  #allocation0 [shape = 'u32[]', space=smem, size = 0x4, offset = 0x4, fixed_abs, tag = 'smem constant byte address 0x4 - core index']
  #allocation1 [shape = 'u32[144,128]{1,0:T(1,128)}', space=vmem, size = 0x12000, scoped, tag = 'internal scratch']
  #allocation2 [shape = 'f32[64,512]{1,0:T(8,128)}', space=vmem, size = 0x20000, scoped, tag = 'scratch operand']
  #allocation3 [shape = 'f32[8,128]{1,0:T(8,128)}', space=vmem, size = 0x1000, scoped, tag = 'scratch operand']
  #allocation4 [shape = 'f32[8,128]{1,0:T(8,128)}', space=vmem, size = 0x1000, scoped, tag = 'scratch operand']
  #allocation5 [shape = 'f32[8,32]{1,0:T(8,128)}', space=vmem, size = 0x1000, scoped, tag = 'scratch operand']
  #allocation6 [shape = 'f32[8,32]{1,0:T(8,128)}', space=vmem, size = 0x1000, scoped, tag = 'scratch operand']
  %s0 = inlined_call_operand.vmem [shape: bf16[64,128], index: 0, kind: input, shape index: {}]
  %s1 = inlined_call_operand.vmem [shape: bf16[128,512], index: 1, kind: input, shape index: {}]
  %s2 = inlined_call_operand.vmem [shape: f32[128,512], index: 2, kind: input, shape index: {}]
  %s3 = inlined_call_operand.vmem [shape: f32[1,512], index: 3, kind: input, shape index: {}]
  %s4 = inlined_call_operand.vmem [shape: f32[128,128], index: 4, kind: input, shape index: {}]
  %s5 = inlined_call_operand.vmem [shape: f32[32,128], index: 5, kind: input, shape index: {}]
  %s6 = inlined_call_operand.vmem [shape: f32[1,128], index: 6, kind: input, shape index: {}]
  %s7 = inlined_call_operand.vmem [shape: f32[64,32], index: 7, kind: output, shape index: {}]
  %s8 = sld [smem:[#allocation0]]
  $region42: #{mann_forward.1} parent=0
    _
  %s10 = ssub.s32 1, %s8
  %s11 = scalar_select 0, %s10, %s8
  // Predicated region
  $region2: #{mann_forward.1} parent=0 // pred_check
    _
  $region3: #{mann_forward.1} parent=0 // pred_check_branch
    %13 = sbr.rel (0) target = $region5
  $region4: #{mann_forward.1} parent=0 // pred_region
    _
  $region5: #{mann_forward.1} parent=0 // pred_fallthru
    _
  // Predicated region
  $region6: #{mann_forward.1} parent=0 // pred_check
    _
  $region7: #{mann_forward.1} parent=0 // pred_check_branch
    %15 = sbr.rel (0) target = $region9
  $region8: #{mann_forward.1} parent=0 // pred_region
    _
  $region9: #{mann_forward.1} parent=0 // pred_fallthru
    _
  // Predicated region
  $region10: #{mann_forward.1} parent=0 // pred_check
    _
  $region11: #{mann_forward.1} parent=0 // pred_check_branch
    %17 = sbr.rel (0) target = $region13
  $region12: #{mann_forward.1} parent=0 // pred_region
    _
  $region13: #{mann_forward.1} parent=0 // pred_fallthru
    _
  // Predicated region
  $region14: #{mann_forward.1} parent=0 // pred_check
    _
  $region15: #{mann_forward.1} parent=0 // pred_check_branch
    %19 = sbr.rel (0) target = $region17
  $region16: #{mann_forward.1} parent=0 // pred_region
    _
  $region17: #{mann_forward.1} parent=0 // pred_fallthru
    _
  // Predicated region
  $region18: #{mann_forward.1} parent=0 // pred_check
    _
  $region19: #{mann_forward.1} parent=0 // pred_check_branch
    %21 = sbr.rel (0) target = $region21
  $region20: #{mann_forward.1} parent=0 // pred_region
    _
  $region21: #{mann_forward.1} parent=0 // pred_fallthru
    _
  // Predicated region
  $region22: #{mann_forward.1} parent=0 // pred_check
    _
  $region23: #{mann_forward.1} parent=0 // pred_check_branch
    %23 = sbr.rel (0) target = $region25
  $region24: #{mann_forward.1} parent=0 // pred_region
    _
  $region25: #{mann_forward.1} parent=0 // pred_fallthru
    _
  // Predicated region
  $region26: #{mann_forward.1} parent=0 // pred_check
    _
  $region27: #{mann_forward.1} parent=0 // pred_check_branch
    %25 = sbr.rel (0) target = $region29
  $region28: #{mann_forward.1} parent=0 // pred_region
    _
  $region29: #{mann_forward.1} parent=0 // pred_fallthru
    _
  %p27 = scmp.eq.s32.totalorder 0, 0
  // Predicated region
  $region30: #{mann_forward.1} parent=0 // pred_check
    %p28 = pneg %p27
  $region31: #{mann_forward.1} parent=0 // pred_check_branch
    %30 = sbr.rel (%p28) target = $region33
  $region32: #{mann_forward.1} parent=0 // pred_region
    %31 = vst [vmem:[#allocation3] sm:$0xff] 0.0
    %32 = vst [vmem:[#allocation4] sm:$0xff] 0.0
    %vm33 = vcmask 261120
    %34 = vst.msk [vmem:[#allocation5] sm:$0xff] %vm33, 0.0
    %35 = vst.msk [vmem:[#allocation6] sm:$0xff] %vm33, 0.0
  $region33: #{mann_forward.1} parent=0 // pred_fallthru
    _
  %v36 = vld [vmem:[%s0] sm:$0xf]
  %v37 = vld [vmem:[%s0 + $0x4] sm:$0xf]
  %v38 = vld [vmem:[%s0 + $0x8] sm:$0xf]
  %v39 = vld [vmem:[%s0 + $0xc] sm:$0xf]
  %v40 = vld [vmem:[%s0 + $0x10] sm:$0xf]
  %v41 = vld [vmem:[%s0 + $0x14] sm:$0xf]
  %v42 = vld [vmem:[%s0 + $0x18] sm:$0xf]
  %v43 = vld [vmem:[%s0 + $0x1c] sm:$0xf]
  %v44 = vld [vmem:[%s1] sm:$0xff]
  %v45 = vld [vmem:[%s1 + $0x8] sm:$0xff]
  %v46 = vld [vmem:[%s1 + $0x10] sm:$0xff]
  %v47 = vld [vmem:[%s1 + $0x18] sm:$0xff]
  %v48 = vld [vmem:[%s1 + $0x20] sm:$0xff]
  %v49 = vld [vmem:[%s1 + $0x28] sm:$0xff]
  %v50 = vld [vmem:[%s1 + $0x30] sm:$0xff]
  %v51 = vld [vmem:[%s1 + $0x38] sm:$0xff]
  %v52 = vld [vmem:[%s1 + $0x40] sm:$0xff]
  %v53 = vld [vmem:[%s1 + $0x48] sm:$0xff]
  %v54 = vld [vmem:[%s1 + $0x50] sm:$0xff]
  %v55 = vld [vmem:[%s1 + $0x58] sm:$0xff]
  %v56 = vld [vmem:[%s1 + $0x60] sm:$0xff]
  %v57 = vld [vmem:[%s1 + $0x68] sm:$0xff]
  %v58 = vld [vmem:[%s1 + $0x70] sm:$0xff]
  %v59 = vld [vmem:[%s1 + $0x78] sm:$0xff]
  %v60 = vld [vmem:[%s1 + $0x80] sm:$0xff]
  %v61 = vld [vmem:[%s1 + $0x88] sm:$0xff]
  %v62 = vld [vmem:[%s1 + $0x90] sm:$0xff]
  %v63 = vld [vmem:[%s1 + $0x98] sm:$0xff]
  %v64 = vld [vmem:[%s1 + $0xa0] sm:$0xff]
  %v65 = vld [vmem:[%s1 + $0xa8] sm:$0xff]
  %v66 = vld [vmem:[%s1 + $0xb0] sm:$0xff]
  %v67 = vld [vmem:[%s1 + $0xb8] sm:$0xff]
  %v68 = vld [vmem:[%s1 + $0xc0] sm:$0xff]
  %v69 = vld [vmem:[%s1 + $0xc8] sm:$0xff]
  %v70 = vld [vmem:[%s1 + $0xd0] sm:$0xff]
  %v71 = vld [vmem:[%s1 + $0xd8] sm:$0xff]
  %v72 = vld [vmem:[%s1 + $0xe0] sm:$0xff]
  %v73 = vld [vmem:[%s1 + $0xe8] sm:$0xff]
  %v74 = vld [vmem:[%s1 + $0xf0] sm:$0xff]
  %v75 = vld [vmem:[%s1 + $0xf8] sm:$0xff]
  %v76 = vld [vmem:[%s3] sm:$0xf]
  %v78 = vlaneseq
  %v79 = vshrl.u32 %v78, 7
  %v80 = vsub.s32 0, %v79
  %v81 = vrot.slane %v76, %v80
  %v82 = vlaneseq
  %v83 = vshrl.u32 %v82, 7
  %v84 = vsub.s32 1, %v83
  %v85 = vrot.slane %v76, %v84
  %v86 = vlaneseq
  %v87 = vshrl.u32 %v86, 7
  %v88 = vsub.s32 2, %v87
  %v89 = vrot.slane %v76, %v88
  %v90 = vlaneseq
  %v91 = vshrl.u32 %v90, 7
  %v92 = vsub.s32 3, %v91
  %v93 = vrot.slane %v76, %v92
  %v106 = vunpack.c.l.b16 %v36
  %v107 = vunpack.c.l.b16 %v37
  %v108 = vunpack.c.l.b16 %v38
  %v109 = vunpack.c.l.b16 %v39
  %v110 = vunpack.c.l.b16 %v40
  %v111 = vunpack.c.l.b16 %v41
  %v112 = vunpack.c.l.b16 %v42
  %v113 = vunpack.c.l.b16 %v43
  %v114 = vpack.c.b16 %v107, %v106
  %v115 = vpack.c.b16 %v109, %v108
  %v116 = vpack.c.b16 %v111, %v110
  %v117 = vpack.c.b16 %v113, %v112
  %v154 = vunpack.c.l.b16 %v44
  %v155 = vunpack.c.h.b16 %v44
  %v156 = vunpack.c.l.b16 %v45
  %v157 = vunpack.c.h.b16 %v45
  %v158 = vunpack.c.l.b16 %v46
  %v159 = vunpack.c.h.b16 %v46
  %v160 = vunpack.c.l.b16 %v47
  %v161 = vunpack.c.h.b16 %v47
  %v162 = vunpack.c.l.b16 %v48
  %v163 = vunpack.c.h.b16 %v48
  %v164 = vunpack.c.l.b16 %v49
  %v165 = vunpack.c.h.b16 %v49
  %v166 = vunpack.c.l.b16 %v50
  %v167 = vunpack.c.h.b16 %v50
  %v168 = vunpack.c.l.b16 %v51
  %v169 = vunpack.c.h.b16 %v51
  %v170 = vunpack.c.l.b16 %v52
  %v171 = vunpack.c.h.b16 %v52
  %v172 = vunpack.c.l.b16 %v53
  %v173 = vunpack.c.h.b16 %v53
  %v174 = vunpack.c.l.b16 %v54
  %v175 = vunpack.c.h.b16 %v54
  %v176 = vunpack.c.l.b16 %v55
  %v177 = vunpack.c.h.b16 %v55
  %v178 = vunpack.c.l.b16 %v56
  %v179 = vunpack.c.h.b16 %v56
  %v180 = vunpack.c.l.b16 %v57
  %v181 = vunpack.c.h.b16 %v57
  %v182 = vunpack.c.l.b16 %v58
  %v183 = vunpack.c.h.b16 %v58
  %v184 = vunpack.c.l.b16 %v59
  %v185 = vunpack.c.h.b16 %v59
  %v186 = vunpack.c.l.b16 %v60
  %v187 = vunpack.c.h.b16 %v60
  %v188 = vunpack.c.l.b16 %v61
  %v189 = vunpack.c.h.b16 %v61
  %v190 = vunpack.c.l.b16 %v62
  %v191 = vunpack.c.h.b16 %v62
  %v192 = vunpack.c.l.b16 %v63
  %v193 = vunpack.c.h.b16 %v63
  %v194 = vunpack.c.l.b16 %v64
  %v195 = vunpack.c.h.b16 %v64
  %v196 = vunpack.c.l.b16 %v65
  %v197 = vunpack.c.h.b16 %v65
  %v198 = vunpack.c.l.b16 %v66
  %v199 = vunpack.c.h.b16 %v66
  %v200 = vunpack.c.l.b16 %v67
  %v201 = vunpack.c.h.b16 %v67
  %v202 = vunpack.c.l.b16 %v68
  %v203 = vunpack.c.h.b16 %v68
  %v204 = vunpack.c.l.b16 %v69
  %v205 = vunpack.c.h.b16 %v69
  %v206 = vunpack.c.l.b16 %v70
  %v207 = vunpack.c.h.b16 %v70
  %v208 = vunpack.c.l.b16 %v71
  %v209 = vunpack.c.h.b16 %v71
  %v210 = vunpack.c.l.b16 %v72
  %v211 = vunpack.c.h.b16 %v72
  %v212 = vunpack.c.l.b16 %v73
  %v213 = vunpack.c.h.b16 %v73
  %v214 = vunpack.c.l.b16 %v74
  %v215 = vunpack.c.h.b16 %v74
  %v216 = vunpack.c.l.b16 %v75
  %v217 = vunpack.c.h.b16 %v75
  %v218 = vpack.c.b16 %v158, %v154
  %v219 = vpack.c.b16 %v159, %v155
  %v220 = vpack.c.b16 %v160, %v156
  %v221 = vpack.c.b16 %v161, %v157
  %v222 = vpack.c.b16 %v166, %v162
  %v223 = vpack.c.b16 %v167, %v163
  %v224 = vpack.c.b16 %v168, %v164
  %v225 = vpack.c.b16 %v169, %v165
  %v226 = vpack.c.b16 %v174, %v170
  %v227 = vpack.c.b16 %v175, %v171
  %v228 = vpack.c.b16 %v176, %v172
  %v229 = vpack.c.b16 %v177, %v173
  %v230 = vpack.c.b16 %v182, %v178
  %v231 = vpack.c.b16 %v183, %v179
  %v232 = vpack.c.b16 %v184, %v180
  %v233 = vpack.c.b16 %v185, %v181
  %v234 = vpack.c.b16 %v190, %v186
  %v235 = vpack.c.b16 %v191, %v187
  %v236 = vpack.c.b16 %v192, %v188
  %v237 = vpack.c.b16 %v193, %v189
  %v238 = vpack.c.b16 %v198, %v194
  %v239 = vpack.c.b16 %v199, %v195
  %v240 = vpack.c.b16 %v200, %v196
  %v241 = vpack.c.b16 %v201, %v197
  %v242 = vpack.c.b16 %v206, %v202
  %v243 = vpack.c.b16 %v207, %v203
  %v244 = vpack.c.b16 %v208, %v204
  %v245 = vpack.c.b16 %v209, %v205
  %v246 = vpack.c.b16 %v214, %v210
  %v247 = vpack.c.b16 %v215, %v211
  %v248 = vpack.c.b16 %v216, %v212
  %v249 = vpack.c.b16 %v217, %v213
  %282 = vmatprep.subr.bf16.mxu0 %v219
  %283 = vmatpush1.bf16.msra.mxu0 %v218
  %284 = vmatprep.subr.bf16.mxu0 %v223
  %285 = vmatpush1.bf16.msra.mxu0 %v222
  %286 = vmatprep.subr.bf16.mxu0 %v227
  %287 = vmatpush1.bf16.msra.mxu0 %v226
  %288 = vmatprep.subr.bf16.mxu0 %v231
  %289 = vmatpush1.bf16.msra.mxu0 %v230
  %290 = vmatprep.subr.bf16.mxu0 %v235
  %291 = vmatpush1.bf16.msra.mxu0 %v234
  %292 = vmatprep.subr.bf16.mxu0 %v239
  %293 = vmatpush1.bf16.msra.mxu0 %v238
  %294 = vmatprep.subr.bf16.mxu0 %v243
  %295 = vmatpush1.bf16.msra.mxu0 %v242
  %296 = vmatprep.subr.bf16.mxu0 %v247
  %297 = vmatpush1.bf16.msra.mxu0 %v246
  %298 = vmatprep.subr.bf16.mxu0 0
  %299 = vmatpush1.bf16.msra.mxu0 0
  %300 = vmatprep.subr.bf16.mxu0 0
  %301 = vmatpush1.bf16.msra.mxu0 0
  %302 = vmatprep.subr.bf16.mxu0 0
  %303 = vmatpush1.bf16.msra.mxu0 0
  %304 = vmatprep.subr.bf16.mxu0 0
  %305 = vmatpush1.bf16.msra.mxu0 0
  %306 = vmatprep.subr.bf16.mxu0 0
  %307 = vmatpush1.bf16.msra.mxu0 0
  %308 = vmatprep.subr.bf16.mxu0 0
  %309 = vmatpush1.bf16.msra.mxu0 0
  %310 = vmatprep.subr.bf16.mxu0 0
  %311 = vmatpush1.bf16.msra.mxu0 0
  %312 = vmatprep.subr.bf16.mxu0 0
  %313 = vmatpush1.bf16.msra.mxu0 0
  %314 = vmatprep.mubr.bf16.mxu0 0
  %315 = vmatmul.mubr.bf16.gmra.mrb[0].mxu0 %v114
  %v316 = vpop.f32.mrb[0].mxu0
  %v317 = vadd.f32 %v81, %v316
  %v318 = vpop.f32.mrb[0].mxu0
  %v319 = vadd.f32 %v85, %v318
  %v320 = vpop.f32.mrb[0].mxu0
  %v321 = vadd.f32 %v81, %v320
  %v322 = vpop.f32.mrb[0].mxu0
  %v323 = vadd.f32 %v85, %v322
  %324 = vmatprep.mubr.bf16.mxu0 0
  %325 = vmatmul.mubr.bf16.gmra.mrb[0].mxu0 %v115
  %v326 = vpop.f32.mrb[0].mxu0
  %v327 = vadd.f32 %v81, %v326
  %v328 = vpop.f32.mrb[0].mxu0
  %v329 = vadd.f32 %v85, %v328
  %v330 = vpop.f32.mrb[0].mxu0
  %v331 = vadd.f32 %v81, %v330
  %v332 = vpop.f32.mrb[0].mxu0
  %v333 = vadd.f32 %v85, %v332
  %334 = vmatprep.mubr.bf16.mxu0 0
  %335 = vmatmul.mubr.bf16.gmra.mrb[0].mxu0 %v116
  %v336 = vpop.f32.mrb[0].mxu0
  %v337 = vadd.f32 %v81, %v336
  %v338 = vpop.f32.mrb[0].mxu0
  %v339 = vadd.f32 %v85, %v338
  %v340 = vpop.f32.mrb[0].mxu0
  %v341 = vadd.f32 %v81, %v340
  %v342 = vpop.f32.mrb[0].mxu0
  %v343 = vadd.f32 %v85, %v342
  %344 = vmatprep.mubr.bf16.mxu0 0
  %345 = vmatmul.mubr.bf16.gmra.mrb[0].mxu0 %v117
  %v346 = vpop.f32.mrb[0].mxu0
  %v347 = vadd.f32 %v81, %v346
  %v348 = vpop.f32.mrb[0].mxu0
  %v349 = vadd.f32 %v85, %v348
  %v350 = vpop.f32.mrb[0].mxu0
  %v351 = vadd.f32 %v81, %v350
  %v352 = vpop.f32.mrb[0].mxu0
  %v353 = vadd.f32 %v85, %v352
  %354 = vdwg.mxu0
  %355 = vmatprep.subr.bf16.mxu0 %v221
  %356 = vmatpush1.bf16.msra.mxu0 %v220
  %357 = vmatprep.subr.bf16.mxu0 %v225
  %358 = vmatpush1.bf16.msra.mxu0 %v224
  %359 = vmatprep.subr.bf16.mxu0 %v229
  %360 = vmatpush1.bf16.msra.mxu0 %v228
  %361 = vmatprep.subr.bf16.mxu0 %v233
  %362 = vmatpush1.bf16.msra.mxu0 %v232
  %363 = vmatprep.subr.bf16.mxu0 %v237
  %364 = vmatpush1.bf16.msra.mxu0 %v236
  %365 = vmatprep.subr.bf16.mxu0 %v241
  %366 = vmatpush1.bf16.msra.mxu0 %v240
  %367 = vmatprep.subr.bf16.mxu0 %v245
  %368 = vmatpush1.bf16.msra.mxu0 %v244
  %369 = vmatprep.subr.bf16.mxu0 %v249
  %370 = vmatpush1.bf16.msra.mxu0 %v248
  %371 = vmatprep.subr.bf16.mxu0 0
  %372 = vmatpush1.bf16.msra.mxu0 0
  %373 = vmatprep.subr.bf16.mxu0 0
  %374 = vmatpush1.bf16.msra.mxu0 0
  %375 = vmatprep.subr.bf16.mxu0 0
  %376 = vmatpush1.bf16.msra.mxu0 0
  %377 = vmatprep.subr.bf16.mxu0 0
  %378 = vmatpush1.bf16.msra.mxu0 0
  %379 = vmatprep.subr.bf16.mxu0 0
  %380 = vmatpush1.bf16.msra.mxu0 0
  %381 = vmatprep.subr.bf16.mxu0 0
  %382 = vmatpush1.bf16.msra.mxu0 0
  %383 = vmatprep.subr.bf16.mxu0 0
  %384 = vmatpush1.bf16.msra.mxu0 0
  %385 = vmatprep.subr.bf16.mxu0 0
  %386 = vmatpush1.bf16.msra.mxu0 0
  %387 = vmatprep.mubr.bf16.mxu0 0
  %388 = vmatmul.mubr.bf16.gmra.mrb[0].mxu0 %v114
  %v389 = vpop.f32.mrb[0].mxu0
  %v390 = vadd.f32 %v89, %v389
  %v391 = vpop.f32.mrb[0].mxu0
  %v392 = vadd.f32 %v93, %v391
  %v393 = vpop.f32.mrb[0].mxu0
  %v394 = vadd.f32 %v89, %v393
  %v395 = vpop.f32.mrb[0].mxu0
  %v396 = vadd.f32 %v93, %v395
  %397 = vmatprep.mubr.bf16.mxu0 0
  %398 = vmatmul.mubr.bf16.gmra.mrb[0].mxu0 %v115
  %v399 = vpop.f32.mrb[0].mxu0
  %v400 = vadd.f32 %v89, %v399
  %v401 = vpop.f32.mrb[0].mxu0
  %v402 = vadd.f32 %v93, %v401
  %v403 = vpop.f32.mrb[0].mxu0
  %v404 = vadd.f32 %v89, %v403
  %v405 = vpop.f32.mrb[0].mxu0
  %v406 = vadd.f32 %v93, %v405
  %407 = vmatprep.mubr.bf16.mxu0 0
  %408 = vmatmul.mubr.bf16.gmra.mrb[0].mxu0 %v116
  %v409 = vpop.f32.mrb[0].mxu0
  %v410 = vadd.f32 %v89, %v409
  %v411 = vpop.f32.mrb[0].mxu0
  %v412 = vadd.f32 %v93, %v411
  %v413 = vpop.f32.mrb[0].mxu0
  %v414 = vadd.f32 %v89, %v413
  %v415 = vpop.f32.mrb[0].mxu0
  %v416 = vadd.f32 %v93, %v415
  %417 = vmatprep.mubr.bf16.mxu0 0
  %418 = vmatmul.mubr.bf16.gmra.mrb[0].mxu0 %v117
  %v419 = vpop.f32.mrb[0].mxu0
  %v420 = vadd.f32 %v89, %v419
  %v421 = vpop.f32.mrb[0].mxu0
  %v422 = vadd.f32 %v93, %v421
  %v423 = vpop.f32.mrb[0].mxu0
  %v424 = vadd.f32 %v89, %v423
  %v425 = vpop.f32.mrb[0].mxu0
  %v426 = vadd.f32 %v93, %v425
  %427 = vdwg.mxu0
  %428 = vst [vmem:[#allocation2] sm:$0xff] %v317
  %429 = vst [vmem:[#allocation2 + $0x8] sm:$0xff] %v319
  %430 = vst [vmem:[#allocation2 + $0x10] sm:$0xff] %v390
  %431 = vst [vmem:[#allocation2 + $0x18] sm:$0xff] %v392
  %432 = vst [vmem:[#allocation2 + $0x20] sm:$0xff] %v321
  %433 = vst [vmem:[#allocation2 + $0x28] sm:$0xff] %v323
  %434 = vst [vmem:[#allocation2 + $0x30] sm:$0xff] %v394
  %435 = vst [vmem:[#allocation2 + $0x38] sm:$0xff] %v396
  %436 = vst [vmem:[#allocation2 + $0x40] sm:$0xff] %v327
  %437 = vst [vmem:[#allocation2 + $0x48] sm:$0xff] %v329
  %438 = vst [vmem:[#allocation2 + $0x50] sm:$0xff] %v400
  %439 = vst [vmem:[#allocation2 + $0x58] sm:$0xff] %v402
  %440 = vst [vmem:[#allocation2 + $0x60] sm:$0xff] %v331
  %441 = vst [vmem:[#allocation2 + $0x68] sm:$0xff] %v333
  %442 = vst [vmem:[#allocation2 + $0x70] sm:$0xff] %v404
  %443 = vst [vmem:[#allocation2 + $0x78] sm:$0xff] %v406
  %444 = vst [vmem:[#allocation2 + $0x80] sm:$0xff] %v337
  %445 = vst [vmem:[#allocation2 + $0x88] sm:$0xff] %v339
  %446 = vst [vmem:[#allocation2 + $0x90] sm:$0xff] %v410
  %447 = vst [vmem:[#allocation2 + $0x98] sm:$0xff] %v412
  %448 = vst [vmem:[#allocation2 + $0xa0] sm:$0xff] %v341
  %449 = vst [vmem:[#allocation2 + $0xa8] sm:$0xff] %v343
  %450 = vst [vmem:[#allocation2 + $0xb0] sm:$0xff] %v414
  %451 = vst [vmem:[#allocation2 + $0xb8] sm:$0xff] %v416
  %452 = vst [vmem:[#allocation2 + $0xc0] sm:$0xff] %v347
  %453 = vst [vmem:[#allocation2 + $0xc8] sm:$0xff] %v349
  %454 = vst [vmem:[#allocation2 + $0xd0] sm:$0xff] %v420
  %455 = vst [vmem:[#allocation2 + $0xd8] sm:$0xff] %v422
  %456 = vst [vmem:[#allocation2 + $0xe0] sm:$0xff] %v351
  %457 = vst [vmem:[#allocation2 + $0xe8] sm:$0xff] %v353
  %458 = vst [vmem:[#allocation2 + $0xf0] sm:$0xff] %v424
  %459 = vst [vmem:[#allocation2 + $0xf8] sm:$0xff] %v426
  %v460 = vld [vmem:[%s2] sm:$0xff]
  %v461 = vld [vmem:[%s2 + $0x8] sm:$0xff]
  %v462 = vld [vmem:[%s2 + $0x10] sm:$0xff]
  %v463 = vld [vmem:[%s2 + $0x18] sm:$0xff]
  %v464 = vld [vmem:[%s2 + $0x20] sm:$0xff]
  %v465 = vld [vmem:[%s2 + $0x28] sm:$0xff]
  %v466 = vld [vmem:[%s2 + $0x30] sm:$0xff]
  %v467 = vld [vmem:[%s2 + $0x38] sm:$0xff]
  %v468 = vld [vmem:[%s2 + $0x40] sm:$0xff]
  %v469 = vld [vmem:[%s2 + $0x48] sm:$0xff]
  %v470 = vld [vmem:[%s2 + $0x50] sm:$0xff]
  %v471 = vld [vmem:[%s2 + $0x58] sm:$0xff]
  %v472 = vld [vmem:[%s2 + $0x60] sm:$0xff]
  %v473 = vld [vmem:[%s2 + $0x68] sm:$0xff]
  %v474 = vld [vmem:[%s2 + $0x70] sm:$0xff]
  %v475 = vld [vmem:[%s2 + $0x78] sm:$0xff]
  %v476 = vld [vmem:[%s2 + $0x80] sm:$0xff]
  %v477 = vld [vmem:[%s2 + $0x88] sm:$0xff]
  %v478 = vld [vmem:[%s2 + $0x90] sm:$0xff]
  %v479 = vld [vmem:[%s2 + $0x98] sm:$0xff]
  %v480 = vld [vmem:[%s2 + $0xa0] sm:$0xff]
  %v481 = vld [vmem:[%s2 + $0xa8] sm:$0xff]
  %v482 = vld [vmem:[%s2 + $0xb0] sm:$0xff]
  %v483 = vld [vmem:[%s2 + $0xb8] sm:$0xff]
  %v484 = vld [vmem:[%s2 + $0xc0] sm:$0xff]
  %v485 = vld [vmem:[%s2 + $0xc8] sm:$0xff]
  %v486 = vld [vmem:[%s2 + $0xd0] sm:$0xff]
  %v487 = vld [vmem:[%s2 + $0xd8] sm:$0xff]
  %v488 = vld [vmem:[%s2 + $0xe0] sm:$0xff]
  %v489 = vld [vmem:[%s2 + $0xe8] sm:$0xff]
  %v490 = vld [vmem:[%s2 + $0xf0] sm:$0xff]
  %v491 = vld [vmem:[%s2 + $0xf8] sm:$0xff]
  %v492 = vld [vmem:[%s2 + $0x100] sm:$0xff]
  %v493 = vld [vmem:[%s2 + $0x108] sm:$0xff]
  %v494 = vld [vmem:[%s2 + $0x110] sm:$0xff]
  %v495 = vld [vmem:[%s2 + $0x118] sm:$0xff]
  %v496 = vld [vmem:[%s2 + $0x120] sm:$0xff]
  %v497 = vld [vmem:[%s2 + $0x128] sm:$0xff]
  %v498 = vld [vmem:[%s2 + $0x130] sm:$0xff]
  %v499 = vld [vmem:[%s2 + $0x138] sm:$0xff]
  %v500 = vld [vmem:[%s2 + $0x140] sm:$0xff]
  %v501 = vld [vmem:[%s2 + $0x148] sm:$0xff]
  %v502 = vld [vmem:[%s2 + $0x150] sm:$0xff]
  %v503 = vld [vmem:[%s2 + $0x158] sm:$0xff]
  %v504 = vld [vmem:[%s2 + $0x160] sm:$0xff]
  %v505 = vld [vmem:[%s2 + $0x168] sm:$0xff]
  %v506 = vld [vmem:[%s2 + $0x170] sm:$0xff]
  %v507 = vld [vmem:[%s2 + $0x178] sm:$0xff]
  %v508 = vld [vmem:[%s2 + $0x180] sm:$0xff]
  %v509 = vld [vmem:[%s2 + $0x188] sm:$0xff]
  %v510 = vld [vmem:[%s2 + $0x190] sm:$0xff]
  %v511 = vld [vmem:[%s2 + $0x198] sm:$0xff]
  %v512 = vld [vmem:[%s2 + $0x1a0] sm:$0xff]
  %v513 = vld [vmem:[%s2 + $0x1a8] sm:$0xff]
  %v514 = vld [vmem:[%s2 + $0x1b0] sm:$0xff]
  %v515 = vld [vmem:[%s2 + $0x1b8] sm:$0xff]
  %v516 = vld [vmem:[%s2 + $0x1c0] sm:$0xff]
  %v517 = vld [vmem:[%s2 + $0x1c8] sm:$0xff]
  %v518 = vld [vmem:[%s2 + $0x1d0] sm:$0xff]
  %v519 = vld [vmem:[%s2 + $0x1d8] sm:$0xff]
  %v520 = vld [vmem:[%s2 + $0x1e0] sm:$0xff]
  %v521 = vld [vmem:[%s2 + $0x1e8] sm:$0xff]
  %v522 = vld [vmem:[%s2 + $0x1f0] sm:$0xff]
  %v523 = vld [vmem:[%s2 + $0x1f8] sm:$0xff]
  %v524 = vld [vmem:[%s4] sm:$0xff]
  %v525 = vld [vmem:[%s4 + $0x8] sm:$0xff]
  %v526 = vld [vmem:[%s4 + $0x10] sm:$0xff]
  %v527 = vld [vmem:[%s4 + $0x18] sm:$0xff]
  %v528 = vld [vmem:[%s4 + $0x20] sm:$0xff]
  %v529 = vld [vmem:[%s4 + $0x28] sm:$0xff]
  %v530 = vld [vmem:[%s4 + $0x30] sm:$0xff]
  %v531 = vld [vmem:[%s4 + $0x38] sm:$0xff]
  %v532 = vld [vmem:[%s4 + $0x40] sm:$0xff]
  %v533 = vld [vmem:[%s4 + $0x48] sm:$0xff]
  %v534 = vld [vmem:[%s4 + $0x50] sm:$0xff]
  %v535 = vld [vmem:[%s4 + $0x58] sm:$0xff]
  %v536 = vld [vmem:[%s4 + $0x60] sm:$0xff]
  %v537 = vld [vmem:[%s4 + $0x68] sm:$0xff]
  %v538 = vld [vmem:[%s4 + $0x70] sm:$0xff]
  %v539 = vld [vmem:[%s4 + $0x78] sm:$0xff]
  %v540 = vld [vmem:[%s5] sm:$0xff]
  %v541 = vld [vmem:[%s5 + $0x8] sm:$0xff]
  %v542 = vld [vmem:[%s5 + $0x10] sm:$0xff]
  %v543 = vld [vmem:[%s5 + $0x18] sm:$0xff]
  %v544 = vld [vmem:[%s6] sm:$0x1]
  %v546 = vlaneseq
  %v547 = vshrl.u32 %v546, 7
  %v548 = vsub.s32 0, %v547
  %v549 = vrot.slane %v544, %v548
  %v551 = vld [vmem:[#allocation3] sm:$0xff]
  %v552 = vld [vmem:[#allocation4] sm:$0xff]
  %v553 = vld [vmem:[#allocation5] sm:$0xff]
  %v554 = vld [vmem:[#allocation6] sm:$0xff]
  %s555 = smul.u32 0, 4
  %s556 = smul.addr %s555, 8
  %s557 = scalar_lea.vmem [#allocation2], %s556
  %v558 = vld [vmem:[%s557] sm:$0xff]
  %v559 = vld [vmem:[%s557 + $0x8] sm:$0xff]
  %v560 = vld [vmem:[%s557 + $0x10] sm:$0xff]
  %v561 = vld [vmem:[%s557 + $0x18] sm:$0xff]
  %562 = vmatprep.subr.mxu0 %v461
  %563 = vmatpush1.msra.mxu0 %v460
  %564 = vmatprep.subr.mxu0 %v465
  %565 = vmatpush1.msra.mxu0 %v464
  %566 = vmatprep.subr.mxu0 %v469
  %567 = vmatpush1.msra.mxu0 %v468
  %568 = vmatprep.subr.mxu0 %v473
  %569 = vmatpush1.msra.mxu0 %v472
  %570 = vmatprep.subr.mxu0 %v477
  %571 = vmatpush1.msra.mxu0 %v476
  %572 = vmatprep.subr.mxu0 %v481
  %573 = vmatpush1.msra.mxu0 %v480
  %574 = vmatprep.subr.mxu0 %v485
  %575 = vmatpush1.msra.mxu0 %v484
  %576 = vmatprep.subr.mxu0 %v489
  %577 = vmatpush1.msra.mxu0 %v488
  %578 = vmatprep.subr.mxu0 %v493
  %579 = vmatpush1.msra.mxu0 %v492
  %580 = vmatprep.subr.mxu0 %v497
  %581 = vmatpush1.msra.mxu0 %v496
  %582 = vmatprep.subr.mxu0 %v501
  %583 = vmatpush1.msra.mxu0 %v500
  %584 = vmatprep.subr.mxu0 %v505
  %585 = vmatpush1.msra.mxu0 %v504
  %586 = vmatprep.subr.mxu0 %v509
  %587 = vmatpush1.msra.mxu0 %v508
  %588 = vmatprep.subr.mxu0 %v513
  %589 = vmatpush1.msra.mxu0 %v512
  %590 = vmatprep.subr.mxu0 %v517
  %591 = vmatpush1.msra.mxu0 %v516
  %592 = vmatprep.subr.mxu0 %v521
  %593 = vmatpush1.msra.mxu0 %v520
  %594 = vmatprep.subr.mxu0 0.0
  %595 = vmatpush1.msra.mxu0 0.0
  %596 = vmatprep.subr.mxu0 0.0
  %597 = vmatpush1.msra.mxu0 0.0
  %598 = vmatprep.subr.mxu0 0.0
  %599 = vmatpush1.msra.mxu0 0.0
  %600 = vmatprep.subr.mxu0 0.0
  %601 = vmatpush1.msra.mxu0 0.0
  %602 = vmatprep.subr.mxu0 0.0
  %603 = vmatpush1.msra.mxu0 0.0
  %604 = vmatprep.subr.mxu0 0.0
  %605 = vmatpush1.msra.mxu0 0.0
  %606 = vmatprep.subr.mxu0 0.0
  %607 = vmatpush1.msra.mxu0 0.0
  %608 = vmatprep.subr.mxu0 0.0
  %609 = vmatpush1.msra.mxu0 0.0
  %610 = vmatprep.subr.mxu0 0.0
  %611 = vmatpush1.msra.mxu0 0.0
  %612 = vmatprep.subr.mxu0 0.0
  %613 = vmatpush1.msra.mxu0 0.0
  %614 = vmatprep.subr.mxu0 0.0
  %615 = vmatpush1.msra.mxu0 0.0
  %616 = vmatprep.subr.mxu0 0.0
  %617 = vmatpush1.msra.mxu0 0.0
  %618 = vmatprep.subr.mxu0 0.0
  %619 = vmatpush1.msra.mxu0 0.0
  %620 = vmatprep.subr.mxu0 0.0
  %621 = vmatpush1.msra.mxu0 0.0
  %622 = vmatprep.subr.mxu0 0.0
  %623 = vmatpush1.msra.mxu0 0.0
  %624 = vmatprep.subr.mxu0 0.0
  %625 = vmatpush1.msra.mxu0 0.0
  %626 = vmatprep.mubr.f32.mxu0 0.0
  %627 = vmatmul.mubr.f32.gmra.mrb[0].mxu0 %v551
  %v628 = vpop.f32.mrb[0].mxu0
  %v629 = vadd.f32 0.0, %v628
  %v630 = vpop.f32.mrb[0].mxu0
  %v631 = vadd.f32 0.0, %v630
  %632 = vdwg.mxu0
  %633 = vmatprep.subr.mxu0 %v463
  %634 = vmatpush1.msra.mxu0 %v462
  %635 = vmatprep.subr.mxu0 %v467
  %636 = vmatpush1.msra.mxu0 %v466
  %637 = vmatprep.subr.mxu0 %v471
  %638 = vmatpush1.msra.mxu0 %v470
  %639 = vmatprep.subr.mxu0 %v475
  %640 = vmatpush1.msra.mxu0 %v474
  %641 = vmatprep.subr.mxu0 %v479
  %642 = vmatpush1.msra.mxu0 %v478
  %643 = vmatprep.subr.mxu0 %v483
  %644 = vmatpush1.msra.mxu0 %v482
  %645 = vmatprep.subr.mxu0 %v487
  %646 = vmatpush1.msra.mxu0 %v486
  %647 = vmatprep.subr.mxu0 %v491
  %648 = vmatpush1.msra.mxu0 %v490
  %649 = vmatprep.subr.mxu0 %v495
  %650 = vmatpush1.msra.mxu0 %v494
  %651 = vmatprep.subr.mxu0 %v499
  %652 = vmatpush1.msra.mxu0 %v498
  %653 = vmatprep.subr.mxu0 %v503
  %654 = vmatpush1.msra.mxu0 %v502
  %655 = vmatprep.subr.mxu0 %v507
  %656 = vmatpush1.msra.mxu0 %v506
  %657 = vmatprep.subr.mxu0 %v511
  %658 = vmatpush1.msra.mxu0 %v510
  %659 = vmatprep.subr.mxu0 %v515
  %660 = vmatpush1.msra.mxu0 %v514
  %661 = vmatprep.subr.mxu0 %v519
  %662 = vmatpush1.msra.mxu0 %v518
  %663 = vmatprep.subr.mxu0 %v523
  %664 = vmatpush1.msra.mxu0 %v522
  %665 = vmatprep.subr.mxu0 0.0
  %666 = vmatpush1.msra.mxu0 0.0
  %667 = vmatprep.subr.mxu0 0.0
  %668 = vmatpush1.msra.mxu0 0.0
  %669 = vmatprep.subr.mxu0 0.0
  %670 = vmatpush1.msra.mxu0 0.0
  %671 = vmatprep.subr.mxu0 0.0
  %672 = vmatpush1.msra.mxu0 0.0
  %673 = vmatprep.subr.mxu0 0.0
  %674 = vmatpush1.msra.mxu0 0.0
  %675 = vmatprep.subr.mxu0 0.0
  %676 = vmatpush1.msra.mxu0 0.0
  %677 = vmatprep.subr.mxu0 0.0
  %678 = vmatpush1.msra.mxu0 0.0
  %679 = vmatprep.subr.mxu0 0.0
  %680 = vmatpush1.msra.mxu0 0.0
  %681 = vmatprep.subr.mxu0 0.0
  %682 = vmatpush1.msra.mxu0 0.0
  %683 = vmatprep.subr.mxu0 0.0
  %684 = vmatpush1.msra.mxu0 0.0
  %685 = vmatprep.subr.mxu0 0.0
  %686 = vmatpush1.msra.mxu0 0.0
  %687 = vmatprep.subr.mxu0 0.0
  %688 = vmatpush1.msra.mxu0 0.0
  %689 = vmatprep.subr.mxu0 0.0
  %690 = vmatpush1.msra.mxu0 0.0
  %691 = vmatprep.subr.mxu0 0.0
  %692 = vmatpush1.msra.mxu0 0.0
  %693 = vmatprep.subr.mxu0 0.0
  %694 = vmatpush1.msra.mxu0 0.0
  %695 = vmatprep.subr.mxu0 0.0
  %696 = vmatpush1.msra.mxu0 0.0
  %697 = vmatprep.mubr.f32.mxu0 0.0
  %698 = vmatmul.mubr.f32.gmra.mrb[0].mxu0 %v551
  %v699 = vpop.f32.mrb[0].mxu0
  %v700 = vadd.f32 0.0, %v699
  %v701 = vpop.f32.mrb[0].mxu0
  %v702 = vadd.f32 0.0, %v701
  %703 = vdwg.mxu0
  %v704 = vadd.f32 %v558, %v629
  %v705 = vadd.f32 %v559, %v631
  %v706 = vadd.f32 %v560, %v700
  %v707 = vadd.f32 %v561, %v702
  %v708 = vmul.f32 %v704, 0.5
  %v709 = vmul.f32 %v705, 0.5
  %v710 = vmul.f32 %v706, 0.5
  %v711 = vtanh.pop %v708
  %v712 = vtanh.pop %v709
  %v713 = vtanh.pop %v710
  %v714 = vmul.f32 %v711, 0.5
  %v715 = vmul.f32 %v712, 0.5
  %v716 = vmul.f32 %v713, 0.5
  %v717 = vadd.f32 %v714, 0.5
  %v718 = vadd.f32 %v715, 0.5
  %v719 = vadd.f32 %v716, 0.5
  %v720 = vtanh.pop %v707
  %v721 = vmul.f32 %v718, %v552
  %v722 = vmul.f32 %v717, %v720
  %v723 = vadd.f32 %v721, %v722
  %v724 = vtanh.pop %v723
  %v725 = vmul.f32 %v719, %v724
  %vm726 = vcmask 261120
  %v728 = vsel %vm726, %v553, 0
  %730 = vmatprep.subr.mxu0 0.0
  %731 = vmatpush1.msra.mxu0 %v540
  %732 = vmatprep.subr.mxu0 0.0
  %733 = vmatpush1.msra.mxu0 %v541
  %734 = vmatprep.subr.mxu0 0.0
  %735 = vmatpush1.msra.mxu0 %v542
  %736 = vmatprep.subr.mxu0 0.0
  %737 = vmatpush1.msra.mxu0 %v543
  %738 = vmatprep.subr.mxu0 0.0
  %739 = vmatpush1.msra.mxu0 0.0
  %740 = vmatprep.subr.mxu0 0.0
  %741 = vmatpush1.msra.mxu0 0.0
  %742 = vmatprep.subr.mxu0 0.0
  %743 = vmatpush1.msra.mxu0 0.0
  %744 = vmatprep.subr.mxu0 0.0
  %745 = vmatpush1.msra.mxu0 0.0
  %746 = vmatprep.subr.mxu0 0.0
  %747 = vmatpush1.msra.mxu0 0.0
  %748 = vmatprep.subr.mxu0 0.0
  %749 = vmatpush1.msra.mxu0 0.0
  %750 = vmatprep.subr.mxu0 0.0
  %751 = vmatpush1.msra.mxu0 0.0
  %752 = vmatprep.subr.mxu0 0.0
  %753 = vmatpush1.msra.mxu0 0.0
  %754 = vmatprep.subr.mxu0 0.0
  %755 = vmatpush1.msra.mxu0 0.0
  %756 = vmatprep.subr.mxu0 0.0
  %757 = vmatpush1.msra.mxu0 0.0
  %758 = vmatprep.subr.mxu0 0.0
  %759 = vmatpush1.msra.mxu0 0.0
  %760 = vmatprep.subr.mxu0 0.0
  %761 = vmatpush1.msra.mxu0 0.0
  %762 = vmatprep.subr.mxu0 0.0
  %763 = vmatpush1.msra.mxu0 0.0
  %764 = vmatprep.subr.mxu0 0.0
  %765 = vmatpush1.msra.mxu0 0.0
  %766 = vmatprep.subr.mxu0 0.0
  %767 = vmatpush1.msra.mxu0 0.0
  %768 = vmatprep.subr.mxu0 0.0
  %769 = vmatpush1.msra.mxu0 0.0
  %770 = vmatprep.subr.mxu0 0.0
  %771 = vmatpush1.msra.mxu0 0.0
  %772 = vmatprep.subr.mxu0 0.0
  %773 = vmatpush1.msra.mxu0 0.0
  %774 = vmatprep.subr.mxu0 0.0
  %775 = vmatpush1.msra.mxu0 0.0
  %776 = vmatprep.subr.mxu0 0.0
  %777 = vmatpush1.msra.mxu0 0.0
  %778 = vmatprep.subr.mxu0 0.0
  %779 = vmatpush1.msra.mxu0 0.0
  %780 = vmatprep.subr.mxu0 0.0
  %781 = vmatpush1.msra.mxu0 0.0
  %782 = vmatprep.subr.mxu0 0.0
  %783 = vmatpush1.msra.mxu0 0.0
  %784 = vmatprep.subr.mxu0 0.0
  %785 = vmatpush1.msra.mxu0 0.0
  %786 = vmatprep.subr.mxu0 0.0
  %787 = vmatpush1.msra.mxu0 0.0
  %788 = vmatprep.subr.mxu0 0.0
  %789 = vmatpush1.msra.mxu0 0.0
  %790 = vmatprep.subr.mxu0 0.0
  %791 = vmatpush1.msra.mxu0 0.0
  %792 = vmatprep.subr.mxu0 0.0
  %793 = vmatpush1.msra.mxu0 0.0
  %794 = vmatprep.mubr.f32.mxu0 0.0
  %795 = vmatmul.mubr.f32.gmra.mrb[0].mxu0 %v728
  %v796 = vpop.f32.mrb[0].mxu0
  %v797 = vadd.f32 0.0, %v796
  %v798 = vpop.f32.mrb[0].mxu0
  %799 = vdwg.mxu0
  %800 = vmatprep.subr.mxu0 0.0
  %801 = vmatpush1.msra.mxu0 %v524
  %802 = vmatprep.subr.mxu0 0.0
  %803 = vmatpush1.msra.mxu0 %v525
  %804 = vmatprep.subr.mxu0 0.0
  %805 = vmatpush1.msra.mxu0 %v526
  %806 = vmatprep.subr.mxu0 0.0
  %807 = vmatpush1.msra.mxu0 %v527
  %808 = vmatprep.subr.mxu0 0.0
  %809 = vmatpush1.msra.mxu0 %v528
  %810 = vmatprep.subr.mxu0 0.0
  %811 = vmatpush1.msra.mxu0 %v529
  %812 = vmatprep.subr.mxu0 0.0
  %813 = vmatpush1.msra.mxu0 %v530
  %814 = vmatprep.subr.mxu0 0.0
  %815 = vmatpush1.msra.mxu0 %v531
  %816 = vmatprep.subr.mxu0 0.0
  %817 = vmatpush1.msra.mxu0 %v532
  %818 = vmatprep.subr.mxu0 0.0
  %819 = vmatpush1.msra.mxu0 %v533
  %820 = vmatprep.subr.mxu0 0.0
  %821 = vmatpush1.msra.mxu0 %v534
  %822 = vmatprep.subr.mxu0 0.0
  %823 = vmatpush1.msra.mxu0 %v535
  %824 = vmatprep.subr.mxu0 0.0
  %825 = vmatpush1.msra.mxu0 %v536
  %826 = vmatprep.subr.mxu0 0.0
  %827 = vmatpush1.msra.mxu0 %v537
  %828 = vmatprep.subr.mxu0 0.0
  %829 = vmatpush1.msra.mxu0 %v538
  %830 = vmatprep.subr.mxu0 0.0
  %831 = vmatpush1.msra.mxu0 %v539
  %832 = vmatprep.subr.mxu0 0.0
  %833 = vmatpush1.msra.mxu0 0.0
  %834 = vmatprep.subr.mxu0 0.0
  %835 = vmatpush1.msra.mxu0 0.0
  %836 = vmatprep.subr.mxu0 0.0
  %837 = vmatpush1.msra.mxu0 0.0
  %838 = vmatprep.subr.mxu0 0.0
  %839 = vmatpush1.msra.mxu0 0.0
  %840 = vmatprep.subr.mxu0 0.0
  %841 = vmatpush1.msra.mxu0 0.0
  %842 = vmatprep.subr.mxu0 0.0
  %843 = vmatpush1.msra.mxu0 0.0
  %844 = vmatprep.subr.mxu0 0.0
  %845 = vmatpush1.msra.mxu0 0.0
  %846 = vmatprep.subr.mxu0 0.0
  %847 = vmatpush1.msra.mxu0 0.0
  %848 = vmatprep.subr.mxu0 0.0
  %849 = vmatpush1.msra.mxu0 0.0
  %850 = vmatprep.subr.mxu0 0.0
  %851 = vmatpush1.msra.mxu0 0.0
  %852 = vmatprep.subr.mxu0 0.0
  %853 = vmatpush1.msra.mxu0 0.0
  %854 = vmatprep.subr.mxu0 0.0
  %855 = vmatpush1.msra.mxu0 0.0
  %856 = vmatprep.subr.mxu0 0.0
  %857 = vmatpush1.msra.mxu0 0.0
  %858 = vmatprep.subr.mxu0 0.0
  %859 = vmatpush1.msra.mxu0 0.0
  %860 = vmatprep.subr.mxu0 0.0
  %861 = vmatpush1.msra.mxu0 0.0
  %862 = vmatprep.subr.mxu0 0.0
  %863 = vmatpush1.msra.mxu0 0.0
  %864 = vmatprep.mubr.f32.mxu0 0.0
  %865 = vmatmul.mubr.f32.gmra.mrb[0].mxu0 %v725
  %v866 = vpop.f32.mrb[0].mxu0
  %v867 = vadd.f32 %v797, %v866
  %v868 = vpop.f32.mrb[0].mxu0
  %869 = vdwg.mxu0
  %v870 = vadd.f32 %v867, %v549
  %v871 = vmul.f32 %v870, 0.5
  %v872 = vtanh.pop %v871
  %v873 = vmul.f32 %v872, 0.5
  %v874 = vadd.f32 %v873, 0.5
  %v875 = vtanh.pop %v870
  %877 = vrot.lane.b32.xlu0 %v554, 32
  %v878 = vpop.permute.xlu0 %877
  %v880 = vmul.f32 %v874, %v878
  %882 = vrot.lane.b32.xlu0 %v875, 32
  %v883 = vpop.permute.xlu0 %882
  %v885 = vmul.f32 %v874, %v883
  %887 = vrot.lane.b32.xlu0 %v885, 32
  %v888 = vpop.permute.xlu0 %887
  %v890 = vadd.f32 %v880, %v888
  %v891 = vtanh.pop %v890
  %893 = vrot.lane.b32.xlu0 %v891, 32
  %v894 = vpop.permute.xlu0 %893
  %v896 = vmul.f32 %v874, %v894
  %898 = vrot.lane.b32.xlu0 %v896, 64
  %v899 = vpop.permute.xlu0 %898
  %901 = vst.msk [vmem:[%s7] sm:$0xff] %vm726, %v899
  %s902 = smul.u32 1, 4
  %s903 = smul.addr %s902, 8
  %s904 = scalar_lea.vmem [#allocation2], %s903
  %v905 = vld [vmem:[%s904] sm:$0xff]
  %v906 = vld [vmem:[%s904 + $0x8] sm:$0xff]
  %v907 = vld [vmem:[%s904 + $0x10] sm:$0xff]
  %v908 = vld [vmem:[%s904 + $0x18] sm:$0xff]
  %909 = vmatprep.subr.mxu0 %v461
  %910 = vmatpush1.msra.mxu0 %v460
  %911 = vmatprep.subr.mxu0 %v465
  %912 = vmatpush1.msra.mxu0 %v464
  %913 = vmatprep.subr.mxu0 %v469
  %914 = vmatpush1.msra.mxu0 %v468
  %915 = vmatprep.subr.mxu0 %v473
  %916 = vmatpush1.msra.mxu0 %v472
  %917 = vmatprep.subr.mxu0 %v477
  %918 = vmatpush1.msra.mxu0 %v476
  %919 = vmatprep.subr.mxu0 %v481
  %920 = vmatpush1.msra.mxu0 %v480
  %921 = vmatprep.subr.mxu0 %v485
  %922 = vmatpush1.msra.mxu0 %v484
  %923 = vmatprep.subr.mxu0 %v489
  %924 = vmatpush1.msra.mxu0 %v488
  %925 = vmatprep.subr.mxu0 %v493
  %926 = vmatpush1.msra.mxu0 %v492
  %927 = vmatprep.subr.mxu0 %v497
  %928 = vmatpush1.msra.mxu0 %v496
  %929 = vmatprep.subr.mxu0 %v501
  %930 = vmatpush1.msra.mxu0 %v500
  %931 = vmatprep.subr.mxu0 %v505
  %932 = vmatpush1.msra.mxu0 %v504
  %933 = vmatprep.subr.mxu0 %v509
  %934 = vmatpush1.msra.mxu0 %v508
  %935 = vmatprep.subr.mxu0 %v513
  %936 = vmatpush1.msra.mxu0 %v512
  %937 = vmatprep.subr.mxu0 %v517
  %938 = vmatpush1.msra.mxu0 %v516
  %939 = vmatprep.subr.mxu0 %v521
  %940 = vmatpush1.msra.mxu0 %v520
  %941 = vmatprep.subr.mxu0 0.0
  %942 = vmatpush1.msra.mxu0 0.0
  %943 = vmatprep.subr.mxu0 0.0
  %944 = vmatpush1.msra.mxu0 0.0
  %945 = vmatprep.subr.mxu0 0.0
  %946 = vmatpush1.msra.mxu0 0.0
  %947 = vmatprep.subr.mxu0 0.0
  %948 = vmatpush1.msra.mxu0 0.0
  %949 = vmatprep.subr.mxu0 0.0
  %950 = vmatpush1.msra.mxu0 0.0
  %951 = vmatprep.subr.mxu0 0.0
  %952 = vmatpush1.msra.mxu0 0.0
  %953 = vmatprep.subr.mxu0 0.0
  %954 = vmatpush1.msra.mxu0 0.0
  %955 = vmatprep.subr.mxu0 0.0
  %956 = vmatpush1.msra.mxu0 0.0
  %957 = vmatprep.subr.mxu0 0.0
  %958 = vmatpush1.msra.mxu0 0.0
  %959 = vmatprep.subr.mxu0 0.0
  %960 = vmatpush1.msra.mxu0 0.0
  %961 = vmatprep.subr.mxu0 0.0
  %962 = vmatpush1.msra.mxu0 0.0
  %963 = vmatprep.subr.mxu0 0.0
  %964 = vmatpush1.msra.mxu0 0.0
  %965 = vmatprep.subr.mxu0 0.0
  %966 = vmatpush1.msra.mxu0 0.0
  %967 = vmatprep.subr.mxu0 0.0
  %968 = vmatpush1.msra.mxu0 0.0
  %969 = vmatprep.subr.mxu0 0.0
  %970 = vmatpush1.msra.mxu0 0.0
  %971 = vmatprep.subr.mxu0 0.0
  %972 = vmatpush1.msra.mxu0 0.0
  %973 = vmatprep.mubr.f32.mxu0 0.0
  %974 = vmatmul.mubr.f32.gmra.mrb[0].mxu0 %v725
  %v975 = vpop.f32.mrb[0].mxu0
  %v976 = vadd.f32 0.0, %v975
  %v977 = vpop.f32.mrb[0].mxu0
  %v978 = vadd.f32 0.0, %v977
  %979 = vdwg.mxu0
  %980 = vmatprep.subr.mxu0 %v463
  %981 = vmatpush1.msra.mxu0 %v462
  %982 = vmatprep.subr.mxu0 %v467
  %983 = vmatpush1.msra.mxu0 %v466
  %984 = vmatprep.subr.mxu0 %v471
  %985 = vmatpush1.msra.mxu0 %v470
  %986 = vmatprep.subr.mxu0 %v475
  %987 = vmatpush1.msra.mxu0 %v474
  %988 = vmatprep.subr.mxu0 %v479
  %989 = vmatpush1.msra.mxu0 %v478
  %990 = vmatprep.subr.mxu0 %v483
  %991 = vmatpush1.msra.mxu0 %v482
  %992 = vmatprep.subr.mxu0 %v487
  %993 = vmatpush1.msra.mxu0 %v486
  %994 = vmatprep.subr.mxu0 %v491
  %995 = vmatpush1.msra.mxu0 %v490
  %996 = vmatprep.subr.mxu0 %v495
  %997 = vmatpush1.msra.mxu0 %v494
  %998 = vmatprep.subr.mxu0 %v499
  %999 = vmatpush1.msra.mxu0 %v498
  %1000 = vmatprep.subr.mxu0 %v503
  %1001 = vmatpush1.msra.mxu0 %v502
  %1002 = vmatprep.subr.mxu0 %v507
  %1003 = vmatpush1.msra.mxu0 %v506
  %1004 = vmatprep.subr.mxu0 %v511
  %1005 = vmatpush1.msra.mxu0 %v510
  %1006 = vmatprep.subr.mxu0 %v515
  %1007 = vmatpush1.msra.mxu0 %v514
  %1008 = vmatprep.subr.mxu0 %v519
  %1009 = vmatpush1.msra.mxu0 %v518
  %1010 = vmatprep.subr.mxu0 %v523
  %1011 = vmatpush1.msra.mxu0 %v522
  %1012 = vmatprep.subr.mxu0 0.0
  %1013 = vmatpush1.msra.mxu0 0.0
  %1014 = vmatprep.subr.mxu0 0.0
  %1015 = vmatpush1.msra.mxu0 0.0
  %1016 = vmatprep.subr.mxu0 0.0
  %1017 = vmatpush1.msra.mxu0 0.0
  %1018 = vmatprep.subr.mxu0 0.0
  %1019 = vmatpush1.msra.mxu0 0.0
  %1020 = vmatprep.subr.mxu0 0.0
  %1021 = vmatpush1.msra.mxu0 0.0
  %1022 = vmatprep.subr.mxu0 0.0
  %1023 = vmatpush1.msra.mxu0 0.0
  %1024 = vmatprep.subr.mxu0 0.0
  %1025 = vmatpush1.msra.mxu0 0.0
  %1026 = vmatprep.subr.mxu0 0.0
  %1027 = vmatpush1.msra.mxu0 0.0
  %1028 = vmatprep.subr.mxu0 0.0
  %1029 = vmatpush1.msra.mxu0 0.0
  %1030 = vmatprep.subr.mxu0 0.0
  %1031 = vmatpush1.msra.mxu0 0.0
  %1032 = vmatprep.subr.mxu0 0.0
  %1033 = vmatpush1.msra.mxu0 0.0
  %1034 = vmatprep.subr.mxu0 0.0
  %1035 = vmatpush1.msra.mxu0 0.0
  %1036 = vmatprep.subr.mxu0 0.0
  %1037 = vmatpush1.msra.mxu0 0.0
  %1038 = vmatprep.subr.mxu0 0.0
  %1039 = vmatpush1.msra.mxu0 0.0
  %1040 = vmatprep.subr.mxu0 0.0
  %1041 = vmatpush1.msra.mxu0 0.0
  %1042 = vmatprep.subr.mxu0 0.0
  %1043 = vmatpush1.msra.mxu0 0.0
  %1044 = vmatprep.mubr.f32.mxu0 0.0
  %1045 = vmatmul.mubr.f32.gmra.mrb[0].mxu0 %v725
  %v1046 = vpop.f32.mrb[0].mxu0
  %v1047 = vadd.f32 0.0, %v1046
  %v1048 = vpop.f32.mrb[0].mxu0
  %v1049 = vadd.f32 0.0, %v1048
  %1050 = vdwg.mxu0
  %v1051 = vadd.f32 %v905, %v976
  %v1052 = vadd.f32 %v906, %v978
  %v1053 = vadd.f32 %v907, %v1047
  %v1054 = vadd.f32 %v908, %v1049
  %v1055 = vmul.f32 %v1051, 0.5
  %v1056 = vmul.f32 %v1052, 0.5
  %v1057 = vmul.f32 %v1053, 0.5
  %v1058 = vtanh.pop %v1055
  %v1059 = vtanh.pop %v1056
  %v1060 = vtanh.pop %v1057
  %v1061 = vmul.f32 %v1058, 0.5
  %v1062 = vmul.f32 %v1059, 0.5
  %v1063 = vmul.f32 %v1060, 0.5
  %v1064 = vadd.f32 %v1061, 0.5
  %v1065 = vadd.f32 %v1062, 0.5
  %v1066 = vadd.f32 %v1063, 0.5
  %v1067 = vtanh.pop %v1054
  %v1068 = vmul.f32 %v1065, %v723
  %v1069 = vmul.f32 %v1064, %v1067
  %v1070 = vadd.f32 %v1068, %v1069
  %v1071 = vtanh.pop %v1070
  %v1072 = vmul.f32 %v1066, %v1071
  %v1073 = vsel %vm726, %v899, 0
  %1075 = vmatprep.subr.mxu0 0.0
  %1076 = vmatpush1.msra.mxu0 %v540
  %1077 = vmatprep.subr.mxu0 0.0
  %1078 = vmatpush1.msra.mxu0 %v541
  %1079 = vmatprep.subr.mxu0 0.0
  %1080 = vmatpush1.msra.mxu0 %v542
  %1081 = vmatprep.subr.mxu0 0.0
  %1082 = vmatpush1.msra.mxu0 %v543
  %1083 = vmatprep.subr.mxu0 0.0
  %1084 = vmatpush1.msra.mxu0 0.0
  %1085 = vmatprep.subr.mxu0 0.0
  %1086 = vmatpush1.msra.mxu0 0.0
  %1087 = vmatprep.subr.mxu0 0.0
  %1088 = vmatpush1.msra.mxu0 0.0
  %1089 = vmatprep.subr.mxu0 0.0
  %1090 = vmatpush1.msra.mxu0 0.0
  %1091 = vmatprep.subr.mxu0 0.0
  %1092 = vmatpush1.msra.mxu0 0.0
  %1093 = vmatprep.subr.mxu0 0.0
  %1094 = vmatpush1.msra.mxu0 0.0
  %1095 = vmatprep.subr.mxu0 0.0
  %1096 = vmatpush1.msra.mxu0 0.0
  %1097 = vmatprep.subr.mxu0 0.0
  %1098 = vmatpush1.msra.mxu0 0.0
  %1099 = vmatprep.subr.mxu0 0.0
  %1100 = vmatpush1.msra.mxu0 0.0
  %1101 = vmatprep.subr.mxu0 0.0
  %1102 = vmatpush1.msra.mxu0 0.0
  %1103 = vmatprep.subr.mxu0 0.0
  %1104 = vmatpush1.msra.mxu0 0.0
  %1105 = vmatprep.subr.mxu0 0.0
  %1106 = vmatpush1.msra.mxu0 0.0
  %1107 = vmatprep.subr.mxu0 0.0
  %1108 = vmatpush1.msra.mxu0 0.0
  %1109 = vmatprep.subr.mxu0 0.0
  %1110 = vmatpush1.msra.mxu0 0.0
  %1111 = vmatprep.subr.mxu0 0.0
  %1112 = vmatpush1.msra.mxu0 0.0
  %1113 = vmatprep.subr.mxu0 0.0
  %1114 = vmatpush1.msra.mxu0 0.0
  %1115 = vmatprep.subr.mxu0 0.0
  %1116 = vmatpush1.msra.mxu0 0.0
  %1117 = vmatprep.subr.mxu0 0.0
  %1118 = vmatpush1.msra.mxu0 0.0
  %1119 = vmatprep.subr.mxu0 0.0
  %1120 = vmatpush1.msra.mxu0 0.0
  %1121 = vmatprep.subr.mxu0 0.0
  %1122 = vmatpush1.msra.mxu0 0.0
  %1123 = vmatprep.subr.mxu0 0.0
  %1124 = vmatpush1.msra.mxu0 0.0
  %1125 = vmatprep.subr.mxu0 0.0
  %1126 = vmatpush1.msra.mxu0 0.0
  %1127 = vmatprep.subr.mxu0 0.0
  %1128 = vmatpush1.msra.mxu0 0.0
  %1129 = vmatprep.subr.mxu0 0.0
  %1130 = vmatpush1.msra.mxu0 0.0
  %1131 = vmatprep.subr.mxu0 0.0
  %1132 = vmatpush1.msra.mxu0 0.0
  %1133 = vmatprep.subr.mxu0 0.0
  %1134 = vmatpush1.msra.mxu0 0.0
  %1135 = vmatprep.subr.mxu0 0.0
  %1136 = vmatpush1.msra.mxu0 0.0
  %1137 = vmatprep.subr.mxu0 0.0
  %1138 = vmatpush1.msra.mxu0 0.0
  %1139 = vmatprep.mubr.f32.mxu0 0.0
  %1140 = vmatmul.mubr.f32.gmra.mrb[0].mxu0 %v1073
  %v1141 = vpop.f32.mrb[0].mxu0
  %v1142 = vadd.f32 0.0, %v1141
  %v1143 = vpop.f32.mrb[0].mxu0
  %1144 = vdwg.mxu0
  %1145 = vmatprep.subr.mxu0 0.0
  %1146 = vmatpush1.msra.mxu0 %v524
  %1147 = vmatprep.subr.mxu0 0.0
  %1148 = vmatpush1.msra.mxu0 %v525
  %1149 = vmatprep.subr.mxu0 0.0
  %1150 = vmatpush1.msra.mxu0 %v526
  %1151 = vmatprep.subr.mxu0 0.0
  %1152 = vmatpush1.msra.mxu0 %v527
  %1153 = vmatprep.subr.mxu0 0.0
  %1154 = vmatpush1.msra.mxu0 %v528
  %1155 = vmatprep.subr.mxu0 0.0
  %1156 = vmatpush1.msra.mxu0 %v529
  %1157 = vmatprep.subr.mxu0 0.0
  %1158 = vmatpush1.msra.mxu0 %v530
  %1159 = vmatprep.subr.mxu0 0.0
  %1160 = vmatpush1.msra.mxu0 %v531
  %1161 = vmatprep.subr.mxu0 0.0
  %1162 = vmatpush1.msra.mxu0 %v532
  %1163 = vmatprep.subr.mxu0 0.0
  %1164 = vmatpush1.msra.mxu0 %v533
  %1165 = vmatprep.subr.mxu0 0.0
  %1166 = vmatpush1.msra.mxu0 %v534
  %1167 = vmatprep.subr.mxu0 0.0
  %1168 = vmatpush1.msra.mxu0 %v535
  %1169 = vmatprep.subr.mxu0 0.0
  %1170 = vmatpush1.msra.mxu0 %v536
  %1171 = vmatprep.subr.mxu0 0.0
  %1172 = vmatpush1.msra.mxu0 %v537
  %1173 = vmatprep.subr.mxu0 0.0
  %1174 = vmatpush1.msra.mxu0 %v538
  %1175 = vmatprep.subr.mxu0 0.0
  %1176 = vmatpush1.msra.mxu0 %v539
  %1177 = vmatprep.subr.mxu0 0.0
  %1178 = vmatpush1.msra.mxu0 0.0
  %1179 = vmatprep.subr.mxu0 0.0
  %1180 = vmatpush1.msra.mxu0 0.0
  %1181 = vmatprep.subr.mxu0 0.0
  %1182 = vmatpush1.msra.mxu0 0.0
  %1183 = vmatprep.subr.mxu0 0.0
  %1184 = vmatpush1.msra.mxu0 0.0
  %1185 = vmatprep.subr.mxu0 0.0
  %1186 = vmatpush1.msra.mxu0 0.0
  %1187 = vmatprep.subr.mxu0 0.0
  %1188 = vmatpush1.msra.mxu0 0.0
  %1189 = vmatprep.subr.mxu0 0.0
  %1190 = vmatpush1.msra.mxu0 0.0
  %1191 = vmatprep.subr.mxu0 0.0
  %1192 = vmatpush1.msra.mxu0 0.0
  %1193 = vmatprep.subr.mxu0 0.0
  %1194 = vmatpush1.msra.mxu0 0.0
  %1195 = vmatprep.subr.mxu0 0.0
  %1196 = vmatpush1.msra.mxu0 0.0
  %1197 = vmatprep.subr.mxu0 0.0
  %1198 = vmatpush1.msra.mxu0 0.0
  %1199 = vmatprep.subr.mxu0 0.0
  %1200 = vmatpush1.msra.mxu0 0.0
  %1201 = vmatprep.subr.mxu0 0.0
  %1202 = vmatpush1.msra.mxu0 0.0
  %1203 = vmatprep.subr.mxu0 0.0
  %1204 = vmatpush1.msra.mxu0 0.0
  %1205 = vmatprep.subr.mxu0 0.0
  %1206 = vmatpush1.msra.mxu0 0.0
  %1207 = vmatprep.subr.mxu0 0.0
  %1208 = vmatpush1.msra.mxu0 0.0
  %1209 = vmatprep.mubr.f32.mxu0 0.0
  %1210 = vmatmul.mubr.f32.gmra.mrb[0].mxu0 %v1072
  %v1211 = vpop.f32.mrb[0].mxu0
  %v1212 = vadd.f32 %v1142, %v1211
  %v1213 = vpop.f32.mrb[0].mxu0
  %1214 = vdwg.mxu0
  %v1215 = vadd.f32 %v1212, %v549
  %v1216 = vmul.f32 %v1215, 0.5
  %v1217 = vtanh.pop %v1216
  %v1218 = vmul.f32 %v1217, 0.5
  %v1219 = vadd.f32 %v1218, 0.5
  %v1220 = vtanh.pop %v1215
  %v1221 = vmul.f32 %v1219, %v890
  %1223 = vrot.lane.b32.xlu0 %v1220, 32
  %v1224 = vpop.permute.xlu0 %1223
  %v1226 = vmul.f32 %v1219, %v1224
  %1228 = vrot.lane.b32.xlu0 %v1226, 32
  %v1229 = vpop.permute.xlu0 %1228
  %v1231 = vadd.f32 %v1221, %v1229
  %v1232 = vtanh.pop %v1231
  %1234 = vrot.lane.b32.xlu0 %v1232, 32
  %v1235 = vpop.permute.xlu0 %1234
  %v1237 = vmul.f32 %v1219, %v1235
  %1239 = vrot.lane.b32.xlu0 %v1237, 64
  %v1240 = vpop.permute.xlu0 %1239
  %s1242 = scalar_lea.vmem %s7, 8
  %1243 = vst.msk [vmem:[%s1242] sm:$0xff] %vm726, %v1240
  %s1244 = smul.u32 2, 4
  %s1245 = smul.addr %s1244, 8
  %s1246 = scalar_lea.vmem [#allocation2], %s1245
  %v1247 = vld [vmem:[%s1246] sm:$0xff]
  %v1248 = vld [vmem:[%s1246 + $0x8] sm:$0xff]
  %v1249 = vld [vmem:[%s1246 + $0x10] sm:$0xff]
  %v1250 = vld [vmem:[%s1246 + $0x18] sm:$0xff]
  %1251 = vmatprep.subr.mxu0 %v461
  %1252 = vmatpush1.msra.mxu0 %v460
  %1253 = vmatprep.subr.mxu0 %v465
  %1254 = vmatpush1.msra.mxu0 %v464
  %1255 = vmatprep.subr.mxu0 %v469
  %1256 = vmatpush1.msra.mxu0 %v468
  %1257 = vmatprep.subr.mxu0 %v473
  %1258 = vmatpush1.msra.mxu0 %v472
  %1259 = vmatprep.subr.mxu0 %v477
  %1260 = vmatpush1.msra.mxu0 %v476
  %1261 = vmatprep.subr.mxu0 %v481
  %1262 = vmatpush1.msra.mxu0 %v480
  %1263 = vmatprep.subr.mxu0 %v485
  %1264 = vmatpush1.msra.mxu0 %v484
  %1265 = vmatprep.subr.mxu0 %v489
  %1266 = vmatpush1.msra.mxu0 %v488
  %1267 = vmatprep.subr.mxu0 %v493
  %1268 = vmatpush1.msra.mxu0 %v492
  %1269 = vmatprep.subr.mxu0 %v497
  %1270 = vmatpush1.msra.mxu0 %v496
  %1271 = vmatprep.subr.mxu0 %v501
  %1272 = vmatpush1.msra.mxu0 %v500
  %1273 = vmatprep.subr.mxu0 %v505
  %1274 = vmatpush1.msra.mxu0 %v504
  %1275 = vmatprep.subr.mxu0 %v509
  %1276 = vmatpush1.msra.mxu0 %v508
  %1277 = vmatprep.subr.mxu0 %v513
  %1278 = vmatpush1.msra.mxu0 %v512
  %1279 = vmatprep.subr.mxu0 %v517
  %1280 = vmatpush1.msra.mxu0 %v516
  %1281 = vmatprep.subr.mxu0 %v521
  %1282 = vmatpush1.msra.mxu0 %v520
  %1283 = vmatprep.subr.mxu0 0.0
  %1284 = vmatpush1.msra.mxu0 0.0
  %1285 = vmatprep.subr.mxu0 0.0
  %1286 = vmatpush1.msra.mxu0 0.0
  %1287 = vmatprep.subr.mxu0 0.0
  %1288 = vmatpush1.msra.mxu0 0.0
  %1289 = vmatprep.subr.mxu0 0.0
  %1290 = vmatpush1.msra.mxu0 0.0
  %1291 = vmatprep.subr.mxu0 0.0
  %1292 = vmatpush1.msra.mxu0 0.0
  %1293 = vmatprep.subr.mxu0 0.0
  %1294 = vmatpush1.msra.mxu0 0.0
  %1295 = vmatprep.subr.mxu0 0.0
  %1296 = vmatpush1.msra.mxu0 0.0
  %1297 = vmatprep.subr.mxu0 0.0
  %1298 = vmatpush1.msra.mxu0 0.0
  %1299 = vmatprep.subr.mxu0 0.0
  %1300 = vmatpush1.msra.mxu0 0.0
  %1301 = vmatprep.subr.mxu0 0.0
  %1302 = vmatpush1.msra.mxu0 0.0
  %1303 = vmatprep.subr.mxu0 0.0
  %1304 = vmatpush1.msra.mxu0 0.0
  %1305 = vmatprep.subr.mxu0 0.0
  %1306 = vmatpush1.msra.mxu0 0.0
  %1307 = vmatprep.subr.mxu0 0.0
  %1308 = vmatpush1.msra.mxu0 0.0
  %1309 = vmatprep.subr.mxu0 0.0
  %1310 = vmatpush1.msra.mxu0 0.0
  %1311 = vmatprep.subr.mxu0 0.0
  %1312 = vmatpush1.msra.mxu0 0.0
  %1313 = vmatprep.subr.mxu0 0.0
  %1314 = vmatpush1.msra.mxu0 0.0
  %1315 = vmatprep.mubr.f32.mxu0 0.0
  %1316 = vmatmul.mubr.f32.gmra.mrb[0].mxu0 %v1072
  %v1317 = vpop.f32.mrb[0].mxu0
  %v1318 = vadd.f32 0.0, %v1317
  %v1319 = vpop.f32.mrb[0].mxu0
  %v1320 = vadd.f32 0.0, %v1319
  %1321 = vdwg.mxu0
  %1322 = vmatprep.subr.mxu0 %v463
  %1323 = vmatpush1.msra.mxu0 %v462
  %1324 = vmatprep.subr.mxu0 %v467
  %1325 = vmatpush1.msra.mxu0 %v466
  %1326 = vmatprep.subr.mxu0 %v471
  %1327 = vmatpush1.msra.mxu0 %v470
  %1328 = vmatprep.subr.mxu0 %v475
  %1329 = vmatpush1.msra.mxu0 %v474
  %1330 = vmatprep.subr.mxu0 %v479
  %1331 = vmatpush1.msra.mxu0 %v478
  %1332 = vmatprep.subr.mxu0 %v483
  %1333 = vmatpush1.msra.mxu0 %v482
  %1334 = vmatprep.subr.mxu0 %v487
  %1335 = vmatpush1.msra.mxu0 %v486
  %1336 = vmatprep.subr.mxu0 %v491
  %1337 = vmatpush1.msra.mxu0 %v490
  %1338 = vmatprep.subr.mxu0 %v495
  %1339 = vmatpush1.msra.mxu0 %v494
  %1340 = vmatprep.subr.mxu0 %v499
  %1341 = vmatpush1.msra.mxu0 %v498
  %1342 = vmatprep.subr.mxu0 %v503
  %1343 = vmatpush1.msra.mxu0 %v502
  %1344 = vmatprep.subr.mxu0 %v507
  %1345 = vmatpush1.msra.mxu0 %v506
  %1346 = vmatprep.subr.mxu0 %v511
  %1347 = vmatpush1.msra.mxu0 %v510
  %1348 = vmatprep.subr.mxu0 %v515
  %1349 = vmatpush1.msra.mxu0 %v514
  %1350 = vmatprep.subr.mxu0 %v519
  %1351 = vmatpush1.msra.mxu0 %v518
  %1352 = vmatprep.subr.mxu0 %v523
  %1353 = vmatpush1.msra.mxu0 %v522
  %1354 = vmatprep.subr.mxu0 0.0
  %1355 = vmatpush1.msra.mxu0 0.0
  %1356 = vmatprep.subr.mxu0 0.0
  %1357 = vmatpush1.msra.mxu0 0.0
  %1358 = vmatprep.subr.mxu0 0.0
  %1359 = vmatpush1.msra.mxu0 0.0
  %1360 = vmatprep.subr.mxu0 0.0
  %1361 = vmatpush1.msra.mxu0 0.0
  %1362 = vmatprep.subr.mxu0 0.0
  %1363 = vmatpush1.msra.mxu0 0.0
  %1364 = vmatprep.subr.mxu0 0.0
  %1365 = vmatpush1.msra.mxu0 0.0
  %1366 = vmatprep.subr.mxu0 0.0
  %1367 = vmatpush1.msra.mxu0 0.0
  %1368 = vmatprep.subr.mxu0 0.0
  %1369 = vmatpush1.msra.mxu0 0.0
  %1370 = vmatprep.subr.mxu0 0.0
  %1371 = vmatpush1.msra.mxu0 0.0
  %1372 = vmatprep.subr.mxu0 0.0
  %1373 = vmatpush1.msra.mxu0 0.0
  %1374 = vmatprep.subr.mxu0 0.0
  %1375 = vmatpush1.msra.mxu0 0.0
  %1376 = vmatprep.subr.mxu0 0.0
  %1377 = vmatpush1.msra.mxu0 0.0
  %1378 = vmatprep.subr.mxu0 0.0
  %1379 = vmatpush1.msra.mxu0 0.0
  %1380 = vmatprep.subr.mxu0 0.0
  %1381 = vmatpush1.msra.mxu0 0.0
  %1382 = vmatprep.subr.mxu0 0.0
  %1383 = vmatpush1.msra.mxu0 0.0
  %1384 = vmatprep.subr.mxu0 0.0
  %1385 = vmatpush1.msra.mxu0 0.0
  %1386 = vmatprep.mubr.f32.mxu0 0.0
  %1387 = vmatmul.mubr.f32.gmra.mrb[0].mxu0 %v1072
  %v1388 = vpop.f32.mrb[0].mxu0
  %v1389 = vadd.f32 0.0, %v1388
  %v1390 = vpop.f32.mrb[0].mxu0
  %v1391 = vadd.f32 0.0, %v1390
  %1392 = vdwg.mxu0
  %v1393 = vadd.f32 %v1247, %v1318
  %v1394 = vadd.f32 %v1248, %v1320
  %v1395 = vadd.f32 %v1249, %v1389
  %v1396 = vadd.f32 %v1250, %v1391
  %v1397 = vmul.f32 %v1393, 0.5
  %v1398 = vmul.f32 %v1394, 0.5
  %v1399 = vmul.f32 %v1395, 0.5
  %v1400 = vtanh.pop %v1397
  %v1401 = vtanh.pop %v1398
  %v1402 = vtanh.pop %v1399
  %v1403 = vmul.f32 %v1400, 0.5
  %v1404 = vmul.f32 %v1401, 0.5
  %v1405 = vmul.f32 %v1402, 0.5
  %v1406 = vadd.f32 %v1403, 0.5
  %v1407 = vadd.f32 %v1404, 0.5
  %v1408 = vadd.f32 %v1405, 0.5
  %v1409 = vtanh.pop %v1396
  %v1410 = vmul.f32 %v1407, %v1070
  %v1411 = vmul.f32 %v1406, %v1409
  %v1412 = vadd.f32 %v1410, %v1411
  %v1413 = vtanh.pop %v1412
  %v1414 = vmul.f32 %v1408, %v1413
  %v1415 = vsel %vm726, %v1240, 0
  %1417 = vmatprep.subr.mxu0 0.0
  %1418 = vmatpush1.msra.mxu0 %v540
  %1419 = vmatprep.subr.mxu0 0.0
  %1420 = vmatpush1.msra.mxu0 %v541
  %1421 = vmatprep.subr.mxu0 0.0
  %1422 = vmatpush1.msra.mxu0 %v542
  %1423 = vmatprep.subr.mxu0 0.0
  %1424 = vmatpush1.msra.mxu0 %v543
  %1425 = vmatprep.subr.mxu0 0.0
  %1426 = vmatpush1.msra.mxu0 0.0
  %1427 = vmatprep.subr.mxu0 0.0
  %1428 = vmatpush1.msra.mxu0 0.0
  %1429 = vmatprep.subr.mxu0 0.0
  %1430 = vmatpush1.msra.mxu0 0.0
  %1431 = vmatprep.subr.mxu0 0.0
  %1432 = vmatpush1.msra.mxu0 0.0
  %1433 = vmatprep.subr.mxu0 0.0
  %1434 = vmatpush1.msra.mxu0 0.0
  %1435 = vmatprep.subr.mxu0 0.0
  %1436 = vmatpush1.msra.mxu0 0.0
  %1437 = vmatprep.subr.mxu0 0.0
  %1438 = vmatpush1.msra.mxu0 0.0
  %1439 = vmatprep.subr.mxu0 0.0
  %1440 = vmatpush1.msra.mxu0 0.0
  %1441 = vmatprep.subr.mxu0 0.0
  %1442 = vmatpush1.msra.mxu0 0.0
  %1443 = vmatprep.subr.mxu0 0.0
  %1444 = vmatpush1.msra.mxu0 0.0
  %1445 = vmatprep.subr.mxu0 0.0
  %1446 = vmatpush1.msra.mxu0 0.0
  %1447 = vmatprep.subr.mxu0 0.0
  %1448 = vmatpush1.msra.mxu0 0.0
  %1449 = vmatprep.subr.mxu0 0.0
  %1450 = vmatpush1.msra.mxu0 0.0
  %1451 = vmatprep.subr.mxu0 0.0
  %1452 = vmatpush1.msra.mxu0 0.0
  %1453 = vmatprep.subr.mxu0 0.0
  %1454 = vmatpush1.msra.mxu0 0.0
  %1455 = vmatprep.subr.mxu0 0.0
  %1456 = vmatpush1.msra.mxu0 0.0
  %1457 = vmatprep.subr.mxu0 0.0
  %1458 = vmatpush1.msra.mxu0 0.0
  %1459 = vmatprep.subr.mxu0 0.0
  %1460 = vmatpush1.msra.mxu0 0.0
  %1461 = vmatprep.subr.mxu0 0.0
  %1462 = vmatpush1.msra.mxu0 0.0
  %1463 = vmatprep.subr.mxu0 0.0
  %1464 = vmatpush1.msra.mxu0 0.0
  %1465 = vmatprep.subr.mxu0 0.0
  %1466 = vmatpush1.msra.mxu0 0.0
  %1467 = vmatprep.subr.mxu0 0.0
  %1468 = vmatpush1.msra.mxu0 0.0
  %1469 = vmatprep.subr.mxu0 0.0
  %1470 = vmatpush1.msra.mxu0 0.0
  %1471 = vmatprep.subr.mxu0 0.0
  %1472 = vmatpush1.msra.mxu0 0.0
  %1473 = vmatprep.subr.mxu0 0.0
  %1474 = vmatpush1.msra.mxu0 0.0
  %1475 = vmatprep.subr.mxu0 0.0
  %1476 = vmatpush1.msra.mxu0 0.0
  %1477 = vmatprep.subr.mxu0 0.0
  %1478 = vmatpush1.msra.mxu0 0.0
  %1479 = vmatprep.subr.mxu0 0.0
  %1480 = vmatpush1.msra.mxu0 0.0
  %1481 = vmatprep.mubr.f32.mxu0 0.0
  %1482 = vmatmul.mubr.f32.gmra.mrb[0].mxu0 %v1415
  %v1483 = vpop.f32.mrb[0].mxu0
  %v1484 = vadd.f32 0.0, %v1483
  %v1485 = vpop.f32.mrb[0].mxu0
  %1486 = vdwg.mxu0
  %1487 = vmatprep.subr.mxu0 0.0
  %1488 = vmatpush1.msra.mxu0 %v524
  %1489 = vmatprep.subr.mxu0 0.0
  %1490 = vmatpush1.msra.mxu0 %v525
  %1491 = vmatprep.subr.mxu0 0.0
  %1492 = vmatpush1.msra.mxu0 %v526
  %1493 = vmatprep.subr.mxu0 0.0
  %1494 = vmatpush1.msra.mxu0 %v527
  %1495 = vmatprep.subr.mxu0 0.0
  %1496 = vmatpush1.msra.mxu0 %v528
  %1497 = vmatprep.subr.mxu0 0.0
  %1498 = vmatpush1.msra.mxu0 %v529
  %1499 = vmatprep.subr.mxu0 0.0
  %1500 = vmatpush1.msra.mxu0 %v530
  %1501 = vmatprep.subr.mxu0 0.0
  %1502 = vmatpush1.msra.mxu0 %v531
  %1503 = vmatprep.subr.mxu0 0.0
  %1504 = vmatpush1.msra.mxu0 %v532
  %1505 = vmatprep.subr.mxu0 0.0
  %1506 = vmatpush1.msra.mxu0 %v533
  %1507 = vmatprep.subr.mxu0 0.0
  %1508 = vmatpush1.msra.mxu0 %v534
  %1509 = vmatprep.subr.mxu0 0.0
  %1510 = vmatpush1.msra.mxu0 %v535
  %1511 = vmatprep.subr.mxu0 0.0
  %1512 = vmatpush1.msra.mxu0 %v536
  %1513 = vmatprep.subr.mxu0 0.0
  %1514 = vmatpush1.msra.mxu0 %v537
  %1515 = vmatprep.subr.mxu0 0.0
  %1516 = vmatpush1.msra.mxu0 %v538
  %1517 = vmatprep.subr.mxu0 0.0
  %1518 = vmatpush1.msra.mxu0 %v539
  %1519 = vmatprep.subr.mxu0 0.0
  %1520 = vmatpush1.msra.mxu0 0.0
  %1521 = vmatprep.subr.mxu0 0.0
  %1522 = vmatpush1.msra.mxu0 0.0
  %1523 = vmatprep.subr.mxu0 0.0
  %1524 = vmatpush1.msra.mxu0 0.0
  %1525 = vmatprep.subr.mxu0 0.0
  %1526 = vmatpush1.msra.mxu0 0.0
  %1527 = vmatprep.subr.mxu0 0.0
  %1528 = vmatpush1.msra.mxu0 0.0
  %1529 = vmatprep.subr.mxu0 0.0
  %1530 = vmatpush1.msra.mxu0 0.0
  %1531 = vmatprep.subr.mxu0 0.0
  %1532 = vmatpush1.msra.mxu0 0.0
  %1533 = vmatprep.subr.mxu0 0.0
  %1534 = vmatpush1.msra.mxu0 0.0
  %1535 = vmatprep.subr.mxu0 0.0
  %1536 = vmatpush1.msra.mxu0 0.0
  %1537 = vmatprep.subr.mxu0 0.0
  %1538 = vmatpush1.msra.mxu0 0.0
  %1539 = vmatprep.subr.mxu0 0.0
  %1540 = vmatpush1.msra.mxu0 0.0
  %1541 = vmatprep.subr.mxu0 0.0
  %1542 = vmatpush1.msra.mxu0 0.0
  %1543 = vmatprep.subr.mxu0 0.0
  %1544 = vmatpush1.msra.mxu0 0.0
  %1545 = vmatprep.subr.mxu0 0.0
  %1546 = vmatpush1.msra.mxu0 0.0
  %1547 = vmatprep.subr.mxu0 0.0
  %1548 = vmatpush1.msra.mxu0 0.0
  %1549 = vmatprep.subr.mxu0 0.0
  %1550 = vmatpush1.msra.mxu0 0.0
  %1551 = vmatprep.mubr.f32.mxu0 0.0
  %1552 = vmatmul.mubr.f32.gmra.mrb[0].mxu0 %v1414
  %v1553 = vpop.f32.mrb[0].mxu0
  %v1554 = vadd.f32 %v1484, %v1553
  %v1555 = vpop.f32.mrb[0].mxu0
  %1556 = vdwg.mxu0
  %v1557 = vadd.f32 %v1554, %v549
  %v1558 = vmul.f32 %v1557, 0.5
  %v1559 = vtanh.pop %v1558
  %v1560 = vmul.f32 %v1559, 0.5
  %v1561 = vadd.f32 %v1560, 0.5
  %v1562 = vtanh.pop %v1557
  %v1563 = vmul.f32 %v1561, %v1231
  %1565 = vrot.lane.b32.xlu0 %v1562, 32
  %v1566 = vpop.permute.xlu0 %1565
  %v1568 = vmul.f32 %v1561, %v1566
  %1570 = vrot.lane.b32.xlu0 %v1568, 32
  %v1571 = vpop.permute.xlu0 %1570
  %v1573 = vadd.f32 %v1563, %v1571
  %v1574 = vtanh.pop %v1573
  %1576 = vrot.lane.b32.xlu0 %v1574, 32
  %v1577 = vpop.permute.xlu0 %1576
  %v1579 = vmul.f32 %v1561, %v1577
  %1581 = vrot.lane.b32.xlu0 %v1579, 64
  %v1582 = vpop.permute.xlu0 %1581
  %s1584 = scalar_lea.vmem %s7, 16
  %1585 = vst.msk [vmem:[%s1584] sm:$0xff] %vm726, %v1582
  %s1586 = smul.u32 3, 4
  %s1587 = smul.addr %s1586, 8
  %s1588 = scalar_lea.vmem [#allocation2], %s1587
  %v1589 = vld [vmem:[%s1588] sm:$0xff]
  %v1590 = vld [vmem:[%s1588 + $0x8] sm:$0xff]
  %v1591 = vld [vmem:[%s1588 + $0x10] sm:$0xff]
  %v1592 = vld [vmem:[%s1588 + $0x18] sm:$0xff]
  %1593 = vmatprep.subr.mxu0 %v461
  %1594 = vmatpush1.msra.mxu0 %v460
  %1595 = vmatprep.subr.mxu0 %v465
  %1596 = vmatpush1.msra.mxu0 %v464
  %1597 = vmatprep.subr.mxu0 %v469
  %1598 = vmatpush1.msra.mxu0 %v468
  %1599 = vmatprep.subr.mxu0 %v473
  %1600 = vmatpush1.msra.mxu0 %v472
  %1601 = vmatprep.subr.mxu0 %v477
  %1602 = vmatpush1.msra.mxu0 %v476
  %1603 = vmatprep.subr.mxu0 %v481
  %1604 = vmatpush1.msra.mxu0 %v480
  %1605 = vmatprep.subr.mxu0 %v485
  %1606 = vmatpush1.msra.mxu0 %v484
  %1607 = vmatprep.subr.mxu0 %v489
  %1608 = vmatpush1.msra.mxu0 %v488
  %1609 = vmatprep.subr.mxu0 %v493
  %1610 = vmatpush1.msra.mxu0 %v492
  %1611 = vmatprep.subr.mxu0 %v497
  %1612 = vmatpush1.msra.mxu0 %v496
  %1613 = vmatprep.subr.mxu0 %v501
  %1614 = vmatpush1.msra.mxu0 %v500
  %1615 = vmatprep.subr.mxu0 %v505
  %1616 = vmatpush1.msra.mxu0 %v504
  %1617 = vmatprep.subr.mxu0 %v509
  %1618 = vmatpush1.msra.mxu0 %v508
  %1619 = vmatprep.subr.mxu0 %v513
  %1620 = vmatpush1.msra.mxu0 %v512
  %1621 = vmatprep.subr.mxu0 %v517
  %1622 = vmatpush1.msra.mxu0 %v516
  %1623 = vmatprep.subr.mxu0 %v521
  %1624 = vmatpush1.msra.mxu0 %v520
  %1625 = vmatprep.subr.mxu0 0.0
  %1626 = vmatpush1.msra.mxu0 0.0
  %1627 = vmatprep.subr.mxu0 0.0
  %1628 = vmatpush1.msra.mxu0 0.0
  %1629 = vmatprep.subr.mxu0 0.0
  %1630 = vmatpush1.msra.mxu0 0.0
  %1631 = vmatprep.subr.mxu0 0.0
  %1632 = vmatpush1.msra.mxu0 0.0
  %1633 = vmatprep.subr.mxu0 0.0
  %1634 = vmatpush1.msra.mxu0 0.0
  %1635 = vmatprep.subr.mxu0 0.0
  %1636 = vmatpush1.msra.mxu0 0.0
  %1637 = vmatprep.subr.mxu0 0.0
  %1638 = vmatpush1.msra.mxu0 0.0
  %1639 = vmatprep.subr.mxu0 0.0
  %1640 = vmatpush1.msra.mxu0 0.0
  %1641 = vmatprep.subr.mxu0 0.0
  %1642 = vmatpush1.msra.mxu0 0.0
  %1643 = vmatprep.subr.mxu0 0.0
  %1644 = vmatpush1.msra.mxu0 0.0
  %1645 = vmatprep.subr.mxu0 0.0
  %1646 = vmatpush1.msra.mxu0 0.0
  %1647 = vmatprep.subr.mxu0 0.0
  %1648 = vmatpush1.msra.mxu0 0.0
  %1649 = vmatprep.subr.mxu0 0.0
  %1650 = vmatpush1.msra.mxu0 0.0
  %1651 = vmatprep.subr.mxu0 0.0
  %1652 = vmatpush1.msra.mxu0 0.0
  %1653 = vmatprep.subr.mxu0 0.0
  %1654 = vmatpush1.msra.mxu0 0.0
  %1655 = vmatprep.subr.mxu0 0.0
  %1656 = vmatpush1.msra.mxu0 0.0
  %1657 = vmatprep.mubr.f32.mxu0 0.0
  %1658 = vmatmul.mubr.f32.gmra.mrb[0].mxu0 %v1414
  %v1659 = vpop.f32.mrb[0].mxu0
  %v1660 = vadd.f32 0.0, %v1659
  %v1661 = vpop.f32.mrb[0].mxu0
  %v1662 = vadd.f32 0.0, %v1661
  %1663 = vdwg.mxu0
  %1664 = vmatprep.subr.mxu0 %v463
  %1665 = vmatpush1.msra.mxu0 %v462
  %1666 = vmatprep.subr.mxu0 %v467
  %1667 = vmatpush1.msra.mxu0 %v466
  %1668 = vmatprep.subr.mxu0 %v471
  %1669 = vmatpush1.msra.mxu0 %v470
  %1670 = vmatprep.subr.mxu0 %v475
  %1671 = vmatpush1.msra.mxu0 %v474
  %1672 = vmatprep.subr.mxu0 %v479
  %1673 = vmatpush1.msra.mxu0 %v478
  %1674 = vmatprep.subr.mxu0 %v483
  %1675 = vmatpush1.msra.mxu0 %v482
  %1676 = vmatprep.subr.mxu0 %v487
  %1677 = vmatpush1.msra.mxu0 %v486
  %1678 = vmatprep.subr.mxu0 %v491
  %1679 = vmatpush1.msra.mxu0 %v490
  %1680 = vmatprep.subr.mxu0 %v495
  %1681 = vmatpush1.msra.mxu0 %v494
  %1682 = vmatprep.subr.mxu0 %v499
  %1683 = vmatpush1.msra.mxu0 %v498
  %1684 = vmatprep.subr.mxu0 %v503
  %1685 = vmatpush1.msra.mxu0 %v502
  %1686 = vmatprep.subr.mxu0 %v507
  %1687 = vmatpush1.msra.mxu0 %v506
  %1688 = vmatprep.subr.mxu0 %v511
  %1689 = vmatpush1.msra.mxu0 %v510
  %1690 = vmatprep.subr.mxu0 %v515
  %1691 = vmatpush1.msra.mxu0 %v514
  %1692 = vmatprep.subr.mxu0 %v519
  %1693 = vmatpush1.msra.mxu0 %v518
  %1694 = vmatprep.subr.mxu0 %v523
  %1695 = vmatpush1.msra.mxu0 %v522
  %1696 = vmatprep.subr.mxu0 0.0
  %1697 = vmatpush1.msra.mxu0 0.0
  %1698 = vmatprep.subr.mxu0 0.0
  %1699 = vmatpush1.msra.mxu0 0.0
  %1700 = vmatprep.subr.mxu0 0.0
  %1701 = vmatpush1.msra.mxu0 0.0
  %1702 = vmatprep.subr.mxu0 0.0
  %1703 = vmatpush1.msra.mxu0 0.0
  %1704 = vmatprep.subr.mxu0 0.0
  %1705 = vmatpush1.msra.mxu0 0.0
  %1706 = vmatprep.subr.mxu0 0.0
  %1707 = vmatpush1.msra.mxu0 0.0
  %1708 = vmatprep.subr.mxu0 0.0
  %1709 = vmatpush1.msra.mxu0 0.0
  %1710 = vmatprep.subr.mxu0 0.0
  %1711 = vmatpush1.msra.mxu0 0.0
  %1712 = vmatprep.subr.mxu0 0.0
  %1713 = vmatpush1.msra.mxu0 0.0
  %1714 = vmatprep.subr.mxu0 0.0
  %1715 = vmatpush1.msra.mxu0 0.0
  %1716 = vmatprep.subr.mxu0 0.0
  %1717 = vmatpush1.msra.mxu0 0.0
  %1718 = vmatprep.subr.mxu0 0.0
  %1719 = vmatpush1.msra.mxu0 0.0
  %1720 = vmatprep.subr.mxu0 0.0
  %1721 = vmatpush1.msra.mxu0 0.0
  %1722 = vmatprep.subr.mxu0 0.0
  %1723 = vmatpush1.msra.mxu0 0.0
  %1724 = vmatprep.subr.mxu0 0.0
  %1725 = vmatpush1.msra.mxu0 0.0
  %1726 = vmatprep.subr.mxu0 0.0
  %1727 = vmatpush1.msra.mxu0 0.0
  %1728 = vmatprep.mubr.f32.mxu0 0.0
  %1729 = vmatmul.mubr.f32.gmra.mrb[0].mxu0 %v1414
  %v1730 = vpop.f32.mrb[0].mxu0
  %v1731 = vadd.f32 0.0, %v1730
  %v1732 = vpop.f32.mrb[0].mxu0
  %v1733 = vadd.f32 0.0, %v1732
  %1734 = vdwg.mxu0
  %v1735 = vadd.f32 %v1589, %v1660
  %v1736 = vadd.f32 %v1590, %v1662
  %v1737 = vadd.f32 %v1591, %v1731
  %v1738 = vadd.f32 %v1592, %v1733
  %v1739 = vmul.f32 %v1735, 0.5
  %v1740 = vmul.f32 %v1736, 0.5
  %v1741 = vmul.f32 %v1737, 0.5
  %v1742 = vtanh.pop %v1739
  %v1743 = vtanh.pop %v1740
  %v1744 = vtanh.pop %v1741
  %v1745 = vmul.f32 %v1742, 0.5
  %v1746 = vmul.f32 %v1743, 0.5
  %v1747 = vmul.f32 %v1744, 0.5
  %v1748 = vadd.f32 %v1745, 0.5
  %v1749 = vadd.f32 %v1746, 0.5
  %v1750 = vadd.f32 %v1747, 0.5
  %v1751 = vtanh.pop %v1738
  %v1752 = vmul.f32 %v1749, %v1412
  %v1753 = vmul.f32 %v1748, %v1751
  %v1754 = vadd.f32 %v1752, %v1753
  %v1755 = vtanh.pop %v1754
  %v1756 = vmul.f32 %v1750, %v1755
  %v1757 = vsel %vm726, %v1582, 0
  %1759 = vmatprep.subr.mxu0 0.0
  %1760 = vmatpush1.msra.mxu0 %v540
  %1761 = vmatprep.subr.mxu0 0.0
  %1762 = vmatpush1.msra.mxu0 %v541
  %1763 = vmatprep.subr.mxu0 0.0
  %1764 = vmatpush1.msra.mxu0 %v542
  %1765 = vmatprep.subr.mxu0 0.0
  %1766 = vmatpush1.msra.mxu0 %v543
  %1767 = vmatprep.subr.mxu0 0.0
  %1768 = vmatpush1.msra.mxu0 0.0
  %1769 = vmatprep.subr.mxu0 0.0
  %1770 = vmatpush1.msra.mxu0 0.0
  %1771 = vmatprep.subr.mxu0 0.0
  %1772 = vmatpush1.msra.mxu0 0.0
  %1773 = vmatprep.subr.mxu0 0.0
  %1774 = vmatpush1.msra.mxu0 0.0
  %1775 = vmatprep.subr.mxu0 0.0
  %1776 = vmatpush1.msra.mxu0 0.0
  %1777 = vmatprep.subr.mxu0 0.0
  %1778 = vmatpush1.msra.mxu0 0.0
  %1779 = vmatprep.subr.mxu0 0.0
  %1780 = vmatpush1.msra.mxu0 0.0
  %1781 = vmatprep.subr.mxu0 0.0
  %1782 = vmatpush1.msra.mxu0 0.0
  %1783 = vmatprep.subr.mxu0 0.0
  %1784 = vmatpush1.msra.mxu0 0.0
  %1785 = vmatprep.subr.mxu0 0.0
  %1786 = vmatpush1.msra.mxu0 0.0
  %1787 = vmatprep.subr.mxu0 0.0
  %1788 = vmatpush1.msra.mxu0 0.0
  %1789 = vmatprep.subr.mxu0 0.0
  %1790 = vmatpush1.msra.mxu0 0.0
  %1791 = vmatprep.subr.mxu0 0.0
  %1792 = vmatpush1.msra.mxu0 0.0
  %1793 = vmatprep.subr.mxu0 0.0
  %1794 = vmatpush1.msra.mxu0 0.0
  %1795 = vmatprep.subr.mxu0 0.0
  %1796 = vmatpush1.msra.mxu0 0.0
  %1797 = vmatprep.subr.mxu0 0.0
  %1798 = vmatpush1.msra.mxu0 0.0
  %1799 = vmatprep.subr.mxu0 0.0
  %1800 = vmatpush1.msra.mxu0 0.0
  %1801 = vmatprep.subr.mxu0 0.0
  %1802 = vmatpush1.msra.mxu0 0.0
  %1803 = vmatprep.subr.mxu0 0.0
  %1804 = vmatpush1.msra.mxu0 0.0
  %1805 = vmatprep.subr.mxu0 0.0
  %1806 = vmatpush1.msra.mxu0 0.0
  %1807 = vmatprep.subr.mxu0 0.0
  %1808 = vmatpush1.msra.mxu0 0.0
  %1809 = vmatprep.subr.mxu0 0.0
  %1810 = vmatpush1.msra.mxu0 0.0
  %1811 = vmatprep.subr.mxu0 0.0
  %1812 = vmatpush1.msra.mxu0 0.0
  %1813 = vmatprep.subr.mxu0 0.0
  %1814 = vmatpush1.msra.mxu0 0.0
  %1815 = vmatprep.subr.mxu0 0.0
  %1816 = vmatpush1.msra.mxu0 0.0
  %1817 = vmatprep.subr.mxu0 0.0
  %1818 = vmatpush1.msra.mxu0 0.0
  %1819 = vmatprep.subr.mxu0 0.0
  %1820 = vmatpush1.msra.mxu0 0.0
  %1821 = vmatprep.subr.mxu0 0.0
  %1822 = vmatpush1.msra.mxu0 0.0
  %1823 = vmatprep.mubr.f32.mxu0 0.0
  %1824 = vmatmul.mubr.f32.gmra.mrb[0].mxu0 %v1757
  %v1825 = vpop.f32.mrb[0].mxu0
  %v1826 = vadd.f32 0.0, %v1825
  %v1827 = vpop.f32.mrb[0].mxu0
  %1828 = vdwg.mxu0
  %1829 = vmatprep.subr.mxu0 0.0
  %1830 = vmatpush1.msra.mxu0 %v524
  %1831 = vmatprep.subr.mxu0 0.0
  %1832 = vmatpush1.msra.mxu0 %v525
  %1833 = vmatprep.subr.mxu0 0.0
  %1834 = vmatpush1.msra.mxu0 %v526
  %1835 = vmatprep.subr.mxu0 0.0
  %1836 = vmatpush1.msra.mxu0 %v527
  %1837 = vmatprep.subr.mxu0 0.0
  %1838 = vmatpush1.msra.mxu0 %v528
  %1839 = vmatprep.subr.mxu0 0.0
  %1840 = vmatpush1.msra.mxu0 %v529
  %1841 = vmatprep.subr.mxu0 0.0
  %1842 = vmatpush1.msra.mxu0 %v530
  %1843 = vmatprep.subr.mxu0 0.0
  %1844 = vmatpush1.msra.mxu0 %v531
  %1845 = vmatprep.subr.mxu0 0.0
  %1846 = vmatpush1.msra.mxu0 %v532
  %1847 = vmatprep.subr.mxu0 0.0
  %1848 = vmatpush1.msra.mxu0 %v533
  %1849 = vmatprep.subr.mxu0 0.0
  %1850 = vmatpush1.msra.mxu0 %v534
  %1851 = vmatprep.subr.mxu0 0.0
  %1852 = vmatpush1.msra.mxu0 %v535
  %1853 = vmatprep.subr.mxu0 0.0
  %1854 = vmatpush1.msra.mxu0 %v536
  %1855 = vmatprep.subr.mxu0 0.0
  %1856 = vmatpush1.msra.mxu0 %v537
  %1857 = vmatprep.subr.mxu0 0.0
  %1858 = vmatpush1.msra.mxu0 %v538
  %1859 = vmatprep.subr.mxu0 0.0
  %1860 = vmatpush1.msra.mxu0 %v539
  %1861 = vmatprep.subr.mxu0 0.0
  %1862 = vmatpush1.msra.mxu0 0.0
  %1863 = vmatprep.subr.mxu0 0.0
  %1864 = vmatpush1.msra.mxu0 0.0
  %1865 = vmatprep.subr.mxu0 0.0
  %1866 = vmatpush1.msra.mxu0 0.0
  %1867 = vmatprep.subr.mxu0 0.0
  %1868 = vmatpush1.msra.mxu0 0.0
  %1869 = vmatprep.subr.mxu0 0.0
  %1870 = vmatpush1.msra.mxu0 0.0
  %1871 = vmatprep.subr.mxu0 0.0
  %1872 = vmatpush1.msra.mxu0 0.0
  %1873 = vmatprep.subr.mxu0 0.0
  %1874 = vmatpush1.msra.mxu0 0.0
  %1875 = vmatprep.subr.mxu0 0.0
  %1876 = vmatpush1.msra.mxu0 0.0
  %1877 = vmatprep.subr.mxu0 0.0
  %1878 = vmatpush1.msra.mxu0 0.0
  %1879 = vmatprep.subr.mxu0 0.0
  %1880 = vmatpush1.msra.mxu0 0.0
  %1881 = vmatprep.subr.mxu0 0.0
  %1882 = vmatpush1.msra.mxu0 0.0
  %1883 = vmatprep.subr.mxu0 0.0
  %1884 = vmatpush1.msra.mxu0 0.0
  %1885 = vmatprep.subr.mxu0 0.0
  %1886 = vmatpush1.msra.mxu0 0.0
  %1887 = vmatprep.subr.mxu0 0.0
  %1888 = vmatpush1.msra.mxu0 0.0
  %1889 = vmatprep.subr.mxu0 0.0
  %1890 = vmatpush1.msra.mxu0 0.0
  %1891 = vmatprep.subr.mxu0 0.0
  %1892 = vmatpush1.msra.mxu0 0.0
  %1893 = vmatprep.mubr.f32.mxu0 0.0
  %1894 = vmatmul.mubr.f32.gmra.mrb[0].mxu0 %v1756
  %v1895 = vpop.f32.mrb[0].mxu0
  %v1896 = vadd.f32 %v1826, %v1895
  %v1897 = vpop.f32.mrb[0].mxu0
  %1898 = vdwg.mxu0
  %v1899 = vadd.f32 %v1896, %v549
  %v1900 = vmul.f32 %v1899, 0.5
  %v1901 = vtanh.pop %v1900
  %v1902 = vmul.f32 %v1901, 0.5
  %v1903 = vadd.f32 %v1902, 0.5
  %v1904 = vtanh.pop %v1899
  %v1905 = vmul.f32 %v1903, %v1573
  %1907 = vrot.lane.b32.xlu0 %v1904, 32
  %v1908 = vpop.permute.xlu0 %1907
  %v1910 = vmul.f32 %v1903, %v1908
  %1912 = vrot.lane.b32.xlu0 %v1910, 32
  %v1913 = vpop.permute.xlu0 %1912
  %v1915 = vadd.f32 %v1905, %v1913
  %v1916 = vtanh.pop %v1915
  %1918 = vrot.lane.b32.xlu0 %v1916, 32
  %v1919 = vpop.permute.xlu0 %1918
  %v1921 = vmul.f32 %v1903, %v1919
  %1923 = vrot.lane.b32.xlu0 %v1921, 64
  %v1924 = vpop.permute.xlu0 %1923
  %s1926 = scalar_lea.vmem %s7, 24
  %1927 = vst.msk [vmem:[%s1926] sm:$0xff] %vm726, %v1924
  %s1928 = smul.u32 4, 4
  %s1929 = smul.addr %s1928, 8
  %s1930 = scalar_lea.vmem [#allocation2], %s1929
  %v1931 = vld [vmem:[%s1930] sm:$0xff]
  %v1932 = vld [vmem:[%s1930 + $0x8] sm:$0xff]
  %v1933 = vld [vmem:[%s1930 + $0x10] sm:$0xff]
  %v1934 = vld [vmem:[%s1930 + $0x18] sm:$0xff]
  %1935 = vmatprep.subr.mxu0 %v461
  %1936 = vmatpush1.msra.mxu0 %v460
  %1937 = vmatprep.subr.mxu0 %v465
  %1938 = vmatpush1.msra.mxu0 %v464
  %1939 = vmatprep.subr.mxu0 %v469
  %1940 = vmatpush1.msra.mxu0 %v468
  %1941 = vmatprep.subr.mxu0 %v473
  %1942 = vmatpush1.msra.mxu0 %v472
  %1943 = vmatprep.subr.mxu0 %v477
  %1944 = vmatpush1.msra.mxu0 %v476
  %1945 = vmatprep.subr.mxu0 %v481
  %1946 = vmatpush1.msra.mxu0 %v480
  %1947 = vmatprep.subr.mxu0 %v485
  %1948 = vmatpush1.msra.mxu0 %v484
  %1949 = vmatprep.subr.mxu0 %v489
  %1950 = vmatpush1.msra.mxu0 %v488
  %1951 = vmatprep.subr.mxu0 %v493
  %1952 = vmatpush1.msra.mxu0 %v492
  %1953 = vmatprep.subr.mxu0 %v497
  %1954 = vmatpush1.msra.mxu0 %v496
  %1955 = vmatprep.subr.mxu0 %v501
  %1956 = vmatpush1.msra.mxu0 %v500
  %1957 = vmatprep.subr.mxu0 %v505
  %1958 = vmatpush1.msra.mxu0 %v504
  %1959 = vmatprep.subr.mxu0 %v509
  %1960 = vmatpush1.msra.mxu0 %v508
  %1961 = vmatprep.subr.mxu0 %v513
  %1962 = vmatpush1.msra.mxu0 %v512
  %1963 = vmatprep.subr.mxu0 %v517
  %1964 = vmatpush1.msra.mxu0 %v516
  %1965 = vmatprep.subr.mxu0 %v521
  %1966 = vmatpush1.msra.mxu0 %v520
  %1967 = vmatprep.subr.mxu0 0.0
  %1968 = vmatpush1.msra.mxu0 0.0
  %1969 = vmatprep.subr.mxu0 0.0
  %1970 = vmatpush1.msra.mxu0 0.0
  %1971 = vmatprep.subr.mxu0 0.0
  %1972 = vmatpush1.msra.mxu0 0.0
  %1973 = vmatprep.subr.mxu0 0.0
  %1974 = vmatpush1.msra.mxu0 0.0
  %1975 = vmatprep.subr.mxu0 0.0
  %1976 = vmatpush1.msra.mxu0 0.0
  %1977 = vmatprep.subr.mxu0 0.0
  %1978 = vmatpush1.msra.mxu0 0.0
  %1979 = vmatprep.subr.mxu0 0.0
  %1980 = vmatpush1.msra.mxu0 0.0
  %1981 = vmatprep.subr.mxu0 0.0
  %1982 = vmatpush1.msra.mxu0 0.0
  %1983 = vmatprep.subr.mxu0 0.0
  %1984 = vmatpush1.msra.mxu0 0.0
  %1985 = vmatprep.subr.mxu0 0.0
  %1986 = vmatpush1.msra.mxu0 0.0
  %1987 = vmatprep.subr.mxu0 0.0
  %1988 = vmatpush1.msra.mxu0 0.0
  %1989 = vmatprep.subr.mxu0 0.0
  %1990 = vmatpush1.msra.mxu0 0.0
  %1991 = vmatprep.subr.mxu0 0.0
  %1992 = vmatpush1.msra.mxu0 0.0
  %1993 = vmatprep.subr.mxu0 0.0
  %1994 = vmatpush1.msra.mxu0 0.0
  %1995 = vmatprep.subr.mxu0 0.0
  %1996 = vmatpush1.msra.mxu0 0.0
  %1997 = vmatprep.subr.mxu0 0.0
  %1998 = vmatpush1.msra.mxu0 0.0
  %1999 = vmatprep.mubr.f32.mxu0 0.0
  %2000 = vmatmul.mubr.f32.gmra.mrb[0].mxu0 %v1756
  %v2001 = vpop.f32.mrb[0].mxu0
  %v2002 = vadd.f32 0.0, %v2001
  %v2003 = vpop.f32.mrb[0].mxu0
  %v2004 = vadd.f32 0.0, %v2003
  %2005 = vdwg.mxu0
  %2006 = vmatprep.subr.mxu0 %v463
  %2007 = vmatpush1.msra.mxu0 %v462
  %2008 = vmatprep.subr.mxu0 %v467
  %2009 = vmatpush1.msra.mxu0 %v466
  %2010 = vmatprep.subr.mxu0 %v471
  %2011 = vmatpush1.msra.mxu0 %v470
  %2012 = vmatprep.subr.mxu0 %v475
  %2013 = vmatpush1.msra.mxu0 %v474
  %2014 = vmatprep.subr.mxu0 %v479
  %2015 = vmatpush1.msra.mxu0 %v478
  %2016 = vmatprep.subr.mxu0 %v483
  %2017 = vmatpush1.msra.mxu0 %v482
  %2018 = vmatprep.subr.mxu0 %v487
  %2019 = vmatpush1.msra.mxu0 %v486
  %2020 = vmatprep.subr.mxu0 %v491
  %2021 = vmatpush1.msra.mxu0 %v490
  %2022 = vmatprep.subr.mxu0 %v495
  %2023 = vmatpush1.msra.mxu0 %v494
  %2024 = vmatprep.subr.mxu0 %v499
  %2025 = vmatpush1.msra.mxu0 %v498
  %2026 = vmatprep.subr.mxu0 %v503
  %2027 = vmatpush1.msra.mxu0 %v502
  %2028 = vmatprep.subr.mxu0 %v507
  %2029 = vmatpush1.msra.mxu0 %v506
  %2030 = vmatprep.subr.mxu0 %v511
  %2031 = vmatpush1.msra.mxu0 %v510
  %2032 = vmatprep.subr.mxu0 %v515
  %2033 = vmatpush1.msra.mxu0 %v514
  %2034 = vmatprep.subr.mxu0 %v519
  %2035 = vmatpush1.msra.mxu0 %v518
  %2036 = vmatprep.subr.mxu0 %v523
  %2037 = vmatpush1.msra.mxu0 %v522
  %2038 = vmatprep.subr.mxu0 0.0
  %2039 = vmatpush1.msra.mxu0 0.0
  %2040 = vmatprep.subr.mxu0 0.0
  %2041 = vmatpush1.msra.mxu0 0.0
  %2042 = vmatprep.subr.mxu0 0.0
  %2043 = vmatpush1.msra.mxu0 0.0
  %2044 = vmatprep.subr.mxu0 0.0
  %2045 = vmatpush1.msra.mxu0 0.0
  %2046 = vmatprep.subr.mxu0 0.0
  %2047 = vmatpush1.msra.mxu0 0.0
  %2048 = vmatprep.subr.mxu0 0.0
  %2049 = vmatpush1.msra.mxu0 0.0
  %2050 = vmatprep.subr.mxu0 0.0
  %2051 = vmatpush1.msra.mxu0 0.0
  %2052 = vmatprep.subr.mxu0 0.0
  %2053 = vmatpush1.msra.mxu0 0.0
  %2054 = vmatprep.subr.mxu0 0.0
  %2055 = vmatpush1.msra.mxu0 0.0
  %2056 = vmatprep.subr.mxu0 0.0
  %2057 = vmatpush1.msra.mxu0 0.0
  %2058 = vmatprep.subr.mxu0 0.0
  %2059 = vmatpush1.msra.mxu0 0.0
  %2060 = vmatprep.subr.mxu0 0.0
  %2061 = vmatpush1.msra.mxu0 0.0
  %2062 = vmatprep.subr.mxu0 0.0
  %2063 = vmatpush1.msra.mxu0 0.0
  %2064 = vmatprep.subr.mxu0 0.0
  %2065 = vmatpush1.msra.mxu0 0.0
  %2066 = vmatprep.subr.mxu0 0.0
  %2067 = vmatpush1.msra.mxu0 0.0
  %2068 = vmatprep.subr.mxu0 0.0
  %2069 = vmatpush1.msra.mxu0 0.0
  %2070 = vmatprep.mubr.f32.mxu0 0.0
  %2071 = vmatmul.mubr.f32.gmra.mrb[0].mxu0 %v1756
  %v2072 = vpop.f32.mrb[0].mxu0
  %v2073 = vadd.f32 0.0, %v2072
  %v2074 = vpop.f32.mrb[0].mxu0
  %v2075 = vadd.f32 0.0, %v2074
  %2076 = vdwg.mxu0
  %v2077 = vadd.f32 %v1931, %v2002
  %v2078 = vadd.f32 %v1932, %v2004
  %v2079 = vadd.f32 %v1933, %v2073
  %v2080 = vadd.f32 %v1934, %v2075
  %v2081 = vmul.f32 %v2077, 0.5
  %v2082 = vmul.f32 %v2078, 0.5
  %v2083 = vmul.f32 %v2079, 0.5
  %v2084 = vtanh.pop %v2081
  %v2085 = vtanh.pop %v2082
  %v2086 = vtanh.pop %v2083
  %v2087 = vmul.f32 %v2084, 0.5
  %v2088 = vmul.f32 %v2085, 0.5
  %v2089 = vmul.f32 %v2086, 0.5
  %v2090 = vadd.f32 %v2087, 0.5
  %v2091 = vadd.f32 %v2088, 0.5
  %v2092 = vadd.f32 %v2089, 0.5
  %v2093 = vtanh.pop %v2080
  %v2094 = vmul.f32 %v2091, %v1754
  %v2095 = vmul.f32 %v2090, %v2093
  %v2096 = vadd.f32 %v2094, %v2095
  %v2097 = vtanh.pop %v2096
  %v2098 = vmul.f32 %v2092, %v2097
  %v2099 = vsel %vm726, %v1924, 0
  %2101 = vmatprep.subr.mxu0 0.0
  %2102 = vmatpush1.msra.mxu0 %v540
  %2103 = vmatprep.subr.mxu0 0.0
  %2104 = vmatpush1.msra.mxu0 %v541
  %2105 = vmatprep.subr.mxu0 0.0
  %2106 = vmatpush1.msra.mxu0 %v542
  %2107 = vmatprep.subr.mxu0 0.0
  %2108 = vmatpush1.msra.mxu0 %v543
  %2109 = vmatprep.subr.mxu0 0.0
  %2110 = vmatpush1.msra.mxu0 0.0
  %2111 = vmatprep.subr.mxu0 0.0
  %2112 = vmatpush1.msra.mxu0 0.0
  %2113 = vmatprep.subr.mxu0 0.0
  %2114 = vmatpush1.msra.mxu0 0.0
  %2115 = vmatprep.subr.mxu0 0.0
  %2116 = vmatpush1.msra.mxu0 0.0
  %2117 = vmatprep.subr.mxu0 0.0
  %2118 = vmatpush1.msra.mxu0 0.0
  %2119 = vmatprep.subr.mxu0 0.0
  %2120 = vmatpush1.msra.mxu0 0.0
  %2121 = vmatprep.subr.mxu0 0.0
  %2122 = vmatpush1.msra.mxu0 0.0
  %2123 = vmatprep.subr.mxu0 0.0
  %2124 = vmatpush1.msra.mxu0 0.0
  %2125 = vmatprep.subr.mxu0 0.0
  %2126 = vmatpush1.msra.mxu0 0.0
  %2127 = vmatprep.subr.mxu0 0.0
  %2128 = vmatpush1.msra.mxu0 0.0
  %2129 = vmatprep.subr.mxu0 0.0
  %2130 = vmatpush1.msra.mxu0 0.0
  %2131 = vmatprep.subr.mxu0 0.0
  %2132 = vmatpush1.msra.mxu0 0.0
  %2133 = vmatprep.subr.mxu0 0.0
  %2134 = vmatpush1.msra.mxu0 0.0
  %2135 = vmatprep.subr.mxu0 0.0
  %2136 = vmatpush1.msra.mxu0 0.0
  %2137 = vmatprep.subr.mxu0 0.0
  %2138 = vmatpush1.msra.mxu0 0.0
  %2139 = vmatprep.subr.mxu0 0.0
  %2140 = vmatpush1.msra.mxu0 0.0
  %2141 = vmatprep.subr.mxu0 0.0
  %2142 = vmatpush1.msra.mxu0 0.0
  %2143 = vmatprep.subr.mxu0 0.0
  %2144 = vmatpush1.msra.mxu0 0.0
  %2145 = vmatprep.subr.mxu0 0.0
  %2146 = vmatpush1.msra.mxu0 0.0
  %2147 = vmatprep.subr.mxu0 0.0
  %2148 = vmatpush1.msra.mxu0 0.0
  %2149 = vmatprep.subr.mxu0 0.0
  %2150 = vmatpush1.msra.mxu0 0.0
  %2151 = vmatprep.subr.mxu0 0.0
  %2152 = vmatpush1.msra.mxu0 0.0
  %2153 = vmatprep.subr.mxu0 0.0
  %2154 = vmatpush1.msra.mxu0 0.0
  %2155 = vmatprep.subr.mxu0 0.0
  %2156 = vmatpush1.msra.mxu0 0.0
  %2157 = vmatprep.subr.mxu0 0.0
  %2158 = vmatpush1.msra.mxu0 0.0
  %2159 = vmatprep.subr.mxu0 0.0
  %2160 = vmatpush1.msra.mxu0 0.0
  %2161 = vmatprep.subr.mxu0 0.0
  %2162 = vmatpush1.msra.mxu0 0.0
  %2163 = vmatprep.subr.mxu0 0.0
  %2164 = vmatpush1.msra.mxu0 0.0
  %2165 = vmatprep.mubr.f32.mxu0 0.0
  %2166 = vmatmul.mubr.f32.gmra.mrb[0].mxu0 %v2099
  %v2167 = vpop.f32.mrb[0].mxu0
  %v2168 = vadd.f32 0.0, %v2167
  %v2169 = vpop.f32.mrb[0].mxu0
  %2170 = vdwg.mxu0
  %2171 = vmatprep.subr.mxu0 0.0
  %2172 = vmatpush1.msra.mxu0 %v524
  %2173 = vmatprep.subr.mxu0 0.0
  %2174 = vmatpush1.msra.mxu0 %v525
  %2175 = vmatprep.subr.mxu0 0.0
  %2176 = vmatpush1.msra.mxu0 %v526
  %2177 = vmatprep.subr.mxu0 0.0
  %2178 = vmatpush1.msra.mxu0 %v527
  %2179 = vmatprep.subr.mxu0 0.0
  %2180 = vmatpush1.msra.mxu0 %v528
  %2181 = vmatprep.subr.mxu0 0.0
  %2182 = vmatpush1.msra.mxu0 %v529
  %2183 = vmatprep.subr.mxu0 0.0
  %2184 = vmatpush1.msra.mxu0 %v530
  %2185 = vmatprep.subr.mxu0 0.0
  %2186 = vmatpush1.msra.mxu0 %v531
  %2187 = vmatprep.subr.mxu0 0.0
  %2188 = vmatpush1.msra.mxu0 %v532
  %2189 = vmatprep.subr.mxu0 0.0
  %2190 = vmatpush1.msra.mxu0 %v533
  %2191 = vmatprep.subr.mxu0 0.0
  %2192 = vmatpush1.msra.mxu0 %v534
  %2193 = vmatprep.subr.mxu0 0.0
  %2194 = vmatpush1.msra.mxu0 %v535
  %2195 = vmatprep.subr.mxu0 0.0
  %2196 = vmatpush1.msra.mxu0 %v536
  %2197 = vmatprep.subr.mxu0 0.0
  %2198 = vmatpush1.msra.mxu0 %v537
  %2199 = vmatprep.subr.mxu0 0.0
  %2200 = vmatpush1.msra.mxu0 %v538
  %2201 = vmatprep.subr.mxu0 0.0
  %2202 = vmatpush1.msra.mxu0 %v539
  %2203 = vmatprep.subr.mxu0 0.0
  %2204 = vmatpush1.msra.mxu0 0.0
  %2205 = vmatprep.subr.mxu0 0.0
  %2206 = vmatpush1.msra.mxu0 0.0
  %2207 = vmatprep.subr.mxu0 0.0
  %2208 = vmatpush1.msra.mxu0 0.0
  %2209 = vmatprep.subr.mxu0 0.0
  %2210 = vmatpush1.msra.mxu0 0.0
  %2211 = vmatprep.subr.mxu0 0.0
  %2212 = vmatpush1.msra.mxu0 0.0
  %2213 = vmatprep.subr.mxu0 0.0
  %2214 = vmatpush1.msra.mxu0 0.0
  %2215 = vmatprep.subr.mxu0 0.0
  %2216 = vmatpush1.msra.mxu0 0.0
  %2217 = vmatprep.subr.mxu0 0.0
  %2218 = vmatpush1.msra.mxu0 0.0
  %2219 = vmatprep.subr.mxu0 0.0
  %2220 = vmatpush1.msra.mxu0 0.0
  %2221 = vmatprep.subr.mxu0 0.0
  %2222 = vmatpush1.msra.mxu0 0.0
  %2223 = vmatprep.subr.mxu0 0.0
  %2224 = vmatpush1.msra.mxu0 0.0
  %2225 = vmatprep.subr.mxu0 0.0
  %2226 = vmatpush1.msra.mxu0 0.0
  %2227 = vmatprep.subr.mxu0 0.0
  %2228 = vmatpush1.msra.mxu0 0.0
  %2229 = vmatprep.subr.mxu0 0.0
  %2230 = vmatpush1.msra.mxu0 0.0
  %2231 = vmatprep.subr.mxu0 0.0
  %2232 = vmatpush1.msra.mxu0 0.0
  %2233 = vmatprep.subr.mxu0 0.0
  %2234 = vmatpush1.msra.mxu0 0.0
  %2235 = vmatprep.mubr.f32.mxu0 0.0
  %2236 = vmatmul.mubr.f32.gmra.mrb[0].mxu0 %v2098
  %v2237 = vpop.f32.mrb[0].mxu0
  %v2238 = vadd.f32 %v2168, %v2237
  %v2239 = vpop.f32.mrb[0].mxu0
  %2240 = vdwg.mxu0
  %v2241 = vadd.f32 %v2238, %v549
  %v2242 = vmul.f32 %v2241, 0.5
  %v2243 = vtanh.pop %v2242
  %v2244 = vmul.f32 %v2243, 0.5
  %v2245 = vadd.f32 %v2244, 0.5
  %v2246 = vtanh.pop %v2241
  %v2247 = vmul.f32 %v2245, %v1915
  %2249 = vrot.lane.b32.xlu0 %v2246, 32
  %v2250 = vpop.permute.xlu0 %2249
  %v2252 = vmul.f32 %v2245, %v2250
  %2254 = vrot.lane.b32.xlu0 %v2252, 32
  %v2255 = vpop.permute.xlu0 %2254
  %v2257 = vadd.f32 %v2247, %v2255
  %v2258 = vtanh.pop %v2257
  %2260 = vrot.lane.b32.xlu0 %v2258, 32
  %v2261 = vpop.permute.xlu0 %2260
  %v2263 = vmul.f32 %v2245, %v2261
  %2265 = vrot.lane.b32.xlu0 %v2263, 64
  %v2266 = vpop.permute.xlu0 %2265
  %s2268 = scalar_lea.vmem %s7, 32
  %2269 = vst.msk [vmem:[%s2268] sm:$0xff] %vm726, %v2266
  %s2270 = smul.u32 5, 4
  %s2271 = smul.addr %s2270, 8
  %s2272 = scalar_lea.vmem [#allocation2], %s2271
  %v2273 = vld [vmem:[%s2272] sm:$0xff]
  %v2274 = vld [vmem:[%s2272 + $0x8] sm:$0xff]
  %v2275 = vld [vmem:[%s2272 + $0x10] sm:$0xff]
  %v2276 = vld [vmem:[%s2272 + $0x18] sm:$0xff]
  %2277 = vmatprep.subr.mxu0 %v461
  %2278 = vmatpush1.msra.mxu0 %v460
  %2279 = vmatprep.subr.mxu0 %v465
  %2280 = vmatpush1.msra.mxu0 %v464
  %2281 = vmatprep.subr.mxu0 %v469
  %2282 = vmatpush1.msra.mxu0 %v468
  %2283 = vmatprep.subr.mxu0 %v473
  %2284 = vmatpush1.msra.mxu0 %v472
  %2285 = vmatprep.subr.mxu0 %v477
  %2286 = vmatpush1.msra.mxu0 %v476
  %2287 = vmatprep.subr.mxu0 %v481
  %2288 = vmatpush1.msra.mxu0 %v480
  %2289 = vmatprep.subr.mxu0 %v485
  %2290 = vmatpush1.msra.mxu0 %v484
  %2291 = vmatprep.subr.mxu0 %v489
  %2292 = vmatpush1.msra.mxu0 %v488
  %2293 = vmatprep.subr.mxu0 %v493
  %2294 = vmatpush1.msra.mxu0 %v492
  %2295 = vmatprep.subr.mxu0 %v497
  %2296 = vmatpush1.msra.mxu0 %v496
  %2297 = vmatprep.subr.mxu0 %v501
  %2298 = vmatpush1.msra.mxu0 %v500
  %2299 = vmatprep.subr.mxu0 %v505
  %2300 = vmatpush1.msra.mxu0 %v504
  %2301 = vmatprep.subr.mxu0 %v509
  %2302 = vmatpush1.msra.mxu0 %v508
  %2303 = vmatprep.subr.mxu0 %v513
  %2304 = vmatpush1.msra.mxu0 %v512
  %2305 = vmatprep.subr.mxu0 %v517
  %2306 = vmatpush1.msra.mxu0 %v516
  %2307 = vmatprep.subr.mxu0 %v521
  %2308 = vmatpush1.msra.mxu0 %v520
  %2309 = vmatprep.subr.mxu0 0.0
  %2310 = vmatpush1.msra.mxu0 0.0
  %2311 = vmatprep.subr.mxu0 0.0
  %2312 = vmatpush1.msra.mxu0 0.0
  %2313 = vmatprep.subr.mxu0 0.0
  %2314 = vmatpush1.msra.mxu0 0.0
  %2315 = vmatprep.subr.mxu0 0.0
  %2316 = vmatpush1.msra.mxu0 0.0
  %2317 = vmatprep.subr.mxu0 0.0
  %2318 = vmatpush1.msra.mxu0 0.0
  %2319 = vmatprep.subr.mxu0 0.0
  %2320 = vmatpush1.msra.mxu0 0.0
  %2321 = vmatprep.subr.mxu0 0.0
  %2322 = vmatpush1.msra.mxu0 0.0
  %2323 = vmatprep.subr.mxu0 0.0
  %2324 = vmatpush1.msra.mxu0 0.0
  %2325 = vmatprep.subr.mxu0 0.0
  %2326 = vmatpush1.msra.mxu0 0.0
  %2327 = vmatprep.subr.mxu0 0.0
  %2328 = vmatpush1.msra.mxu0 0.0
  %2329 = vmatprep.subr.mxu0 0.0
  %2330 = vmatpush1.msra.mxu0 0.0
  %2331 = vmatprep.subr.mxu0 0.0
  %2332 = vmatpush1.msra.mxu0 0.0
  %2333 = vmatprep.subr.mxu0 0.0
  %2334 = vmatpush1.msra.mxu0 0.0
  %2335 = vmatprep.subr.mxu0 0.0
  %2336 = vmatpush1.msra.mxu0 0.0
  %2337 = vmatprep.subr.mxu0 0.0
  %2338 = vmatpush1.msra.mxu0 0.0
  %2339 = vmatprep.subr.mxu0 0.0
  %2340 = vmatpush1.msra.mxu0 0.0
  %2341 = vmatprep.mubr.f32.mxu0 0.0
  %2342 = vmatmul.mubr.f32.gmra.mrb[0].mxu0 %v2098
  %v2343 = vpop.f32.mrb[0].mxu0
  %v2344 = vadd.f32 0.0, %v2343
  %v2345 = vpop.f32.mrb[0].mxu0
  %v2346 = vadd.f32 0.0, %v2345
  %2347 = vdwg.mxu0
  %2348 = vmatprep.subr.mxu0 %v463
  %2349 = vmatpush1.msra.mxu0 %v462
  %2350 = vmatprep.subr.mxu0 %v467
  %2351 = vmatpush1.msra.mxu0 %v466
  %2352 = vmatprep.subr.mxu0 %v471
  %2353 = vmatpush1.msra.mxu0 %v470
  %2354 = vmatprep.subr.mxu0 %v475
  %2355 = vmatpush1.msra.mxu0 %v474
  %2356 = vmatprep.subr.mxu0 %v479
  %2357 = vmatpush1.msra.mxu0 %v478
  %2358 = vmatprep.subr.mxu0 %v483
  %2359 = vmatpush1.msra.mxu0 %v482
  %2360 = vmatprep.subr.mxu0 %v487
  %2361 = vmatpush1.msra.mxu0 %v486
  %2362 = vmatprep.subr.mxu0 %v491
  %2363 = vmatpush1.msra.mxu0 %v490
  %2364 = vmatprep.subr.mxu0 %v495
  %2365 = vmatpush1.msra.mxu0 %v494
  %2366 = vmatprep.subr.mxu0 %v499
  %2367 = vmatpush1.msra.mxu0 %v498
  %2368 = vmatprep.subr.mxu0 %v503
  %2369 = vmatpush1.msra.mxu0 %v502
  %2370 = vmatprep.subr.mxu0 %v507
  %2371 = vmatpush1.msra.mxu0 %v506
  %2372 = vmatprep.subr.mxu0 %v511
  %2373 = vmatpush1.msra.mxu0 %v510
  %2374 = vmatprep.subr.mxu0 %v515
  %2375 = vmatpush1.msra.mxu0 %v514
  %2376 = vmatprep.subr.mxu0 %v519
  %2377 = vmatpush1.msra.mxu0 %v518
  %2378 = vmatprep.subr.mxu0 %v523
  %2379 = vmatpush1.msra.mxu0 %v522
  %2380 = vmatprep.subr.mxu0 0.0
  %2381 = vmatpush1.msra.mxu0 0.0
  %2382 = vmatprep.subr.mxu0 0.0
  %2383 = vmatpush1.msra.mxu0 0.0
  %2384 = vmatprep.subr.mxu0 0.0
  %2385 = vmatpush1.msra.mxu0 0.0
  %2386 = vmatprep.subr.mxu0 0.0
  %2387 = vmatpush1.msra.mxu0 0.0
  %2388 = vmatprep.subr.mxu0 0.0
  %2389 = vmatpush1.msra.mxu0 0.0
  %2390 = vmatprep.subr.mxu0 0.0
  %2391 = vmatpush1.msra.mxu0 0.0
  %2392 = vmatprep.subr.mxu0 0.0
  %2393 = vmatpush1.msra.mxu0 0.0
  %2394 = vmatprep.subr.mxu0 0.0
  %2395 = vmatpush1.msra.mxu0 0.0
  %2396 = vmatprep.subr.mxu0 0.0
  %2397 = vmatpush1.msra.mxu0 0.0
  %2398 = vmatprep.subr.mxu0 0.0
  %2399 = vmatpush1.msra.mxu0 0.0
  %2400 = vmatprep.subr.mxu0 0.0
  %2401 = vmatpush1.msra.mxu0 0.0
  %2402 = vmatprep.subr.mxu0 0.0
  %2403 = vmatpush1.msra.mxu0 0.0
  %2404 = vmatprep.subr.mxu0 0.0
  %2405 = vmatpush1.msra.mxu0 0.0
  %2406 = vmatprep.subr.mxu0 0.0
  %2407 = vmatpush1.msra.mxu0 0.0
  %2408 = vmatprep.subr.mxu0 0.0
  %2409 = vmatpush1.msra.mxu0 0.0
  %2410 = vmatprep.subr.mxu0 0.0
  %2411 = vmatpush1.msra.mxu0 0.0
  %2412 = vmatprep.mubr.f32.mxu0 0.0
  %2413 = vmatmul.mubr.f32.gmra.mrb[0].mxu0 %v2098
  %v2414 = vpop.f32.mrb[0].mxu0
  %v2415 = vadd.f32 0.0, %v2414
  %v2416 = vpop.f32.mrb[0].mxu0
  %v2417 = vadd.f32 0.0, %v2416
  %2418 = vdwg.mxu0
  %v2419 = vadd.f32 %v2273, %v2344
  %v2420 = vadd.f32 %v2274, %v2346
  %v2421 = vadd.f32 %v2275, %v2415
  %v2422 = vadd.f32 %v2276, %v2417
  %v2423 = vmul.f32 %v2419, 0.5
  %v2424 = vmul.f32 %v2420, 0.5
  %v2425 = vmul.f32 %v2421, 0.5
  %v2426 = vtanh.pop %v2423
  %v2427 = vtanh.pop %v2424
  %v2428 = vtanh.pop %v2425
  %v2429 = vmul.f32 %v2426, 0.5
  %v2430 = vmul.f32 %v2427, 0.5
  %v2431 = vmul.f32 %v2428, 0.5
  %v2432 = vadd.f32 %v2429, 0.5
  %v2433 = vadd.f32 %v2430, 0.5
  %v2434 = vadd.f32 %v2431, 0.5
  %v2435 = vtanh.pop %v2422
  %v2436 = vmul.f32 %v2433, %v2096
  %v2437 = vmul.f32 %v2432, %v2435
  %v2438 = vadd.f32 %v2436, %v2437
  %v2439 = vtanh.pop %v2438
  %v2440 = vmul.f32 %v2434, %v2439
  %v2441 = vsel %vm726, %v2266, 0
  %2443 = vmatprep.subr.mxu0 0.0
  %2444 = vmatpush1.msra.mxu0 %v540
  %2445 = vmatprep.subr.mxu0 0.0
  %2446 = vmatpush1.msra.mxu0 %v541
  %2447 = vmatprep.subr.mxu0 0.0
  %2448 = vmatpush1.msra.mxu0 %v542
  %2449 = vmatprep.subr.mxu0 0.0
  %2450 = vmatpush1.msra.mxu0 %v543
  %2451 = vmatprep.subr.mxu0 0.0
  %2452 = vmatpush1.msra.mxu0 0.0
  %2453 = vmatprep.subr.mxu0 0.0
  %2454 = vmatpush1.msra.mxu0 0.0
  %2455 = vmatprep.subr.mxu0 0.0
  %2456 = vmatpush1.msra.mxu0 0.0
  %2457 = vmatprep.subr.mxu0 0.0
  %2458 = vmatpush1.msra.mxu0 0.0
  %2459 = vmatprep.subr.mxu0 0.0
  %2460 = vmatpush1.msra.mxu0 0.0
  %2461 = vmatprep.subr.mxu0 0.0
  %2462 = vmatpush1.msra.mxu0 0.0
  %2463 = vmatprep.subr.mxu0 0.0
  %2464 = vmatpush1.msra.mxu0 0.0
  %2465 = vmatprep.subr.mxu0 0.0
  %2466 = vmatpush1.msra.mxu0 0.0
  %2467 = vmatprep.subr.mxu0 0.0
  %2468 = vmatpush1.msra.mxu0 0.0
  %2469 = vmatprep.subr.mxu0 0.0
  %2470 = vmatpush1.msra.mxu0 0.0
  %2471 = vmatprep.subr.mxu0 0.0
  %2472 = vmatpush1.msra.mxu0 0.0
  %2473 = vmatprep.subr.mxu0 0.0
  %2474 = vmatpush1.msra.mxu0 0.0
  %2475 = vmatprep.subr.mxu0 0.0
  %2476 = vmatpush1.msra.mxu0 0.0
  %2477 = vmatprep.subr.mxu0 0.0
  %2478 = vmatpush1.msra.mxu0 0.0
  %2479 = vmatprep.subr.mxu0 0.0
  %2480 = vmatpush1.msra.mxu0 0.0
  %2481 = vmatprep.subr.mxu0 0.0
  %2482 = vmatpush1.msra.mxu0 0.0
  %2483 = vmatprep.subr.mxu0 0.0
  %2484 = vmatpush1.msra.mxu0 0.0
  %2485 = vmatprep.subr.mxu0 0.0
  %2486 = vmatpush1.msra.mxu0 0.0
  %2487 = vmatprep.subr.mxu0 0.0
  %2488 = vmatpush1.msra.mxu0 0.0
  %2489 = vmatprep.subr.mxu0 0.0
  %2490 = vmatpush1.msra.mxu0 0.0
  %2491 = vmatprep.subr.mxu0 0.0
  %2492 = vmatpush1.msra.mxu0 0.0
  %2493 = vmatprep.subr.mxu0 0.0
  %2494 = vmatpush1.msra.mxu0 0.0
  %2495 = vmatprep.subr.mxu0 0.0
  %2496 = vmatpush1.msra.mxu0 0.0
  %2497 = vmatprep.subr.mxu0 0.0
  %2498 = vmatpush1.msra.mxu0 0.0
  %2499 = vmatprep.subr.mxu0 0.0
  %2500 = vmatpush1.msra.mxu0 0.0
  %2501 = vmatprep.subr.mxu0 0.0
  %2502 = vmatpush1.msra.mxu0 0.0
  %2503 = vmatprep.subr.mxu0 0.0
  %2504 = vmatpush1.msra.mxu0 0.0
  %2505 = vmatprep.subr.mxu0 0.0
  %2506 = vmatpush1.msra.mxu0 0.0
  %2507 = vmatprep.mubr.f32.mxu0 0.0
  %2508 = vmatmul.mubr.f32.gmra.mrb[0].mxu0 %v2441
  %v2509 = vpop.f32.mrb[0].mxu0
  %v2510 = vadd.f32 0.0, %v2509
  %v2511 = vpop.f32.mrb[0].mxu0
  %2512 = vdwg.mxu0
  %2513 = vmatprep.subr.mxu0 0.0
  %2514 = vmatpush1.msra.mxu0 %v524
  %2515 = vmatprep.subr.mxu0 0.0
  %2516 = vmatpush1.msra.mxu0 %v525
  %2517 = vmatprep.subr.mxu0 0.0
  %2518 = vmatpush1.msra.mxu0 %v526
  %2519 = vmatprep.subr.mxu0 0.0
  %2520 = vmatpush1.msra.mxu0 %v527
  %2521 = vmatprep.subr.mxu0 0.0
  %2522 = vmatpush1.msra.mxu0 %v528
  %2523 = vmatprep.subr.mxu0 0.0
  %2524 = vmatpush1.msra.mxu0 %v529
  %2525 = vmatprep.subr.mxu0 0.0
  %2526 = vmatpush1.msra.mxu0 %v530
  %2527 = vmatprep.subr.mxu0 0.0
  %2528 = vmatpush1.msra.mxu0 %v531
  %2529 = vmatprep.subr.mxu0 0.0
  %2530 = vmatpush1.msra.mxu0 %v532
  %2531 = vmatprep.subr.mxu0 0.0
  %2532 = vmatpush1.msra.mxu0 %v533
  %2533 = vmatprep.subr.mxu0 0.0
  %2534 = vmatpush1.msra.mxu0 %v534
  %2535 = vmatprep.subr.mxu0 0.0
  %2536 = vmatpush1.msra.mxu0 %v535
  %2537 = vmatprep.subr.mxu0 0.0
  %2538 = vmatpush1.msra.mxu0 %v536
  %2539 = vmatprep.subr.mxu0 0.0
  %2540 = vmatpush1.msra.mxu0 %v537
  %2541 = vmatprep.subr.mxu0 0.0
  %2542 = vmatpush1.msra.mxu0 %v538
  %2543 = vmatprep.subr.mxu0 0.0
  %2544 = vmatpush1.msra.mxu0 %v539
  %2545 = vmatprep.subr.mxu0 0.0
  %2546 = vmatpush1.msra.mxu0 0.0
  %2547 = vmatprep.subr.mxu0 0.0
  %2548 = vmatpush1.msra.mxu0 0.0
  %2549 = vmatprep.subr.mxu0 0.0
  %2550 = vmatpush1.msra.mxu0 0.0
  %2551 = vmatprep.subr.mxu0 0.0
  %2552 = vmatpush1.msra.mxu0 0.0
  %2553 = vmatprep.subr.mxu0 0.0
  %2554 = vmatpush1.msra.mxu0 0.0
  %2555 = vmatprep.subr.mxu0 0.0
  %2556 = vmatpush1.msra.mxu0 0.0
  %2557 = vmatprep.subr.mxu0 0.0
  %2558 = vmatpush1.msra.mxu0 0.0
  %2559 = vmatprep.subr.mxu0 0.0
  %2560 = vmatpush1.msra.mxu0 0.0
  %2561 = vmatprep.subr.mxu0 0.0
  %2562 = vmatpush1.msra.mxu0 0.0
  %2563 = vmatprep.subr.mxu0 0.0
  %2564 = vmatpush1.msra.mxu0 0.0
  %2565 = vmatprep.subr.mxu0 0.0
  %2566 = vmatpush1.msra.mxu0 0.0
  %2567 = vmatprep.subr.mxu0 0.0
  %2568 = vmatpush1.msra.mxu0 0.0
  %2569 = vmatprep.subr.mxu0 0.0
  %2570 = vmatpush1.msra.mxu0 0.0
  %2571 = vmatprep.subr.mxu0 0.0
  %2572 = vmatpush1.msra.mxu0 0.0
  %2573 = vmatprep.subr.mxu0 0.0
  %2574 = vmatpush1.msra.mxu0 0.0
  %2575 = vmatprep.subr.mxu0 0.0
  %2576 = vmatpush1.msra.mxu0 0.0
  %2577 = vmatprep.mubr.f32.mxu0 0.0
  %2578 = vmatmul.mubr.f32.gmra.mrb[0].mxu0 %v2440
  %v2579 = vpop.f32.mrb[0].mxu0
  %v2580 = vadd.f32 %v2510, %v2579
  %v2581 = vpop.f32.mrb[0].mxu0
  %2582 = vdwg.mxu0
  %v2583 = vadd.f32 %v2580, %v549
  %v2584 = vmul.f32 %v2583, 0.5
  %v2585 = vtanh.pop %v2584
  %v2586 = vmul.f32 %v2585, 0.5
  %v2587 = vadd.f32 %v2586, 0.5
  %v2588 = vtanh.pop %v2583
  %v2589 = vmul.f32 %v2587, %v2257
  %2591 = vrot.lane.b32.xlu0 %v2588, 32
  %v2592 = vpop.permute.xlu0 %2591
  %v2594 = vmul.f32 %v2587, %v2592
  %2596 = vrot.lane.b32.xlu0 %v2594, 32
  %v2597 = vpop.permute.xlu0 %2596
  %v2599 = vadd.f32 %v2589, %v2597
  %v2600 = vtanh.pop %v2599
  %2602 = vrot.lane.b32.xlu0 %v2600, 32
  %v2603 = vpop.permute.xlu0 %2602
  %v2605 = vmul.f32 %v2587, %v2603
  %2607 = vrot.lane.b32.xlu0 %v2605, 64
  %v2608 = vpop.permute.xlu0 %2607
  %s2610 = scalar_lea.vmem %s7, 40
  %2611 = vst.msk [vmem:[%s2610] sm:$0xff] %vm726, %v2608
  %s2612 = smul.u32 6, 4
  %s2613 = smul.addr %s2612, 8
  %s2614 = scalar_lea.vmem [#allocation2], %s2613
  %v2615 = vld [vmem:[%s2614] sm:$0xff]
  %v2616 = vld [vmem:[%s2614 + $0x8] sm:$0xff]
  %v2617 = vld [vmem:[%s2614 + $0x10] sm:$0xff]
  %v2618 = vld [vmem:[%s2614 + $0x18] sm:$0xff]
  %2619 = vmatprep.subr.mxu0 %v461
  %2620 = vmatpush1.msra.mxu0 %v460
  %2621 = vmatprep.subr.mxu0 %v465
  %2622 = vmatpush1.msra.mxu0 %v464
  %2623 = vmatprep.subr.mxu0 %v469
  %2624 = vmatpush1.msra.mxu0 %v468
  %2625 = vmatprep.subr.mxu0 %v473
  %2626 = vmatpush1.msra.mxu0 %v472
  %2627 = vmatprep.subr.mxu0 %v477
  %2628 = vmatpush1.msra.mxu0 %v476
  %2629 = vmatprep.subr.mxu0 %v481
  %2630 = vmatpush1.msra.mxu0 %v480
  %2631 = vmatprep.subr.mxu0 %v485
  %2632 = vmatpush1.msra.mxu0 %v484
  %2633 = vmatprep.subr.mxu0 %v489
  %2634 = vmatpush1.msra.mxu0 %v488
  %2635 = vmatprep.subr.mxu0 %v493
  %2636 = vmatpush1.msra.mxu0 %v492
  %2637 = vmatprep.subr.mxu0 %v497
  %2638 = vmatpush1.msra.mxu0 %v496
  %2639 = vmatprep.subr.mxu0 %v501
  %2640 = vmatpush1.msra.mxu0 %v500
  %2641 = vmatprep.subr.mxu0 %v505
  %2642 = vmatpush1.msra.mxu0 %v504
  %2643 = vmatprep.subr.mxu0 %v509
  %2644 = vmatpush1.msra.mxu0 %v508
  %2645 = vmatprep.subr.mxu0 %v513
  %2646 = vmatpush1.msra.mxu0 %v512
  %2647 = vmatprep.subr.mxu0 %v517
  %2648 = vmatpush1.msra.mxu0 %v516
  %2649 = vmatprep.subr.mxu0 %v521
  %2650 = vmatpush1.msra.mxu0 %v520
  %2651 = vmatprep.subr.mxu0 0.0
  %2652 = vmatpush1.msra.mxu0 0.0
  %2653 = vmatprep.subr.mxu0 0.0
  %2654 = vmatpush1.msra.mxu0 0.0
  %2655 = vmatprep.subr.mxu0 0.0
  %2656 = vmatpush1.msra.mxu0 0.0
  %2657 = vmatprep.subr.mxu0 0.0
  %2658 = vmatpush1.msra.mxu0 0.0
  %2659 = vmatprep.subr.mxu0 0.0
  %2660 = vmatpush1.msra.mxu0 0.0
  %2661 = vmatprep.subr.mxu0 0.0
  %2662 = vmatpush1.msra.mxu0 0.0
  %2663 = vmatprep.subr.mxu0 0.0
  %2664 = vmatpush1.msra.mxu0 0.0
  %2665 = vmatprep.subr.mxu0 0.0
  %2666 = vmatpush1.msra.mxu0 0.0
  %2667 = vmatprep.subr.mxu0 0.0
  %2668 = vmatpush1.msra.mxu0 0.0
  %2669 = vmatprep.subr.mxu0 0.0
  %2670 = vmatpush1.msra.mxu0 0.0
  %2671 = vmatprep.subr.mxu0 0.0
  %2672 = vmatpush1.msra.mxu0 0.0
  %2673 = vmatprep.subr.mxu0 0.0
  %2674 = vmatpush1.msra.mxu0 0.0
  %2675 = vmatprep.subr.mxu0 0.0
  %2676 = vmatpush1.msra.mxu0 0.0
  %2677 = vmatprep.subr.mxu0 0.0
  %2678 = vmatpush1.msra.mxu0 0.0
  %2679 = vmatprep.subr.mxu0 0.0
  %2680 = vmatpush1.msra.mxu0 0.0
  %2681 = vmatprep.subr.mxu0 0.0
  %2682 = vmatpush1.msra.mxu0 0.0
  %2683 = vmatprep.mubr.f32.mxu0 0.0
  %2684 = vmatmul.mubr.f32.gmra.mrb[0].mxu0 %v2440
  %v2685 = vpop.f32.mrb[0].mxu0
  %v2686 = vadd.f32 0.0, %v2685
  %v2687 = vpop.f32.mrb[0].mxu0
  %v2688 = vadd.f32 0.0, %v2687
  %2689 = vdwg.mxu0
  %2690 = vmatprep.subr.mxu0 %v463
  %2691 = vmatpush1.msra.mxu0 %v462
  %2692 = vmatprep.subr.mxu0 %v467
  %2693 = vmatpush1.msra.mxu0 %v466
  %2694 = vmatprep.subr.mxu0 %v471
  %2695 = vmatpush1.msra.mxu0 %v470
  %2696 = vmatprep.subr.mxu0 %v475
  %2697 = vmatpush1.msra.mxu0 %v474
  %2698 = vmatprep.subr.mxu0 %v479
  %2699 = vmatpush1.msra.mxu0 %v478
  %2700 = vmatprep.subr.mxu0 %v483
  %2701 = vmatpush1.msra.mxu0 %v482
  %2702 = vmatprep.subr.mxu0 %v487
  %2703 = vmatpush1.msra.mxu0 %v486
  %2704 = vmatprep.subr.mxu0 %v491
  %2705 = vmatpush1.msra.mxu0 %v490
  %2706 = vmatprep.subr.mxu0 %v495
  %2707 = vmatpush1.msra.mxu0 %v494
  %2708 = vmatprep.subr.mxu0 %v499
  %2709 = vmatpush1.msra.mxu0 %v498
  %2710 = vmatprep.subr.mxu0 %v503
  %2711 = vmatpush1.msra.mxu0 %v502
  %2712 = vmatprep.subr.mxu0 %v507
  %2713 = vmatpush1.msra.mxu0 %v506
  %2714 = vmatprep.subr.mxu0 %v511
  %2715 = vmatpush1.msra.mxu0 %v510
  %2716 = vmatprep.subr.mxu0 %v515
  %2717 = vmatpush1.msra.mxu0 %v514
  %2718 = vmatprep.subr.mxu0 %v519
  %2719 = vmatpush1.msra.mxu0 %v518
  %2720 = vmatprep.subr.mxu0 %v523
  %2721 = vmatpush1.msra.mxu0 %v522
  %2722 = vmatprep.subr.mxu0 0.0
  %2723 = vmatpush1.msra.mxu0 0.0
  %2724 = vmatprep.subr.mxu0 0.0
  %2725 = vmatpush1.msra.mxu0 0.0
  %2726 = vmatprep.subr.mxu0 0.0
  %2727 = vmatpush1.msra.mxu0 0.0
  %2728 = vmatprep.subr.mxu0 0.0
  %2729 = vmatpush1.msra.mxu0 0.0
  %2730 = vmatprep.subr.mxu0 0.0
  %2731 = vmatpush1.msra.mxu0 0.0
  %2732 = vmatprep.subr.mxu0 0.0
  %2733 = vmatpush1.msra.mxu0 0.0
  %2734 = vmatprep.subr.mxu0 0.0
  %2735 = vmatpush1.msra.mxu0 0.0
  %2736 = vmatprep.subr.mxu0 0.0
  %2737 = vmatpush1.msra.mxu0 0.0
  %2738 = vmatprep.subr.mxu0 0.0
  %2739 = vmatpush1.msra.mxu0 0.0
  %2740 = vmatprep.subr.mxu0 0.0
  %2741 = vmatpush1.msra.mxu0 0.0
  %2742 = vmatprep.subr.mxu0 0.0
  %2743 = vmatpush1.msra.mxu0 0.0
  %2744 = vmatprep.subr.mxu0 0.0
  %2745 = vmatpush1.msra.mxu0 0.0
  %2746 = vmatprep.subr.mxu0 0.0
  %2747 = vmatpush1.msra.mxu0 0.0
  %2748 = vmatprep.subr.mxu0 0.0
  %2749 = vmatpush1.msra.mxu0 0.0
  %2750 = vmatprep.subr.mxu0 0.0
  %2751 = vmatpush1.msra.mxu0 0.0
  %2752 = vmatprep.subr.mxu0 0.0
  %2753 = vmatpush1.msra.mxu0 0.0
  %2754 = vmatprep.mubr.f32.mxu0 0.0
  %2755 = vmatmul.mubr.f32.gmra.mrb[0].mxu0 %v2440
  %v2756 = vpop.f32.mrb[0].mxu0
  %v2757 = vadd.f32 0.0, %v2756
  %v2758 = vpop.f32.mrb[0].mxu0
  %v2759 = vadd.f32 0.0, %v2758
  %2760 = vdwg.mxu0
  %v2761 = vadd.f32 %v2615, %v2686
  %v2762 = vadd.f32 %v2616, %v2688
  %v2763 = vadd.f32 %v2617, %v2757
  %v2764 = vadd.f32 %v2618, %v2759
  %v2765 = vmul.f32 %v2761, 0.5
  %v2766 = vmul.f32 %v2762, 0.5
  %v2767 = vmul.f32 %v2763, 0.5
  %v2768 = vtanh.pop %v2765
  %v2769 = vtanh.pop %v2766
  %v2770 = vtanh.pop %v2767
  %v2771 = vmul.f32 %v2768, 0.5
  %v2772 = vmul.f32 %v2769, 0.5
  %v2773 = vmul.f32 %v2770, 0.5
  %v2774 = vadd.f32 %v2771, 0.5
  %v2775 = vadd.f32 %v2772, 0.5
  %v2776 = vadd.f32 %v2773, 0.5
  %v2777 = vtanh.pop %v2764
  %v2778 = vmul.f32 %v2775, %v2438
  %v2779 = vmul.f32 %v2774, %v2777
  %v2780 = vadd.f32 %v2778, %v2779
  %v2781 = vtanh.pop %v2780
  %v2782 = vmul.f32 %v2776, %v2781
  %v2783 = vsel %vm726, %v2608, 0
  %2785 = vmatprep.subr.mxu0 0.0
  %2786 = vmatpush1.msra.mxu0 %v540
  %2787 = vmatprep.subr.mxu0 0.0
  %2788 = vmatpush1.msra.mxu0 %v541
  %2789 = vmatprep.subr.mxu0 0.0
  %2790 = vmatpush1.msra.mxu0 %v542
  %2791 = vmatprep.subr.mxu0 0.0
  %2792 = vmatpush1.msra.mxu0 %v543
  %2793 = vmatprep.subr.mxu0 0.0
  %2794 = vmatpush1.msra.mxu0 0.0
  %2795 = vmatprep.subr.mxu0 0.0
  %2796 = vmatpush1.msra.mxu0 0.0
  %2797 = vmatprep.subr.mxu0 0.0
  %2798 = vmatpush1.msra.mxu0 0.0
  %2799 = vmatprep.subr.mxu0 0.0
  %2800 = vmatpush1.msra.mxu0 0.0
  %2801 = vmatprep.subr.mxu0 0.0
  %2802 = vmatpush1.msra.mxu0 0.0
  %2803 = vmatprep.subr.mxu0 0.0
  %2804 = vmatpush1.msra.mxu0 0.0
  %2805 = vmatprep.subr.mxu0 0.0
  %2806 = vmatpush1.msra.mxu0 0.0
  %2807 = vmatprep.subr.mxu0 0.0
  %2808 = vmatpush1.msra.mxu0 0.0
  %2809 = vmatprep.subr.mxu0 0.0
  %2810 = vmatpush1.msra.mxu0 0.0
  %2811 = vmatprep.subr.mxu0 0.0
  %2812 = vmatpush1.msra.mxu0 0.0
  %2813 = vmatprep.subr.mxu0 0.0
  %2814 = vmatpush1.msra.mxu0 0.0
  %2815 = vmatprep.subr.mxu0 0.0
  %2816 = vmatpush1.msra.mxu0 0.0
  %2817 = vmatprep.subr.mxu0 0.0
  %2818 = vmatpush1.msra.mxu0 0.0
  %2819 = vmatprep.subr.mxu0 0.0
  %2820 = vmatpush1.msra.mxu0 0.0
  %2821 = vmatprep.subr.mxu0 0.0
  %2822 = vmatpush1.msra.mxu0 0.0
  %2823 = vmatprep.subr.mxu0 0.0
  %2824 = vmatpush1.msra.mxu0 0.0
  %2825 = vmatprep.subr.mxu0 0.0
  %2826 = vmatpush1.msra.mxu0 0.0
  %2827 = vmatprep.subr.mxu0 0.0
  %2828 = vmatpush1.msra.mxu0 0.0
  %2829 = vmatprep.subr.mxu0 0.0
  %2830 = vmatpush1.msra.mxu0 0.0
  %2831 = vmatprep.subr.mxu0 0.0
  %2832 = vmatpush1.msra.mxu0 0.0
  %2833 = vmatprep.subr.mxu0 0.0
  %2834 = vmatpush1.msra.mxu0 0.0
  %2835 = vmatprep.subr.mxu0 0.0
  %2836 = vmatpush1.msra.mxu0 0.0
  %2837 = vmatprep.subr.mxu0 0.0
  %2838 = vmatpush1.msra.mxu0 0.0
  %2839 = vmatprep.subr.mxu0 0.0
  %2840 = vmatpush1.msra.mxu0 0.0
  %2841 = vmatprep.subr.mxu0 0.0
  %2842 = vmatpush1.msra.mxu0 0.0
  %2843 = vmatprep.subr.mxu0 0.0
  %2844 = vmatpush1.msra.mxu0 0.0
  %2845 = vmatprep.subr.mxu0 0.0
  %2846 = vmatpush1.msra.mxu0 0.0
  %2847 = vmatprep.subr.mxu0 0.0
  %2848 = vmatpush1.msra.mxu0 0.0
  %2849 = vmatprep.mubr.f32.mxu0 0.0
  %2850 = vmatmul.mubr.f32.gmra.mrb[0].mxu0 %v2783
  %v2851 = vpop.f32.mrb[0].mxu0
  %v2852 = vadd.f32 0.0, %v2851
  %v2853 = vpop.f32.mrb[0].mxu0
  %2854 = vdwg.mxu0
  %2855 = vmatprep.subr.mxu0 0.0
  %2856 = vmatpush1.msra.mxu0 %v524
  %2857 = vmatprep.subr.mxu0 0.0
  %2858 = vmatpush1.msra.mxu0 %v525
  %2859 = vmatprep.subr.mxu0 0.0
  %2860 = vmatpush1.msra.mxu0 %v526
  %2861 = vmatprep.subr.mxu0 0.0
  %2862 = vmatpush1.msra.mxu0 %v527
  %2863 = vmatprep.subr.mxu0 0.0
  %2864 = vmatpush1.msra.mxu0 %v528
  %2865 = vmatprep.subr.mxu0 0.0
  %2866 = vmatpush1.msra.mxu0 %v529
  %2867 = vmatprep.subr.mxu0 0.0
  %2868 = vmatpush1.msra.mxu0 %v530
  %2869 = vmatprep.subr.mxu0 0.0
  %2870 = vmatpush1.msra.mxu0 %v531
  %2871 = vmatprep.subr.mxu0 0.0
  %2872 = vmatpush1.msra.mxu0 %v532
  %2873 = vmatprep.subr.mxu0 0.0
  %2874 = vmatpush1.msra.mxu0 %v533
  %2875 = vmatprep.subr.mxu0 0.0
  %2876 = vmatpush1.msra.mxu0 %v534
  %2877 = vmatprep.subr.mxu0 0.0
  %2878 = vmatpush1.msra.mxu0 %v535
  %2879 = vmatprep.subr.mxu0 0.0
  %2880 = vmatpush1.msra.mxu0 %v536
  %2881 = vmatprep.subr.mxu0 0.0
  %2882 = vmatpush1.msra.mxu0 %v537
  %2883 = vmatprep.subr.mxu0 0.0
  %2884 = vmatpush1.msra.mxu0 %v538
  %2885 = vmatprep.subr.mxu0 0.0
  %2886 = vmatpush1.msra.mxu0 %v539
  %2887 = vmatprep.subr.mxu0 0.0
  %2888 = vmatpush1.msra.mxu0 0.0
  %2889 = vmatprep.subr.mxu0 0.0
  %2890 = vmatpush1.msra.mxu0 0.0
  %2891 = vmatprep.subr.mxu0 0.0
  %2892 = vmatpush1.msra.mxu0 0.0
  %2893 = vmatprep.subr.mxu0 0.0
  %2894 = vmatpush1.msra.mxu0 0.0
  %2895 = vmatprep.subr.mxu0 0.0
  %2896 = vmatpush1.msra.mxu0 0.0
  %2897 = vmatprep.subr.mxu0 0.0
  %2898 = vmatpush1.msra.mxu0 0.0
  %2899 = vmatprep.subr.mxu0 0.0
  %2900 = vmatpush1.msra.mxu0 0.0
  %2901 = vmatprep.subr.mxu0 0.0
  %2902 = vmatpush1.msra.mxu0 0.0
  %2903 = vmatprep.subr.mxu0 0.0
  %2904 = vmatpush1.msra.mxu0 0.0
  %2905 = vmatprep.subr.mxu0 0.0
  %2906 = vmatpush1.msra.mxu0 0.0
  %2907 = vmatprep.subr.mxu0 0.0
  %2908 = vmatpush1.msra.mxu0 0.0
  %2909 = vmatprep.subr.mxu0 0.0
  %2910 = vmatpush1.msra.mxu0 0.0
  %2911 = vmatprep.subr.mxu0 0.0
  %2912 = vmatpush1.msra.mxu0 0.0
  %2913 = vmatprep.subr.mxu0 0.0
  %2914 = vmatpush1.msra.mxu0 0.0
  %2915 = vmatprep.subr.mxu0 0.0
  %2916 = vmatpush1.msra.mxu0 0.0
  %2917 = vmatprep.subr.mxu0 0.0
  %2918 = vmatpush1.msra.mxu0 0.0
  %2919 = vmatprep.mubr.f32.mxu0 0.0
  %2920 = vmatmul.mubr.f32.gmra.mrb[0].mxu0 %v2782
  %v2921 = vpop.f32.mrb[0].mxu0
  %v2922 = vadd.f32 %v2852, %v2921
  %v2923 = vpop.f32.mrb[0].mxu0
  %2924 = vdwg.mxu0
  %v2925 = vadd.f32 %v2922, %v549
  %v2926 = vmul.f32 %v2925, 0.5
  %v2927 = vtanh.pop %v2926
  %v2928 = vmul.f32 %v2927, 0.5
  %v2929 = vadd.f32 %v2928, 0.5
  %v2930 = vtanh.pop %v2925
  %v2931 = vmul.f32 %v2929, %v2599
  %2933 = vrot.lane.b32.xlu0 %v2930, 32
  %v2934 = vpop.permute.xlu0 %2933
  %v2936 = vmul.f32 %v2929, %v2934
  %2938 = vrot.lane.b32.xlu0 %v2936, 32
  %v2939 = vpop.permute.xlu0 %2938
  %v2941 = vadd.f32 %v2931, %v2939
  %v2942 = vtanh.pop %v2941
  %2944 = vrot.lane.b32.xlu0 %v2942, 32
  %v2945 = vpop.permute.xlu0 %2944
  %v2947 = vmul.f32 %v2929, %v2945
  %2949 = vrot.lane.b32.xlu0 %v2947, 64
  %v2950 = vpop.permute.xlu0 %2949
  %s2952 = scalar_lea.vmem %s7, 48
  %2953 = vst.msk [vmem:[%s2952] sm:$0xff] %vm726, %v2950
  %s2954 = smul.u32 7, 4
  %s2955 = smul.addr %s2954, 8
  %s2956 = scalar_lea.vmem [#allocation2], %s2955
  %v2957 = vld [vmem:[%s2956] sm:$0xff]
  %v2958 = vld [vmem:[%s2956 + $0x8] sm:$0xff]
  %v2959 = vld [vmem:[%s2956 + $0x10] sm:$0xff]
  %v2960 = vld [vmem:[%s2956 + $0x18] sm:$0xff]
  %2961 = vmatprep.subr.mxu0 %v461
  %2962 = vmatpush1.msra.mxu0 %v460
  %2963 = vmatprep.subr.mxu0 %v465
  %2964 = vmatpush1.msra.mxu0 %v464
  %2965 = vmatprep.subr.mxu0 %v469
  %2966 = vmatpush1.msra.mxu0 %v468
  %2967 = vmatprep.subr.mxu0 %v473
  %2968 = vmatpush1.msra.mxu0 %v472
  %2969 = vmatprep.subr.mxu0 %v477
  %2970 = vmatpush1.msra.mxu0 %v476
  %2971 = vmatprep.subr.mxu0 %v481
  %2972 = vmatpush1.msra.mxu0 %v480
  %2973 = vmatprep.subr.mxu0 %v485
  %2974 = vmatpush1.msra.mxu0 %v484
  %2975 = vmatprep.subr.mxu0 %v489
  %2976 = vmatpush1.msra.mxu0 %v488
  %2977 = vmatprep.subr.mxu0 %v493
  %2978 = vmatpush1.msra.mxu0 %v492
  %2979 = vmatprep.subr.mxu0 %v497
  %2980 = vmatpush1.msra.mxu0 %v496
  %2981 = vmatprep.subr.mxu0 %v501
  %2982 = vmatpush1.msra.mxu0 %v500
  %2983 = vmatprep.subr.mxu0 %v505
  %2984 = vmatpush1.msra.mxu0 %v504
  %2985 = vmatprep.subr.mxu0 %v509
  %2986 = vmatpush1.msra.mxu0 %v508
  %2987 = vmatprep.subr.mxu0 %v513
  %2988 = vmatpush1.msra.mxu0 %v512
  %2989 = vmatprep.subr.mxu0 %v517
  %2990 = vmatpush1.msra.mxu0 %v516
  %2991 = vmatprep.subr.mxu0 %v521
  %2992 = vmatpush1.msra.mxu0 %v520
  %2993 = vmatprep.subr.mxu0 0.0
  %2994 = vmatpush1.msra.mxu0 0.0
  %2995 = vmatprep.subr.mxu0 0.0
  %2996 = vmatpush1.msra.mxu0 0.0
  %2997 = vmatprep.subr.mxu0 0.0
  %2998 = vmatpush1.msra.mxu0 0.0
  %2999 = vmatprep.subr.mxu0 0.0
  %3000 = vmatpush1.msra.mxu0 0.0
  %3001 = vmatprep.subr.mxu0 0.0
  %3002 = vmatpush1.msra.mxu0 0.0
  %3003 = vmatprep.subr.mxu0 0.0
  %3004 = vmatpush1.msra.mxu0 0.0
  %3005 = vmatprep.subr.mxu0 0.0
  %3006 = vmatpush1.msra.mxu0 0.0
  %3007 = vmatprep.subr.mxu0 0.0
  %3008 = vmatpush1.msra.mxu0 0.0
  %3009 = vmatprep.subr.mxu0 0.0
  %3010 = vmatpush1.msra.mxu0 0.0
  %3011 = vmatprep.subr.mxu0 0.0
  %3012 = vmatpush1.msra.mxu0 0.0
  %3013 = vmatprep.subr.mxu0 0.0
  %3014 = vmatpush1.msra.mxu0 0.0
  %3015 = vmatprep.subr.mxu0 0.0
  %3016 = vmatpush1.msra.mxu0 0.0
  %3017 = vmatprep.subr.mxu0 0.0
  %3018 = vmatpush1.msra.mxu0 0.0
  %3019 = vmatprep.subr.mxu0 0.0
  %3020 = vmatpush1.msra.mxu0 0.0
  %3021 = vmatprep.subr.mxu0 0.0
  %3022 = vmatpush1.msra.mxu0 0.0
  %3023 = vmatprep.subr.mxu0 0.0
  %3024 = vmatpush1.msra.mxu0 0.0
  %3025 = vmatprep.mubr.f32.mxu0 0.0
  %3026 = vmatmul.mubr.f32.gmra.mrb[0].mxu0 %v2782
  %v3027 = vpop.f32.mrb[0].mxu0
  %v3028 = vadd.f32 0.0, %v3027
  %v3029 = vpop.f32.mrb[0].mxu0
  %v3030 = vadd.f32 0.0, %v3029
  %3031 = vdwg.mxu0
  %3032 = vmatprep.subr.mxu0 %v463
  %3033 = vmatpush1.msra.mxu0 %v462
  %3034 = vmatprep.subr.mxu0 %v467
  %3035 = vmatpush1.msra.mxu0 %v466
  %3036 = vmatprep.subr.mxu0 %v471
  %3037 = vmatpush1.msra.mxu0 %v470
  %3038 = vmatprep.subr.mxu0 %v475
  %3039 = vmatpush1.msra.mxu0 %v474
  %3040 = vmatprep.subr.mxu0 %v479
  %3041 = vmatpush1.msra.mxu0 %v478
  %3042 = vmatprep.subr.mxu0 %v483
  %3043 = vmatpush1.msra.mxu0 %v482
  %3044 = vmatprep.subr.mxu0 %v487
  %3045 = vmatpush1.msra.mxu0 %v486
  %3046 = vmatprep.subr.mxu0 %v491
  %3047 = vmatpush1.msra.mxu0 %v490
  %3048 = vmatprep.subr.mxu0 %v495
  %3049 = vmatpush1.msra.mxu0 %v494
  %3050 = vmatprep.subr.mxu0 %v499
  %3051 = vmatpush1.msra.mxu0 %v498
  %3052 = vmatprep.subr.mxu0 %v503
  %3053 = vmatpush1.msra.mxu0 %v502
  %3054 = vmatprep.subr.mxu0 %v507
  %3055 = vmatpush1.msra.mxu0 %v506
  %3056 = vmatprep.subr.mxu0 %v511
  %3057 = vmatpush1.msra.mxu0 %v510
  %3058 = vmatprep.subr.mxu0 %v515
  %3059 = vmatpush1.msra.mxu0 %v514
  %3060 = vmatprep.subr.mxu0 %v519
  %3061 = vmatpush1.msra.mxu0 %v518
  %3062 = vmatprep.subr.mxu0 %v523
  %3063 = vmatpush1.msra.mxu0 %v522
  %3064 = vmatprep.subr.mxu0 0.0
  %3065 = vmatpush1.msra.mxu0 0.0
  %3066 = vmatprep.subr.mxu0 0.0
  %3067 = vmatpush1.msra.mxu0 0.0
  %3068 = vmatprep.subr.mxu0 0.0
  %3069 = vmatpush1.msra.mxu0 0.0
  %3070 = vmatprep.subr.mxu0 0.0
  %3071 = vmatpush1.msra.mxu0 0.0
  %3072 = vmatprep.subr.mxu0 0.0
  %3073 = vmatpush1.msra.mxu0 0.0
  %3074 = vmatprep.subr.mxu0 0.0
  %3075 = vmatpush1.msra.mxu0 0.0
  %3076 = vmatprep.subr.mxu0 0.0
  %3077 = vmatpush1.msra.mxu0 0.0
  %3078 = vmatprep.subr.mxu0 0.0
  %3079 = vmatpush1.msra.mxu0 0.0
  %3080 = vmatprep.subr.mxu0 0.0
  %3081 = vmatpush1.msra.mxu0 0.0
  %3082 = vmatprep.subr.mxu0 0.0
  %3083 = vmatpush1.msra.mxu0 0.0
  %3084 = vmatprep.subr.mxu0 0.0
  %3085 = vmatpush1.msra.mxu0 0.0
  %3086 = vmatprep.subr.mxu0 0.0
  %3087 = vmatpush1.msra.mxu0 0.0
  %3088 = vmatprep.subr.mxu0 0.0
  %3089 = vmatpush1.msra.mxu0 0.0
  %3090 = vmatprep.subr.mxu0 0.0
  %3091 = vmatpush1.msra.mxu0 0.0
  %3092 = vmatprep.subr.mxu0 0.0
  %3093 = vmatpush1.msra.mxu0 0.0
  %3094 = vmatprep.subr.mxu0 0.0
  %3095 = vmatpush1.msra.mxu0 0.0
  %3096 = vmatprep.mubr.f32.mxu0 0.0
  %3097 = vmatmul.mubr.f32.gmra.mrb[0].mxu0 %v2782
  %v3098 = vpop.f32.mrb[0].mxu0
  %v3099 = vadd.f32 0.0, %v3098
  %v3100 = vpop.f32.mrb[0].mxu0
  %v3101 = vadd.f32 0.0, %v3100
  %3102 = vdwg.mxu0
  %v3103 = vadd.f32 %v2957, %v3028
  %v3104 = vadd.f32 %v2958, %v3030
  %v3105 = vadd.f32 %v2959, %v3099
  %v3106 = vadd.f32 %v2960, %v3101
  %v3107 = vmul.f32 %v3103, 0.5
  %v3108 = vmul.f32 %v3104, 0.5
  %v3109 = vmul.f32 %v3105, 0.5
  %v3110 = vtanh.pop %v3107
  %v3111 = vtanh.pop %v3108
  %v3112 = vtanh.pop %v3109
  %v3113 = vmul.f32 %v3110, 0.5
  %v3114 = vmul.f32 %v3111, 0.5
  %v3115 = vmul.f32 %v3112, 0.5
  %v3116 = vadd.f32 %v3113, 0.5
  %v3117 = vadd.f32 %v3114, 0.5
  %v3118 = vadd.f32 %v3115, 0.5
  %v3119 = vtanh.pop %v3106
  %v3120 = vmul.f32 %v3117, %v2780
  %v3121 = vmul.f32 %v3116, %v3119
  %v3122 = vadd.f32 %v3120, %v3121
  %v3123 = vtanh.pop %v3122
  %v3124 = vmul.f32 %v3118, %v3123
  %v3125 = vsel %vm726, %v2950, 0
  %3127 = vmatprep.subr.mxu0 0.0
  %3128 = vmatpush1.msra.mxu0 %v540
  %3129 = vmatprep.subr.mxu0 0.0
  %3130 = vmatpush1.msra.mxu0 %v541
  %3131 = vmatprep.subr.mxu0 0.0
  %3132 = vmatpush1.msra.mxu0 %v542
  %3133 = vmatprep.subr.mxu0 0.0
  %3134 = vmatpush1.msra.mxu0 %v543
  %3135 = vmatprep.subr.mxu0 0.0
  %3136 = vmatpush1.msra.mxu0 0.0
  %3137 = vmatprep.subr.mxu0 0.0
  %3138 = vmatpush1.msra.mxu0 0.0
  %3139 = vmatprep.subr.mxu0 0.0
  %3140 = vmatpush1.msra.mxu0 0.0
  %3141 = vmatprep.subr.mxu0 0.0
  %3142 = vmatpush1.msra.mxu0 0.0
  %3143 = vmatprep.subr.mxu0 0.0
  %3144 = vmatpush1.msra.mxu0 0.0
  %3145 = vmatprep.subr.mxu0 0.0
  %3146 = vmatpush1.msra.mxu0 0.0
  %3147 = vmatprep.subr.mxu0 0.0
  %3148 = vmatpush1.msra.mxu0 0.0
  %3149 = vmatprep.subr.mxu0 0.0
  %3150 = vmatpush1.msra.mxu0 0.0
  %3151 = vmatprep.subr.mxu0 0.0
  %3152 = vmatpush1.msra.mxu0 0.0
  %3153 = vmatprep.subr.mxu0 0.0
  %3154 = vmatpush1.msra.mxu0 0.0
  %3155 = vmatprep.subr.mxu0 0.0
  %3156 = vmatpush1.msra.mxu0 0.0
  %3157 = vmatprep.subr.mxu0 0.0
  %3158 = vmatpush1.msra.mxu0 0.0
  %3159 = vmatprep.subr.mxu0 0.0
  %3160 = vmatpush1.msra.mxu0 0.0
  %3161 = vmatprep.subr.mxu0 0.0
  %3162 = vmatpush1.msra.mxu0 0.0
  %3163 = vmatprep.subr.mxu0 0.0
  %3164 = vmatpush1.msra.mxu0 0.0
  %3165 = vmatprep.subr.mxu0 0.0
  %3166 = vmatpush1.msra.mxu0 0.0
  %3167 = vmatprep.subr.mxu0 0.0
  %3168 = vmatpush1.msra.mxu0 0.0
  %3169 = vmatprep.subr.mxu0 0.0
  %3170 = vmatpush1.msra.mxu0 0.0
  %3171 = vmatprep.subr.mxu0 0.0
  %3172 = vmatpush1.msra.mxu0 0.0
  %3173 = vmatprep.subr.mxu0 0.0
  %3174 = vmatpush1.msra.mxu0 0.0
  %3175 = vmatprep.subr.mxu0 0.0
  %3176 = vmatpush1.msra.mxu0 0.0
  %3177 = vmatprep.subr.mxu0 0.0
  %3178 = vmatpush1.msra.mxu0 0.0
  %3179 = vmatprep.subr.mxu0 0.0
  %3180 = vmatpush1.msra.mxu0 0.0
  %3181 = vmatprep.subr.mxu0 0.0
  %3182 = vmatpush1.msra.mxu0 0.0
  %3183 = vmatprep.subr.mxu0 0.0
  %3184 = vmatpush1.msra.mxu0 0.0
  %3185 = vmatprep.subr.mxu0 0.0
  %3186 = vmatpush1.msra.mxu0 0.0
  %3187 = vmatprep.subr.mxu0 0.0
  %3188 = vmatpush1.msra.mxu0 0.0
  %3189 = vmatprep.subr.mxu0 0.0
  %3190 = vmatpush1.msra.mxu0 0.0
  %3191 = vmatprep.mubr.f32.mxu0 0.0
  %3192 = vmatmul.mubr.f32.gmra.mrb[0].mxu0 %v3125
  %v3193 = vpop.f32.mrb[0].mxu0
  %v3194 = vadd.f32 0.0, %v3193
  %v3195 = vpop.f32.mrb[0].mxu0
  %3196 = vdwg.mxu0
  %3197 = vmatprep.subr.mxu0 0.0
  %3198 = vmatpush1.msra.mxu0 %v524
  %3199 = vmatprep.subr.mxu0 0.0
  %3200 = vmatpush1.msra.mxu0 %v525
  %3201 = vmatprep.subr.mxu0 0.0
  %3202 = vmatpush1.msra.mxu0 %v526
  %3203 = vmatprep.subr.mxu0 0.0
  %3204 = vmatpush1.msra.mxu0 %v527
  %3205 = vmatprep.subr.mxu0 0.0
  %3206 = vmatpush1.msra.mxu0 %v528
  %3207 = vmatprep.subr.mxu0 0.0
  %3208 = vmatpush1.msra.mxu0 %v529
  %3209 = vmatprep.subr.mxu0 0.0
  %3210 = vmatpush1.msra.mxu0 %v530
  %3211 = vmatprep.subr.mxu0 0.0
  %3212 = vmatpush1.msra.mxu0 %v531
  %3213 = vmatprep.subr.mxu0 0.0
  %3214 = vmatpush1.msra.mxu0 %v532
  %3215 = vmatprep.subr.mxu0 0.0
  %3216 = vmatpush1.msra.mxu0 %v533
  %3217 = vmatprep.subr.mxu0 0.0
  %3218 = vmatpush1.msra.mxu0 %v534
  %3219 = vmatprep.subr.mxu0 0.0
  %3220 = vmatpush1.msra.mxu0 %v535
  %3221 = vmatprep.subr.mxu0 0.0
  %3222 = vmatpush1.msra.mxu0 %v536
  %3223 = vmatprep.subr.mxu0 0.0
  %3224 = vmatpush1.msra.mxu0 %v537
  %3225 = vmatprep.subr.mxu0 0.0
  %3226 = vmatpush1.msra.mxu0 %v538
  %3227 = vmatprep.subr.mxu0 0.0
  %3228 = vmatpush1.msra.mxu0 %v539
  %3229 = vmatprep.subr.mxu0 0.0
  %3230 = vmatpush1.msra.mxu0 0.0
  %3231 = vmatprep.subr.mxu0 0.0
  %3232 = vmatpush1.msra.mxu0 0.0
  %3233 = vmatprep.subr.mxu0 0.0
  %3234 = vmatpush1.msra.mxu0 0.0
  %3235 = vmatprep.subr.mxu0 0.0
  %3236 = vmatpush1.msra.mxu0 0.0
  %3237 = vmatprep.subr.mxu0 0.0
  %3238 = vmatpush1.msra.mxu0 0.0
  %3239 = vmatprep.subr.mxu0 0.0
  %3240 = vmatpush1.msra.mxu0 0.0
  %3241 = vmatprep.subr.mxu0 0.0
  %3242 = vmatpush1.msra.mxu0 0.0
  %3243 = vmatprep.subr.mxu0 0.0
  %3244 = vmatpush1.msra.mxu0 0.0
  %3245 = vmatprep.subr.mxu0 0.0
  %3246 = vmatpush1.msra.mxu0 0.0
  %3247 = vmatprep.subr.mxu0 0.0
  %3248 = vmatpush1.msra.mxu0 0.0
  %3249 = vmatprep.subr.mxu0 0.0
  %3250 = vmatpush1.msra.mxu0 0.0
  %3251 = vmatprep.subr.mxu0 0.0
  %3252 = vmatpush1.msra.mxu0 0.0
  %3253 = vmatprep.subr.mxu0 0.0
  %3254 = vmatpush1.msra.mxu0 0.0
  %3255 = vmatprep.subr.mxu0 0.0
  %3256 = vmatpush1.msra.mxu0 0.0
  %3257 = vmatprep.subr.mxu0 0.0
  %3258 = vmatpush1.msra.mxu0 0.0
  %3259 = vmatprep.subr.mxu0 0.0
  %3260 = vmatpush1.msra.mxu0 0.0
  %3261 = vmatprep.mubr.f32.mxu0 0.0
  %3262 = vmatmul.mubr.f32.gmra.mrb[0].mxu0 %v3124
  %v3263 = vpop.f32.mrb[0].mxu0
  %v3264 = vadd.f32 %v3194, %v3263
  %v3265 = vpop.f32.mrb[0].mxu0
  %3266 = vdwg.mxu0
  %v3267 = vadd.f32 %v3264, %v549
  %v3268 = vmul.f32 %v3267, 0.5
  %v3269 = vtanh.pop %v3268
  %v3270 = vmul.f32 %v3269, 0.5
  %v3271 = vadd.f32 %v3270, 0.5
  %v3272 = vtanh.pop %v3267
  %v3273 = vmul.f32 %v3271, %v2941
  %3275 = vrot.lane.b32.xlu0 %v3272, 32
  %v3276 = vpop.permute.xlu0 %3275
  %v3278 = vmul.f32 %v3271, %v3276
  %3280 = vrot.lane.b32.xlu0 %v3278, 32
  %v3281 = vpop.permute.xlu0 %3280
  %v3283 = vadd.f32 %v3273, %v3281
  %v3284 = vtanh.pop %v3283
  %3286 = vrot.lane.b32.xlu0 %v3284, 32
  %v3287 = vpop.permute.xlu0 %3286
  %v3289 = vmul.f32 %v3271, %v3287
  %3291 = vrot.lane.b32.xlu0 %v3289, 64
  %v3292 = vpop.permute.xlu0 %3291
  %s3294 = scalar_lea.vmem %s7, 56
  %3295 = vst.msk [vmem:[%s3294] sm:$0xff] %vm726, %v3292
  %3296 = vst [vmem:[#allocation3] sm:$0xff] %v3124
  %3297 = vst [vmem:[#allocation4] sm:$0xff] %v3122
  %3298 = vst.msk [vmem:[#allocation5] sm:$0xff] %vm726, %v3292
  %3300 = vrot.lane.b32.xlu0 %v3283, 96
  %v3301 = vpop.permute.xlu0 %3300
  %3303 = vst.msk [vmem:[#allocation6] sm:$0xff] %vm726, %v3301
  // Predicated region
  $region34: #{mann_forward.1} parent=0 // pred_check
    _
  $region35: #{mann_forward.1} parent=0 // pred_check_branch
    %3305 = sbr.rel (0) target = $region37
  $region36: #{mann_forward.1} parent=0 // pred_region
    _
  $region37: #{mann_forward.1} parent=0 // pred_fallthru
    _
  // Predicated region
  $region38: #{mann_forward.1} parent=0 // pred_check
    _
  $region39: #{mann_forward.1} parent=0 // pred_check_branch
    %3307 = sbr.rel (0) target = $region41
  $region40: #{mann_forward.1} parent=0 // pred_region
    _
  $region41: #{mann_forward.1} parent=0 // pred_fallthru
    _

</llo_original>
